<compile_context>
chip_gen: v7x
topology: tpu7x:2x2x1
jax: 0.10.0
libtpu: 0.0.40
codegen_flags: <defaults>
</compile_context>

<pallas_src>
import types

import jax
import jax.numpy as jnp
from jax.experimental import pallas as pl
from jax.experimental.pallas import tpu as pltpu

_EPS = 1e-12  # floor before sqrt / rsqrt / log (guards f32 round-off only)


def _vmem():
    return pl.BlockSpec(memory_space=pltpu.MemorySpace.VMEM)


# --------------------- in-kernel matmul helpers ---------------------

def _bmm(a, b):
    """Batched a_b @ b_b."""
    return jnp.einsum('bij,bjk->bik', a, b, preferred_element_type=jnp.float32)


def _bmm_t(a, b):
    """Batched a_b @ b_b^T (native MXU "NT" form, no explicit transpose)."""
    return jnp.einsum('bik,bjk->bij', a, b, preferred_element_type=jnp.float32)


def _rmul_shared(x, w):
    """x_b @ w for all b as ONE tall stacked (B*N, M) @ (M, K) MXU matmul."""
    b, n, m = x.shape
    return jnp.dot(x.reshape(b * n, m), w,
                   preferred_element_type=jnp.float32).reshape(b, n, w.shape[-1])


def _lmul_shared(w, x):
    """w @ x_b for all b (shared matrix broadcast in VMEM; tiny at these sizes)."""
    return _bmm(jnp.broadcast_to(w, x.shape[:1] + w.shape), x)


def _tree_prod(m):
    """Ordered product m[:,0] @ m[:,1] @ ... @ m[:,K-1], pairwise tree-reduced.

    Each round is ONE batched matmul over all pairs (better MXU occupancy) and
    the serial critical path is ~ceil(log2 K) matmul rounds instead of K-1.
    Odd leftovers are folded into a pending right tail (no in-kernel concat).
    """
    tail = None
    while m.shape[1] > 1:
        bsz, k, e, _ = m.shape
        if k % 2 == 1:
            last = m[:, k - 1]
            tail = last if tail is None else _bmm(last, tail)
            m = m[:, :k - 1]
            k -= 1
        half = k // 2
        mp = m.reshape(bsz, half, 2, e, e)
        left = mp[:, :, 0].reshape(bsz * half, e, e)
        right = mp[:, :, 1].reshape(bsz * half, e, e)
        m = _bmm(left, right).reshape(bsz, half, e, e)
    res = m[:, 0]
    if tail is not None:
        res = _bmm(res, tail)
    return res


# --------------------- Pallas kernels (whole batch per call, no grid) ------

def _spd_chain_kernel(v_ref, w_ref, r_ref, oq_ref, oa_ref):
    """Fused sym_funcm reconstruction + tangent-chain sandwich + R-congruence.

    v_ref: (2B, T, E, E) eigenvectors of the (symmetrized) token embeddings
    w_ref: (2B, T, E)    eigenvalues
    r_ref: (E, E)        relation isometry (applied to the question half only)
    oq_ref: (B, E, E)    R @ chain(question tokens) @ R^T
    oa_ref: (B, E, E)    chain(answer tokens)
    """
    v = v_ref[...]
    w = w_ref[...]
    r = r_ref[...]
    two_b, t, e, _ = v.shape
    b = two_b // 2

    # exp(x_{T-1}) for every chain (question and answer stacked -> 2B)
    v_last = v[:, t - 1]
    y = _bmm_t(v_last * jnp.exp(w[:, t - 1])[:, None, :], v_last)

    if t > 1:
        # Hoist: all half-step factors M_j = V_j diag(exp(w_j/2)) V_j^T for
        # j < T-1 reconstructed in one batched op over 2B*(T-1) tokens.
        vh = v[:, :t - 1].reshape(two_b * (t - 1), e, e)
        dh = jnp.exp(0.5 * w[:, :t - 1]).reshape(two_b * (t - 1), e)
        m = _bmm_t(vh * dh[:, None, :], vh).reshape(two_b, t - 1, e, e)
        # Sandwich M_0 ... M_{T-2} exp(x_{T-1}) M_{T-2} ... M_0 == P Y P^T with
        # P = M_0 @ ... @ M_{T-2} (every M_j symmetric); P via tree reduction.
        p_mat = _tree_prod(m)
        y = _bmm_t(_bmm(p_mat, y), p_mat)

    # Relation-isometry congruence on the QUESTION half only (first b rows of
    # the [question; answer] stack) — no iota/where, half the matmul work.
    oq_ref[...] = _lmul_shared(r, _rmul_shared(y[:b], r.T))
    oa_ref[...] = y[b:]


def _point_tangent_kernel(v_ref, w_ref, eb_ref, o_ref):
    """addition_point_tangent: sqrt(q) @ exp(sym(bias)) @ sqrt(q).

    v_ref/w_ref: eigendecomposition of q, (B, E, E)/(B, E); eb_ref: (E, E)
    (exp(sym(bias_spd)) precomputed at init).
    """
    v = v_ref[...]
    sw = jnp.sqrt(jnp.maximum(w_ref[...], _EPS))
    sqrt_q = _bmm_t(v * sw[:, None, :], v)
    o_ref[...] = _bmm(_rmul_shared(sqrt_q, eb_ref[...]), sqrt_q)


def _dist_prep_kernel(v_ref, w_ref, a_ref, o_ref):
    """m = q^{-1/2} @ a @ q^{-1/2} built from the eigendecomposition of q."""
    v = v_ref[...]
    iw = jax.lax.rsqrt(jnp.maximum(w_ref[...], _EPS))
    isq = _bmm_t(v * iw[:, None, :], v)
    o_ref[...] = _bmm(isq, _bmm(a_ref[...], isq))


def _make_gr_epilogue_kernel(p_dim, dist_factor, wf, wb):
    """Fused Grassmann branch + score epilogue.

    Cayley map, token chain product, base-point conjugation, bias conjugation,
    Grassmann diff/norm, SPD log-eig norm and the affine score in ONE kernel.
    Uses z^{-1} = z^T (z orthogonal) and base = diag(I_p, 0) => rank-p product.
    dist_factor / wf / wb are baked in as compile-time constants.
    TODO(synk): if those scalars must stay trainable, pass them via SMEM.
    """
    def kernel(inv_ref, yb_ref, ev_ref, o_ref):
        ipx_inv = inv_ref[...]            # (2B, T, N, N) = inv(I + X)
        yb = yb_ref[...]                  # (N, N) Cayley(bias_gr), orthogonal
        two_b, t, n, _ = ipx_inv.shape
        b = two_b // 2

        # Cayley map with no matmul: (I - X)(I + X)^{-1} = 2 (I + X)^{-1} - I
        row = jax.lax.broadcasted_iota(jnp.int32, (n, n), 0)
        col = jax.lax.broadcasted_iota(jnp.int32, (n, n), 1)
        eye = jnp.where(row == col, 1.0, 0.0)
        q = 2.0 * ipx_inv - eye           # (2B, T, N, N), per-token Cayley

        z = _tree_prod(q)                 # ordered chain product, (2B, N, N)

        # g = z @ base @ z^{-1} = z[:, :, :p] @ z[:, :, :p]^T (symmetric, rank-p)
        zl = z[:, :, :p_dim]
        g = _bmm_t(zl, zl)

        # question bias conjugation: yb @ g_q @ yb^{-1}, with yb^{-1} = yb^T
        q_g = _lmul_shared(yb, _rmul_shared(g[:b], yb.T))
        diff = q_g - g[b:]
        # TODO(synk): if a backward pass is ever attached, add an eps inside
        # this sqrt (gradient is NaN at diff == 0); forward is exact as-is.
        d_gr = jnp.sqrt(jnp.sum(jnp.sum(diff * diff, axis=-1), axis=-1,
                                keepdims=True))                      # (B, 1)

        # SPD Riemannian distance: L2 norm of log eigenvalues (log done here,
        # on the otherwise-idle EUP slot; raw eigvals arrive from XLA eigvalsh).
        le = jnp.log(jnp.maximum(ev_ref[...], _EPS))                 # (B, E)
        d_spd = jnp.sqrt(jnp.sum(le * le, axis=-1, keepdims=True))   # (B, 1)

        o_ref[...] = -wf * (dist_factor * d_spd + d_gr) + wb
    return kernel


# --------------------- pallas_call wrappers ---------------------

def spd_chain(v, w, rel_iso):
    two_b, t, e, _ = v.shape
    b = two_b // 2
    return pl.pallas_call(
        _spd_chain_kernel,
        out_shape=(jax.ShapeDtypeStruct((b, e, e), jnp.float32),
                   jax.ShapeDtypeStruct((b, e, e), jnp.float32)),
        in_specs=[_vmem(), _vmem(), _vmem()],
        out_specs=(_vmem(), _vmem()),
    )(v, w, rel_iso)


def point_tangent(v, w, exp_bias):
    b, e, _ = v.shape
    return pl.pallas_call(
        _point_tangent_kernel,
        out_shape=jax.ShapeDtypeStruct((b, e, e), jnp.float32),
        in_specs=[_vmem(), _vmem(), _vmem()],
        out_specs=_vmem(),
    )(v, w, exp_bias)


def dist_prep(v, w, a_emb):
    b, e, _ = v.shape
    return pl.pallas_call(
        _dist_prep_kernel,
        out_shape=jax.ShapeDtypeStruct((b, e, e), jnp.float32),
        in_specs=[_vmem(), _vmem(), _vmem()],
        out_specs=_vmem(),
    )(v, w, a_emb)


# --------------------- JAX glue (no Pallas equivalent / init-time) ---------

def sym(x):
    return 0.5 * (x + jnp.swapaxes(x, -1, -2))


def tangent_vector(x):
    p, q = x.shape
    n = p + q
    a = jnp.zeros((n, n), x.dtype)
    a = a.at[:p, p:].set(x)
    a = a.at[p:, :p].set(-x.T)
    return a


def tangent_vector_batch(x):
    b, t, p, q = x.shape
    n = p + q
    a = jnp.zeros((b, t, n, n), x.dtype)
    a = a.at[:, :, :p, p:].set(x)
    a = a.at[:, :, p:, :p].set(-jnp.swapaxes(x, -1, -2))
    return a


def build_reflection_matrices(ref_params, dims):
    """compute_reflection_params + embed_params: (b, m) -> (b, m, dims, dims)."""
    cos_x = jnp.cos(ref_params)
    sin_x = jnp.sin(ref_params)
    b, m = ref_params.shape
    pairs = [(i, j) for i in range(dims) for j in range(i + 1, dims)]
    ii = jnp.array([p[0] for p in pairs])
    jj = jnp.array([p[1] for p in pairs])
    k = jnp.arange(m)
    mats = jnp.broadcast_to(jnp.eye(dims, dtype=ref_params.dtype), (b, m, dims, dims))
    mats = mats.at[:, k, ii, ii].set(cos_x)
    mats = mats.at[:, k, ii, jj].set(sin_x)
    mats = mats.at[:, k, jj, ii].set(sin_x)
    mats = mats.at[:, k, jj, jj].set(-cos_x)
    return mats


# ----------------------------- Model -----------------------------

class SpdRefGrPallas:
    def __init__(self, config, key):
        INIT_EPS = 0.001
        e = config.emb_dim
        n = config.n_dim
        p = config.p_dim
        q = n - p
        vocab = config.vocab_size
        self.emb_dim = e
        self.n_dim = n
        self.p_dim = p
        self.dist_factor = float(config.dist_factor)
        ks = jax.random.split(key, 8)
        self.question_embedding_spd = jax.random.normal(ks[0], (vocab, e, e), jnp.float32) * INIT_EPS
        self.answer_embedding_spd = jax.random.normal(ks[1], (vocab, e, e), jnp.float32) * INIT_EPS
        self.n_isom = e * (e - 1) // 2
        self.ref_params = jax.random.uniform(ks[2], (1, self.n_isom), jnp.float32) * 0.5 - 0.25
        self.question_bias_spd = jax.random.uniform(ks[3], (e, e), jnp.float32) * 2.0 - 1.0
        self.question_embedding_gr = jax.random.normal(ks[4], (vocab, p, q), jnp.float32) * INIT_EPS
        self.answer_embedding_gr = jax.random.normal(ks[5], (vocab, p, q), jnp.float32) * INIT_EPS
        self.question_transforms_gr = jax.random.uniform(ks[6], (p, q), jnp.float32) * 2.0 - 1.0
        self.question_bias_gr = jax.random.uniform(ks[7], (p, q), jnp.float32) * 2.0 - 1.0
        self.wf = 1.0
        self.wb = 1.0
        # base_point = gr_identity(n, p) = diag(I_p, 0) is exploited
        # analytically in the fused epilogue (rank-p product); no buffer kept.
        # TODO(synk): config.metric selects the SPD metric; Riemannian
        # (L2 norm of log-eigenvalues) is used here.

        # ---- parameter-only quantities, hoisted out of the forward pass ----
        # Relation isometry productory (m = e(e-1)/2 reflections) depends only
        # on ref_params -> compute once at init instead of every forward.
        refl = build_reflection_matrices(self.ref_params, e)[0]      # (m, e, e)
        r = refl[0]
        for i in range(1, refl.shape[0]):
            r = r @ refl[i]
        self.rel_iso = r
        # exp(sym(question_bias_spd)) via eigh (eigh has no Pallas equivalent).
        qb = sym(self.question_bias_spd)
        wqb, vqb = jnp.linalg.eigh(qb)
        self.exp_bias_spd = (vqb * jnp.exp(wqb)[None, :]) @ vqb.T
        # Cayley map of the Grassmann bias tangent.  It is orthogonal (Cayley
        # of a skew-symmetric matrix) so its inverse is its transpose, taken
        # in-kernel; no explicit inverse stored.
        bias_t = tangent_vector(self.question_bias_gr)
        eye_n = jnp.eye(n, dtype=jnp.float32)
        self.yb = (eye_n - bias_t) @ jnp.linalg.inv(eye_n + bias_t)
        # Epilogue kernel with scalars baked in (stable identity -> cacheable).
        self._gr_epi_kernel = _make_gr_epilogue_kernel(
            self.p_dim, self.dist_factor, self.wf, self.wb)

    def _gr_epilogue(self, ipx_inv, eigvals):
        two_b = ipx_inv.shape[0]
        b = two_b // 2
        return pl.pallas_call(
            self._gr_epi_kernel,
            out_shape=jax.ShapeDtypeStruct((b, 1), jnp.float32),
            in_specs=[_vmem(), _vmem(), _vmem()],
            out_specs=_vmem(),
        )(ipx_inv, self.yb, eigvals)

    def __call__(self, question_ids, answer_ids):
        n = self.n_dim

        # ------------------ SPD branch ------------------
        # Question and answer token chains share structure: stack along batch
        # (-> 2B) so one batched eigh + one Pallas kernel covers both.
        # jnp.linalg.eigh symmetrizes its input (default), which equals the
        # reference's eigendecomposition of lalg.sym(embedding).
        tok = jnp.concatenate([self.question_embedding_spd[question_ids],
                               self.answer_embedding_spd[answer_ids]], axis=0)
        w_tok, v_tok = jnp.linalg.eigh(tok)            # (2B,T,e), (2B,T,e,e)
        q1, a_emb = spd_chain(v_tok, w_tok, self.rel_iso)   # (B,e,e) each

        # addition_point_tangent(q1, bias) needs eigh(q1) for the sqrt.
        w1, v1 = jnp.linalg.eigh(q1)
        q_emb = point_tangent(v1, w1, self.exp_bias_spd)

        # dist_spd(q_emb, a_emb) needs eigh(q_emb) for the inverse sqrt.
        w2, v2 = jnp.linalg.eigh(q_emb)
        m = dist_prep(v2, w2, a_emb)
        # Reference symmetrizes m before symeig; kept in XLA (fuses into the
        # eigvalsh input, avoids an in-kernel batched transpose).
        m = sym(m)
        eigvals = jnp.linalg.eigvalsh(m)               # (B, e); log in epilogue

        # ------------------ Grassmann branch + fused epilogue ------------------
        q_tok_gr = self.question_transforms_gr * self.question_embedding_gr[question_ids]
        a_tok_gr = self.answer_embedding_gr[answer_ids]
        x = tangent_vector_batch(jnp.concatenate([q_tok_gr, a_tok_gr], axis=0))
        eye_n = jnp.eye(n, dtype=jnp.float32)
        # TODO(synk): batched matrix inverse has no Pallas equivalent.
        ipx_inv = jnp.linalg.inv(eye_n + x)            # (2B, T, n, n)
        s = self._gr_epilogue(ipx_inv, eigvals)        # Cayley+chain+score fused
        return s[:, 0]


# ----------------------------- main -----------------------------

if __name__ == "__main__":
    config = types.SimpleNamespace(
        emb_dim=8, n_dim=8, p_dim=4, vocab_size=16,
        dist_factor=1.0, metric="riem")
    key = jax.random.PRNGKey(0)
    pkey, k1, k2 = jax.random.split(key, 3)
    model = SpdRefGrPallas(config, pkey)

    B, T = 2, 6
    question_ids = jax.random.randint(k1, (B, T), 0, config.vocab_size)
    answer_ids = jax.random.randint(k2, (B, T), 0, config.vocab_size)

    out = model(question_ids, answer_ids)
    out = jax.block_until_ready(out)
    assert out.shape == (B,)
    assert bool(jnp.all(jnp.isfinite(out)))
    print("KERNEL_OK")
</pallas_src>

<mosaic_0001>
module attributes {stable_mosaic.version = 11 : i64} {
  func.func @_spd_chain_kernel(%arg0: memref<4x6x8x8xf32, #tpu.memory_space<vmem>>, %arg1: memref<4x6x8xf32, #tpu.memory_space<vmem>>, %arg2: memref<8x8xf32, #tpu.memory_space<vmem>>, %arg3: memref<2x8x8xf32, #tpu.memory_space<vmem>>, %arg4: memref<2x8x8xf32, #tpu.memory_space<vmem>>) attributes {dimension_semantics = [], scalar_prefetch = 0 : i64, scratch_operands = 0 : i64, tpu.core_type = #tpu.core_type<tc>} {
    %c0 = arith.constant 0 : index
    %c0_0 = arith.constant 0 : index
    %c0_1 = arith.constant 0 : index
    %c0_2 = arith.constant 0 : index
    %0 = vector.load %arg0[%c0, %c0_0, %c0_1, %c0_2] : memref<4x6x8x8xf32, #tpu.memory_space<vmem>>, vector<4x6x8x8xf32>
    %c0_3 = arith.constant 0 : index
    %c0_4 = arith.constant 0 : index
    %c0_5 = arith.constant 0 : index
    %1 = vector.load %arg1[%c0_3, %c0_4, %c0_5] : memref<4x6x8xf32, #tpu.memory_space<vmem>>, vector<4x6x8xf32>
    %c0_6 = arith.constant 0 : index
    %c0_7 = arith.constant 0 : index
    %2 = vector.load %arg2[%c0_6, %c0_7] : memref<8x8xf32, #tpu.memory_space<vmem>>, vector<8x8xf32>
    %3 = vector.extract_strided_slice %0 {offsets = [0, 5, 0, 0], sizes = [4, 1, 8, 8], strides = [1, 1, 1, 1]} : vector<4x6x8x8xf32> to vector<4x1x8x8xf32>
    %4 = vector.shape_cast %3 : vector<4x1x8x8xf32> to vector<4x8x8xf32>
    %5 = vector.extract_strided_slice %1 {offsets = [0, 5, 0], sizes = [4, 1, 8], strides = [1, 1, 1]} : vector<4x6x8xf32> to vector<4x1x8xf32>
    %6 = vector.shape_cast %5 : vector<4x1x8xf32> to vector<4x8xf32>
    %7 = math.exp %6 : vector<4x8xf32>
    %8 = vector.shape_cast %7 : vector<4x8xf32> to vector<4x1x8xf32>
    %9 = vector.broadcast %8 : vector<4x1x8xf32> to vector<4x8x8xf32>
    %10 = arith.mulf %4, %9 : vector<4x8x8xf32>
    "tpu.trace_start"() <{level = 10 : i32, message = "bik,bjk->bij"}> : () -> ()
    %cst = arith.constant dense<0.000000e+00> : vector<4x8x8xf32>
    %11 = tpu.matmul %10, %4, %cst {dimension_numbers = #tpu.dot_dimension_numbers<[2], [2], [1], [1], [0, 0, 0, 1, 1, 1], [0], [0]>} : vector<4x8x8xf32>, vector<4x8x8xf32>, vector<4x8x8xf32> -> vector<4x8x8xf32>
    "tpu.trace_stop"() : () -> ()
    %12 = vector.extract_strided_slice %0 {offsets = [0, 0, 0, 0], sizes = [4, 5, 8, 8], strides = [1, 1, 1, 1]} : vector<4x6x8x8xf32> to vector<4x5x8x8xf32>
    %13 = vector.shape_cast %12 : vector<4x5x8x8xf32> to vector<20x8x8xf32>
    %14 = vector.extract_strided_slice %1 {offsets = [0, 0, 0], sizes = [4, 5, 8], strides = [1, 1, 1]} : vector<4x6x8xf32> to vector<4x5x8xf32>
    %cst_8 = arith.constant 5.000000e-01 : f32
    %15 = vector.broadcast %cst_8 : f32 to vector<4x5x8xf32>
    %16 = arith.mulf %15, %14 : vector<4x5x8xf32>
    %17 = math.exp %16 : vector<4x5x8xf32>
    %18 = vector.shape_cast %17 : vector<4x5x8xf32> to vector<20x8xf32>
    %19 = vector.shape_cast %18 : vector<20x8xf32> to vector<20x1x8xf32>
    %20 = vector.broadcast %19 : vector<20x1x8xf32> to vector<20x8x8xf32>
    %21 = arith.mulf %13, %20 : vector<20x8x8xf32>
    "tpu.trace_start"() <{level = 10 : i32, message = "bik,bjk->bij"}> : () -> ()
    %cst_9 = arith.constant dense<0.000000e+00> : vector<20x8x8xf32>
    %22 = tpu.matmul %21, %13, %cst_9 {dimension_numbers = #tpu.dot_dimension_numbers<[2], [2], [1], [1], [0, 0, 0, 1, 1, 1], [0], [0]>} : vector<20x8x8xf32>, vector<20x8x8xf32>, vector<20x8x8xf32> -> vector<20x8x8xf32>
    "tpu.trace_stop"() : () -> ()
    %23 = vector.shape_cast %22 : vector<20x8x8xf32> to vector<4x5x8x8xf32>
    %24 = vector.extract_strided_slice %23 {offsets = [0, 4, 0, 0], sizes = [4, 1, 8, 8], strides = [1, 1, 1, 1]} : vector<4x5x8x8xf32> to vector<4x1x8x8xf32>
    %25 = vector.shape_cast %24 : vector<4x1x8x8xf32> to vector<4x8x8xf32>
    %26 = vector.extract_strided_slice %23 {offsets = [0, 0, 0, 0], sizes = [4, 4, 8, 8], strides = [1, 1, 1, 1]} : vector<4x5x8x8xf32> to vector<4x4x8x8xf32>
    %27 = vector.shape_cast %26 : vector<4x4x8x8xf32> to vector<4x2x2x8x8xf32>
    %28 = vector.extract_strided_slice %27 {offsets = [0, 0, 0, 0, 0], sizes = [4, 2, 1, 8, 8], strides = [1, 1, 1, 1, 1]} : vector<4x2x2x8x8xf32> to vector<4x2x1x8x8xf32>
    %29 = vector.shape_cast %28 : vector<4x2x1x8x8xf32> to vector<4x2x8x8xf32>
    %30 = vector.shape_cast %29 : vector<4x2x8x8xf32> to vector<8x8x8xf32>
    %31 = vector.extract_strided_slice %27 {offsets = [0, 0, 1, 0, 0], sizes = [4, 2, 1, 8, 8], strides = [1, 1, 1, 1, 1]} : vector<4x2x2x8x8xf32> to vector<4x2x1x8x8xf32>
    %32 = vector.shape_cast %31 : vector<4x2x1x8x8xf32> to vector<4x2x8x8xf32>
    %33 = vector.shape_cast %32 : vector<4x2x8x8xf32> to vector<8x8x8xf32>
    "tpu.trace_start"() <{level = 10 : i32, message = "bij,bjk->bik"}> : () -> ()
    %cst_10 = arith.constant dense<0.000000e+00> : vector<8x8x8xf32>
    %34 = tpu.matmul %30, %33, %cst_10 {dimension_numbers = #tpu.dot_dimension_numbers<[2], [1], [1], [2], [0, 0, 0, 1, 1, 2], [0], [0]>} : vector<8x8x8xf32>, vector<8x8x8xf32>, vector<8x8x8xf32> -> vector<8x8x8xf32>
    "tpu.trace_stop"() : () -> ()
    %35 = vector.shape_cast %34 : vector<8x8x8xf32> to vector<4x2x8x8xf32>
    %36 = vector.shape_cast %35 : vector<4x2x8x8xf32> to vector<4x1x2x8x8xf32>
    %37 = vector.extract_strided_slice %36 {offsets = [0, 0, 0, 0, 0], sizes = [4, 1, 1, 8, 8], strides = [1, 1, 1, 1, 1]} : vector<4x1x2x8x8xf32> to vector<4x1x1x8x8xf32>
    %38 = vector.shape_cast %37 : vector<4x1x1x8x8xf32> to vector<4x1x8x8xf32>
    %39 = vector.shape_cast %38 : vector<4x1x8x8xf32> to vector<4x8x8xf32>
    %40 = vector.extract_strided_slice %36 {offsets = [0, 0, 1, 0, 0], sizes = [4, 1, 1, 8, 8], strides = [1, 1, 1, 1, 1]} : vector<4x1x2x8x8xf32> to vector<4x1x1x8x8xf32>
    %41 = vector.shape_cast %40 : vector<4x1x1x8x8xf32> to vector<4x1x8x8xf32>
    %42 = vector.shape_cast %41 : vector<4x1x8x8xf32> to vector<4x8x8xf32>
    "tpu.trace_start"() <{level = 10 : i32, message = "bij,bjk->bik"}> : () -> ()
    %cst_11 = arith.constant dense<0.000000e+00> : vector<4x8x8xf32>
    %43 = tpu.matmul %39, %42, %cst_11 {dimension_numbers = #tpu.dot_dimension_numbers<[2], [1], [1], [2], [0, 0, 0, 1, 1, 2], [0], [0]>} : vector<4x8x8xf32>, vector<4x8x8xf32>, vector<4x8x8xf32> -> vector<4x8x8xf32>
    "tpu.trace_stop"() : () -> ()
    %44 = vector.shape_cast %43 : vector<4x8x8xf32> to vector<4x1x8x8xf32>
    %45 = vector.shape_cast %44 : vector<4x1x8x8xf32> to vector<4x8x8xf32>
    "tpu.trace_start"() <{level = 10 : i32, message = "bij,bjk->bik"}> : () -> ()
    %cst_12 = arith.constant dense<0.000000e+00> : vector<4x8x8xf32>
    %46 = tpu.matmul %45, %25, %cst_12 {dimension_numbers = #tpu.dot_dimension_numbers<[2], [1], [1], [2], [0, 0, 0, 1, 1, 2], [0], [0]>} : vector<4x8x8xf32>, vector<4x8x8xf32>, vector<4x8x8xf32> -> vector<4x8x8xf32>
    %cst_13 = arith.constant dense<0.000000e+00> : vector<4x8x8xf32>
    %47 = tpu.matmul %46, %11, %cst_13 {dimension_numbers = #tpu.dot_dimension_numbers<[2], [1], [1], [2], [0, 0, 0, 1, 1, 2], [0], [0]>} : vector<4x8x8xf32>, vector<4x8x8xf32>, vector<4x8x8xf32> -> vector<4x8x8xf32>
    "tpu.trace_stop"() : () -> ()
    "tpu.trace_start"() <{level = 10 : i32, message = "bik,bjk->bij"}> : () -> ()
    %cst_14 = arith.constant dense<0.000000e+00> : vector<4x8x8xf32>
    %48 = tpu.matmul %47, %46, %cst_14 {dimension_numbers = #tpu.dot_dimension_numbers<[2], [2], [1], [1], [0, 0, 0, 1, 1, 1], [0], [0]>} : vector<4x8x8xf32>, vector<4x8x8xf32>, vector<4x8x8xf32> -> vector<4x8x8xf32>
    "tpu.trace_stop"() : () -> ()
    %49 = vector.extract_strided_slice %48 {offsets = [0, 0, 0], sizes = [2, 8, 8], strides = [1, 1, 1]} : vector<4x8x8xf32> to vector<2x8x8xf32>
    %50 = tpu.transpose %2, [1, 0] : vector<8x8xf32> -> vector<8x8xf32>
    %51 = vector.shape_cast %49 : vector<2x8x8xf32> to vector<16x8xf32>
    %cst_15 = arith.constant dense<0.000000e+00> : vector<16x8xf32>
    %52 = tpu.matmul %51, %50, %cst_15 {dimension_numbers = #tpu.dot_dimension_numbers<[1], [0], [0], [1], [0, 0, 1, 1], [], []>} : vector<16x8xf32>, vector<8x8xf32>, vector<16x8xf32> -> vector<16x8xf32>
    %53 = vector.shape_cast %52 : vector<16x8xf32> to vector<2x8x8xf32>
    %54 = vector.shape_cast %2 : vector<8x8xf32> to vector<1x8x8xf32>
    %55 = vector.broadcast %54 : vector<1x8x8xf32> to vector<2x8x8xf32>
    "tpu.trace_start"() <{level = 10 : i32, message = "bij,bjk->bik"}> : () -> ()
    %cst_16 = arith.constant dense<0.000000e+00> : vector<2x8x8xf32>
    %56 = tpu.matmul %55, %53, %cst_16 {dimension_numbers = #tpu.dot_dimension_numbers<[2], [1], [1], [2], [0, 0, 0, 1, 1, 2], [0], [0]>} : vector<2x8x8xf32>, vector<2x8x8xf32>, vector<2x8x8xf32> -> vector<2x8x8xf32>
    "tpu.trace_stop"() : () -> ()
    %c0_17 = arith.constant 0 : index
    %c0_18 = arith.constant 0 : index
    %c0_19 = arith.constant 0 : index
    %57 = vector.load %arg3[%c0_17, %c0_18, %c0_19] : memref<2x8x8xf32, #tpu.memory_space<vmem>>, vector<2x8x8xf32>
    tpu.vector_store %arg3[%c0_17, %c0_18, %c0_19], %56 {strides = array<i32>} : memref<2x8x8xf32, #tpu.memory_space<vmem>>, vector<2x8x8xf32>,
    %58 = vector.extract_strided_slice %48 {offsets = [2, 0, 0], sizes = [2, 8, 8], strides = [1, 1, 1]} : vector<4x8x8xf32> to vector<2x8x8xf32>
    %c0_20 = arith.constant 0 : index
    %c0_21 = arith.constant 0 : index
    %c0_22 = arith.constant 0 : index
    %59 = vector.load %arg4[%c0_20, %c0_21, %c0_22] : memref<2x8x8xf32, #tpu.memory_space<vmem>>, vector<2x8x8xf32>
    tpu.vector_store %arg4[%c0_20, %c0_21, %c0_22], %58 {strides = array<i32>} : memref<2x8x8xf32, #tpu.memory_space<vmem>>, vector<2x8x8xf32>,
    return
  }
}

</mosaic_0001>

<llo_original>
// kernel: tpu_custom_call.1
$region0: #{tpu_custom_call.1}
  #allocation0 [shape = 'u32[]', space=smem, size = 0x4, offset = 0x4, fixed_abs, tag = 'smem constant byte address 0x4 - core index']
  #allocation1 [shape = 'u32[144,128]{1,0:T(1,128)}', space=vmem, size = 0x12000, scoped, tag = 'internal scratch']
  %s0 = inlined_call_operand.hbm [shape: f32[4,6,8,8], index: 0, kind: input, shape index: {}]
  %s1 = inlined_call_operand.vmem [shape: f32[4,6,8], index: 1, kind: input, shape index: {}]
  %s2 = inlined_call_operand.vmem [shape: f32[8,8], index: 2, kind: input, shape index: {}]
  %s3 = inlined_call_operand.hbm [shape: f32[2,8,8], index: 3, kind: output, shape index: {0}]
  %s4 = inlined_call_operand.hbm [shape: f32[2,8,8], index: 4, kind: output, shape index: {1}]
  %5 = xla_tuple %s3, %s4
  %s6 = sld [smem:[#allocation0]]
  $region34: #{tpu_custom_call.1} parent=0
    _
  %s8 = ssub.s32 1, %s6
  %s9 = scalar_select 0, %s8, %s6
  $region1: #{tpu_custom_call.1} parent=0
    #allocation2 [shape = 'u8[98304]{0}', space=vmem, size = 0x18000, scoped, tag = 'input window, operand 0, single buffered']
    #allocation3 [shape = 's32[1]{0}', space=sflag, size = 0x4, scoped, tag = 'scoped memory for tpu_custom_call.1']
    #allocation4 [shape = 's32[1]{0}', space=sflag, size = 0x4, scoped, tag = 'scoped memory for tpu_custom_call.1']
    #allocation5 [shape = 'u8[8192]{0}', space=vmem, size = 0x2000, scoped, tag = 'output window, operand 0, single buffered']
    #allocation6 [shape = 'u8[8192]{0}', space=vmem, size = 0x2000, scoped, tag = 'output window, operand 1, single buffered']
    #allocation7 [shape = 's32[1]{0}', space=sflag, size = 0x4, scoped, tag = 'scoped memory for tpu_custom_call.1']
    %10 = vsyncpa [#allocation3], 0
    %11 = vsyncpa [#allocation4], 0
    %12 = vsyncpa [#allocation7], 0
    // Predicated region
    $region2: #{tpu_custom_call.1} parent=1 // pred_check
      _
    $region3: #{tpu_custom_call.1} parent=1 // pred_check_branch
      %14 = sbr.rel (0) target = $region5
    $region4: #{tpu_custom_call.1} parent=1 // pred_region
      %s16 = ssub.s32 3072, 3072
      %17 = vsyncadd [#allocation3], %s16
      %s18 = sshll.u32 [#allocation2], 4
      %s19 = int_to_ptr.vmem [resolvable:$true] %s18
      %24 = dma.hbm_to_vmem [thread:$0]  %s0, 3072, %s19, [#allocation3], 128, 128, 8
    $region5: #{tpu_custom_call.1} parent=1 // pred_fallthru
      _
    // Predicated region
    $region6: #{tpu_custom_call.1} parent=1 // pred_check
      _
    $region7: #{tpu_custom_call.1} parent=1 // pred_check_branch
      %26 = sbr.rel (0) target = $region9
    $region8: #{tpu_custom_call.1} parent=1 // pred_region
      _
    $region9: #{tpu_custom_call.1} parent=1 // pred_fallthru
      _
    // Predicated region
    $region10: #{tpu_custom_call.1} parent=1 // pred_check
      _
    $region11: #{tpu_custom_call.1} parent=1 // pred_check_branch
      %28 = sbr.rel (0) target = $region13
    $region12: #{tpu_custom_call.1} parent=1 // pred_region
      _
    $region13: #{tpu_custom_call.1} parent=1 // pred_fallthru
      _
    // Predicated region
    $region14: #{tpu_custom_call.1} parent=1 // pred_check
      _
    $region15: #{tpu_custom_call.1} parent=1 // pred_check_branch
      %30 = sbr.rel (0) target = $region17
    $region16: #{tpu_custom_call.1} parent=1 // pred_region
      %31 = dma.done [#allocation3], 3072
    $region17: #{tpu_custom_call.1} parent=1 // pred_fallthru
      _
    %v32 = vld [vmem:[#allocation2] sm:$0xff]
    %v33 = vld [vmem:[#allocation2 + $0x8] sm:$0xff]
    %v34 = vld [vmem:[#allocation2 + $0x10] sm:$0xff]
    %v35 = vld [vmem:[#allocation2 + $0x18] sm:$0xff]
    %v36 = vld [vmem:[#allocation2 + $0x20] sm:$0xff]
    %v37 = vld [vmem:[#allocation2 + $0x28] sm:$0xff]
    %v38 = vld [vmem:[#allocation2 + $0x30] sm:$0xff]
    %v39 = vld [vmem:[#allocation2 + $0x38] sm:$0xff]
    %v40 = vld [vmem:[#allocation2 + $0x40] sm:$0xff]
    %v41 = vld [vmem:[#allocation2 + $0x48] sm:$0xff]
    %v42 = vld [vmem:[#allocation2 + $0x50] sm:$0xff]
    %v43 = vld [vmem:[#allocation2 + $0x58] sm:$0xff]
    %v44 = vld [vmem:[#allocation2 + $0x60] sm:$0xff]
    %v45 = vld [vmem:[#allocation2 + $0x68] sm:$0xff]
    %v46 = vld [vmem:[#allocation2 + $0x70] sm:$0xff]
    %v47 = vld [vmem:[#allocation2 + $0x78] sm:$0xff]
    %v48 = vld [vmem:[#allocation2 + $0x80] sm:$0xff]
    %v49 = vld [vmem:[#allocation2 + $0x88] sm:$0xff]
    %v50 = vld [vmem:[#allocation2 + $0x90] sm:$0xff]
    %v51 = vld [vmem:[#allocation2 + $0x98] sm:$0xff]
    %v52 = vld [vmem:[#allocation2 + $0xa0] sm:$0xff]
    %v53 = vld [vmem:[#allocation2 + $0xa8] sm:$0xff]
    %v54 = vld [vmem:[#allocation2 + $0xb0] sm:$0xff]
    %v55 = vld [vmem:[#allocation2 + $0xb8] sm:$0xff]
    %v56 = vld [vmem:[%s1] sm:$0x3f]
    %v57 = vld [vmem:[%s1 + $0x8] sm:$0x3f]
    %v58 = vld [vmem:[%s1 + $0x10] sm:$0x3f]
    %v59 = vld [vmem:[%s1 + $0x18] sm:$0x3f]
    %v60 = vld [vmem:[%s2] sm:$0xff]
    %v61 = vmul.f32 %v56, 1.442695
    %v62 = vpow.pop %v61
    %v63 = vmul.f32 %v57, 1.442695
    %v64 = vpow.pop %v63
    %v65 = vmul.f32 %v58, 1.442695
    %v66 = vpow.pop %v65
    %v67 = vmul.f32 %v59, 1.442695
    %v68 = vpow.pop %v67
    %v69 = vlaneseq
    %v70 = vshrl.u32 %v69, 7
    %v71 = vsub.s32 5, %v70
    %v72 = vrot.slane %v62, %v71
    %v73 = vlaneseq
    %v74 = vshrl.u32 %v73, 7
    %v75 = vsub.s32 5, %v74
    %v76 = vrot.slane %v64, %v75
    %v77 = vlaneseq
    %v78 = vshrl.u32 %v77, 7
    %v79 = vsub.s32 5, %v78
    %v80 = vrot.slane %v66, %v79
    %v81 = vlaneseq
    %v82 = vshrl.u32 %v81, 7
    %v83 = vsub.s32 5, %v82
    %v84 = vrot.slane %v68, %v83
    %v85 = vmul.f32 %v37, %v72
    %v86 = vmul.f32 %v43, %v76
    %v87 = vmul.f32 %v49, %v80
    %v88 = vmul.f32 %v55, %v84
    %vm89 = vcmask 64512
    %v91 = vsel %vm89, %v85, 0
    %v94 = vsel %vm89, %v37, 0
    %96 = vmatprep.subr.mxu0 0.0
    %97 = vmatpush1.xpose.msra.mxu0 %v94
    %98 = vmatprep.subr.mxu0 0.0
    %99 = vmatpush1.xpose.msra.mxu0 0.0
    %100 = vmatprep.subr.mxu0 0.0
    %101 = vmatpush1.xpose.msra.mxu0 0.0
    %102 = vmatprep.subr.mxu0 0.0
    %103 = vmatpush1.xpose.msra.mxu0 0.0
    %104 = vmatprep.subr.mxu0 0.0
    %105 = vmatpush1.xpose.msra.mxu0 0.0
    %106 = vmatprep.subr.mxu0 0.0
    %107 = vmatpush1.xpose.msra.mxu0 0.0
    %108 = vmatprep.subr.mxu0 0.0
    %109 = vmatpush1.xpose.msra.mxu0 0.0
    %110 = vmatprep.subr.mxu0 0.0
    %111 = vmatpush1.xpose.msra.mxu0 0.0
    %112 = vmatprep.subr.mxu0 0.0
    %113 = vmatpush1.xpose.msra.mxu0 0.0
    %114 = vmatprep.subr.mxu0 0.0
    %115 = vmatpush1.xpose.msra.mxu0 0.0
    %116 = vmatprep.subr.mxu0 0.0
    %117 = vmatpush1.xpose.msra.mxu0 0.0
    %118 = vmatprep.subr.mxu0 0.0
    %119 = vmatpush1.xpose.msra.mxu0 0.0
    %120 = vmatprep.subr.mxu0 0.0
    %121 = vmatpush1.xpose.msra.mxu0 0.0
    %122 = vmatprep.subr.mxu0 0.0
    %123 = vmatpush1.xpose.msra.mxu0 0.0
    %124 = vmatprep.subr.mxu0 0.0
    %125 = vmatpush1.xpose.msra.mxu0 0.0
    %126 = vmatprep.subr.mxu0 0.0
    %127 = vmatpush1.xpose.msra.mxu0 0.0
    %128 = vmatprep.subr.mxu0 0.0
    %129 = vmatpush1.xpose.msra.mxu0 0.0
    %130 = vmatprep.subr.mxu0 0.0
    %131 = vmatpush1.xpose.msra.mxu0 0.0
    %132 = vmatprep.subr.mxu0 0.0
    %133 = vmatpush1.xpose.msra.mxu0 0.0
    %134 = vmatprep.subr.mxu0 0.0
    %135 = vmatpush1.xpose.msra.mxu0 0.0
    %136 = vmatprep.subr.mxu0 0.0
    %137 = vmatpush1.xpose.msra.mxu0 0.0
    %138 = vmatprep.subr.mxu0 0.0
    %139 = vmatpush1.xpose.msra.mxu0 0.0
    %140 = vmatprep.subr.mxu0 0.0
    %141 = vmatpush1.xpose.msra.mxu0 0.0
    %142 = vmatprep.subr.mxu0 0.0
    %143 = vmatpush1.xpose.msra.mxu0 0.0
    %144 = vmatprep.subr.mxu0 0.0
    %145 = vmatpush1.xpose.msra.mxu0 0.0
    %146 = vmatprep.subr.mxu0 0.0
    %147 = vmatpush1.xpose.msra.mxu0 0.0
    %148 = vmatprep.subr.mxu0 0.0
    %149 = vmatpush1.xpose.msra.mxu0 0.0
    %150 = vmatprep.subr.mxu0 0.0
    %151 = vmatpush1.xpose.msra.mxu0 0.0
    %152 = vmatprep.subr.mxu0 0.0
    %153 = vmatpush1.xpose.msra.mxu0 0.0
    %154 = vmatprep.subr.mxu0 0.0
    %155 = vmatpush1.xpose.msra.mxu0 0.0
    %156 = vmatprep.subr.mxu0 0.0
    %157 = vmatpush1.xpose.msra.mxu0 0.0
    %158 = vmatprep.subr.mxu0 0.0
    %159 = vmatpush1.xpose.msra.mxu0 0.0
    %160 = vmatprep.mubr.f32.mxu0 0.0
    %161 = vmatmul.mubr.f32.gmra.mrb[0].mxu0 %v91
    %v162 = vpop.f32.mrb[0].mxu0
    %v163 = vadd.f32 0.0, %v162
    %v164 = vpop.f32.mrb[0].mxu0
    %165 = vdwg.mxu0
    %v167 = vsel %vm89, %v86, 0
    %v170 = vsel %vm89, %v43, 0
    %172 = vmatprep.subr.mxu0 0.0
    %173 = vmatpush1.xpose.msra.mxu0 %v170
    %174 = vmatprep.subr.mxu0 0.0
    %175 = vmatpush1.xpose.msra.mxu0 0.0
    %176 = vmatprep.subr.mxu0 0.0
    %177 = vmatpush1.xpose.msra.mxu0 0.0
    %178 = vmatprep.subr.mxu0 0.0
    %179 = vmatpush1.xpose.msra.mxu0 0.0
    %180 = vmatprep.subr.mxu0 0.0
    %181 = vmatpush1.xpose.msra.mxu0 0.0
    %182 = vmatprep.subr.mxu0 0.0
    %183 = vmatpush1.xpose.msra.mxu0 0.0
    %184 = vmatprep.subr.mxu0 0.0
    %185 = vmatpush1.xpose.msra.mxu0 0.0
    %186 = vmatprep.subr.mxu0 0.0
    %187 = vmatpush1.xpose.msra.mxu0 0.0
    %188 = vmatprep.subr.mxu0 0.0
    %189 = vmatpush1.xpose.msra.mxu0 0.0
    %190 = vmatprep.subr.mxu0 0.0
    %191 = vmatpush1.xpose.msra.mxu0 0.0
    %192 = vmatprep.subr.mxu0 0.0
    %193 = vmatpush1.xpose.msra.mxu0 0.0
    %194 = vmatprep.subr.mxu0 0.0
    %195 = vmatpush1.xpose.msra.mxu0 0.0
    %196 = vmatprep.subr.mxu0 0.0
    %197 = vmatpush1.xpose.msra.mxu0 0.0
    %198 = vmatprep.subr.mxu0 0.0
    %199 = vmatpush1.xpose.msra.mxu0 0.0
    %200 = vmatprep.subr.mxu0 0.0
    %201 = vmatpush1.xpose.msra.mxu0 0.0
    %202 = vmatprep.subr.mxu0 0.0
    %203 = vmatpush1.xpose.msra.mxu0 0.0
    %204 = vmatprep.subr.mxu0 0.0
    %205 = vmatpush1.xpose.msra.mxu0 0.0
    %206 = vmatprep.subr.mxu0 0.0
    %207 = vmatpush1.xpose.msra.mxu0 0.0
    %208 = vmatprep.subr.mxu0 0.0
    %209 = vmatpush1.xpose.msra.mxu0 0.0
    %210 = vmatprep.subr.mxu0 0.0
    %211 = vmatpush1.xpose.msra.mxu0 0.0
    %212 = vmatprep.subr.mxu0 0.0
    %213 = vmatpush1.xpose.msra.mxu0 0.0
    %214 = vmatprep.subr.mxu0 0.0
    %215 = vmatpush1.xpose.msra.mxu0 0.0
    %216 = vmatprep.subr.mxu0 0.0
    %217 = vmatpush1.xpose.msra.mxu0 0.0
    %218 = vmatprep.subr.mxu0 0.0
    %219 = vmatpush1.xpose.msra.mxu0 0.0
    %220 = vmatprep.subr.mxu0 0.0
    %221 = vmatpush1.xpose.msra.mxu0 0.0
    %222 = vmatprep.subr.mxu0 0.0
    %223 = vmatpush1.xpose.msra.mxu0 0.0
    %224 = vmatprep.subr.mxu0 0.0
    %225 = vmatpush1.xpose.msra.mxu0 0.0
    %226 = vmatprep.subr.mxu0 0.0
    %227 = vmatpush1.xpose.msra.mxu0 0.0
    %228 = vmatprep.subr.mxu0 0.0
    %229 = vmatpush1.xpose.msra.mxu0 0.0
    %230 = vmatprep.subr.mxu0 0.0
    %231 = vmatpush1.xpose.msra.mxu0 0.0
    %232 = vmatprep.subr.mxu0 0.0
    %233 = vmatpush1.xpose.msra.mxu0 0.0
    %234 = vmatprep.subr.mxu0 0.0
    %235 = vmatpush1.xpose.msra.mxu0 0.0
    %236 = vmatprep.mubr.f32.mxu0 0.0
    %237 = vmatmul.mubr.f32.gmra.mrb[0].mxu0 %v167
    %v238 = vpop.f32.mrb[0].mxu0
    %v239 = vadd.f32 0.0, %v238
    %v240 = vpop.f32.mrb[0].mxu0
    %241 = vdwg.mxu0
    %v243 = vsel %vm89, %v87, 0
    %v246 = vsel %vm89, %v49, 0
    %248 = vmatprep.subr.mxu0 0.0
    %249 = vmatpush1.xpose.msra.mxu0 %v246
    %250 = vmatprep.subr.mxu0 0.0
    %251 = vmatpush1.xpose.msra.mxu0 0.0
    %252 = vmatprep.subr.mxu0 0.0
    %253 = vmatpush1.xpose.msra.mxu0 0.0
    %254 = vmatprep.subr.mxu0 0.0
    %255 = vmatpush1.xpose.msra.mxu0 0.0
    %256 = vmatprep.subr.mxu0 0.0
    %257 = vmatpush1.xpose.msra.mxu0 0.0
    %258 = vmatprep.subr.mxu0 0.0
    %259 = vmatpush1.xpose.msra.mxu0 0.0
    %260 = vmatprep.subr.mxu0 0.0
    %261 = vmatpush1.xpose.msra.mxu0 0.0
    %262 = vmatprep.subr.mxu0 0.0
    %263 = vmatpush1.xpose.msra.mxu0 0.0
    %264 = vmatprep.subr.mxu0 0.0
    %265 = vmatpush1.xpose.msra.mxu0 0.0
    %266 = vmatprep.subr.mxu0 0.0
    %267 = vmatpush1.xpose.msra.mxu0 0.0
    %268 = vmatprep.subr.mxu0 0.0
    %269 = vmatpush1.xpose.msra.mxu0 0.0
    %270 = vmatprep.subr.mxu0 0.0
    %271 = vmatpush1.xpose.msra.mxu0 0.0
    %272 = vmatprep.subr.mxu0 0.0
    %273 = vmatpush1.xpose.msra.mxu0 0.0
    %274 = vmatprep.subr.mxu0 0.0
    %275 = vmatpush1.xpose.msra.mxu0 0.0
    %276 = vmatprep.subr.mxu0 0.0
    %277 = vmatpush1.xpose.msra.mxu0 0.0
    %278 = vmatprep.subr.mxu0 0.0
    %279 = vmatpush1.xpose.msra.mxu0 0.0
    %280 = vmatprep.subr.mxu0 0.0
    %281 = vmatpush1.xpose.msra.mxu0 0.0
    %282 = vmatprep.subr.mxu0 0.0
    %283 = vmatpush1.xpose.msra.mxu0 0.0
    %284 = vmatprep.subr.mxu0 0.0
    %285 = vmatpush1.xpose.msra.mxu0 0.0
    %286 = vmatprep.subr.mxu0 0.0
    %287 = vmatpush1.xpose.msra.mxu0 0.0
    %288 = vmatprep.subr.mxu0 0.0
    %289 = vmatpush1.xpose.msra.mxu0 0.0
    %290 = vmatprep.subr.mxu0 0.0
    %291 = vmatpush1.xpose.msra.mxu0 0.0
    %292 = vmatprep.subr.mxu0 0.0
    %293 = vmatpush1.xpose.msra.mxu0 0.0
    %294 = vmatprep.subr.mxu0 0.0
    %295 = vmatpush1.xpose.msra.mxu0 0.0
    %296 = vmatprep.subr.mxu0 0.0
    %297 = vmatpush1.xpose.msra.mxu0 0.0
    %298 = vmatprep.subr.mxu0 0.0
    %299 = vmatpush1.xpose.msra.mxu0 0.0
    %300 = vmatprep.subr.mxu0 0.0
    %301 = vmatpush1.xpose.msra.mxu0 0.0
    %302 = vmatprep.subr.mxu0 0.0
    %303 = vmatpush1.xpose.msra.mxu0 0.0
    %304 = vmatprep.subr.mxu0 0.0
    %305 = vmatpush1.xpose.msra.mxu0 0.0
    %306 = vmatprep.subr.mxu0 0.0
    %307 = vmatpush1.xpose.msra.mxu0 0.0
    %308 = vmatprep.subr.mxu0 0.0
    %309 = vmatpush1.xpose.msra.mxu0 0.0
    %310 = vmatprep.subr.mxu0 0.0
    %311 = vmatpush1.xpose.msra.mxu0 0.0
    %312 = vmatprep.mubr.f32.mxu0 0.0
    %313 = vmatmul.mubr.f32.gmra.mrb[0].mxu0 %v243
    %v314 = vpop.f32.mrb[0].mxu0
    %v315 = vadd.f32 0.0, %v314
    %v316 = vpop.f32.mrb[0].mxu0
    %317 = vdwg.mxu0
    %v319 = vsel %vm89, %v88, 0
    %v322 = vsel %vm89, %v55, 0
    %324 = vmatprep.subr.mxu0 0.0
    %325 = vmatpush1.xpose.msra.mxu0 %v322
    %326 = vmatprep.subr.mxu0 0.0
    %327 = vmatpush1.xpose.msra.mxu0 0.0
    %328 = vmatprep.subr.mxu0 0.0
    %329 = vmatpush1.xpose.msra.mxu0 0.0
    %330 = vmatprep.subr.mxu0 0.0
    %331 = vmatpush1.xpose.msra.mxu0 0.0
    %332 = vmatprep.subr.mxu0 0.0
    %333 = vmatpush1.xpose.msra.mxu0 0.0
    %334 = vmatprep.subr.mxu0 0.0
    %335 = vmatpush1.xpose.msra.mxu0 0.0
    %336 = vmatprep.subr.mxu0 0.0
    %337 = vmatpush1.xpose.msra.mxu0 0.0
    %338 = vmatprep.subr.mxu0 0.0
    %339 = vmatpush1.xpose.msra.mxu0 0.0
    %340 = vmatprep.subr.mxu0 0.0
    %341 = vmatpush1.xpose.msra.mxu0 0.0
    %342 = vmatprep.subr.mxu0 0.0
    %343 = vmatpush1.xpose.msra.mxu0 0.0
    %344 = vmatprep.subr.mxu0 0.0
    %345 = vmatpush1.xpose.msra.mxu0 0.0
    %346 = vmatprep.subr.mxu0 0.0
    %347 = vmatpush1.xpose.msra.mxu0 0.0
    %348 = vmatprep.subr.mxu0 0.0
    %349 = vmatpush1.xpose.msra.mxu0 0.0
    %350 = vmatprep.subr.mxu0 0.0
    %351 = vmatpush1.xpose.msra.mxu0 0.0
    %352 = vmatprep.subr.mxu0 0.0
    %353 = vmatpush1.xpose.msra.mxu0 0.0
    %354 = vmatprep.subr.mxu0 0.0
    %355 = vmatpush1.xpose.msra.mxu0 0.0
    %356 = vmatprep.subr.mxu0 0.0
    %357 = vmatpush1.xpose.msra.mxu0 0.0
    %358 = vmatprep.subr.mxu0 0.0
    %359 = vmatpush1.xpose.msra.mxu0 0.0
    %360 = vmatprep.subr.mxu0 0.0
    %361 = vmatpush1.xpose.msra.mxu0 0.0
    %362 = vmatprep.subr.mxu0 0.0
    %363 = vmatpush1.xpose.msra.mxu0 0.0
    %364 = vmatprep.subr.mxu0 0.0
    %365 = vmatpush1.xpose.msra.mxu0 0.0
    %366 = vmatprep.subr.mxu0 0.0
    %367 = vmatpush1.xpose.msra.mxu0 0.0
    %368 = vmatprep.subr.mxu0 0.0
    %369 = vmatpush1.xpose.msra.mxu0 0.0
    %370 = vmatprep.subr.mxu0 0.0
    %371 = vmatpush1.xpose.msra.mxu0 0.0
    %372 = vmatprep.subr.mxu0 0.0
    %373 = vmatpush1.xpose.msra.mxu0 0.0
    %374 = vmatprep.subr.mxu0 0.0
    %375 = vmatpush1.xpose.msra.mxu0 0.0
    %376 = vmatprep.subr.mxu0 0.0
    %377 = vmatpush1.xpose.msra.mxu0 0.0
    %378 = vmatprep.subr.mxu0 0.0
    %379 = vmatpush1.xpose.msra.mxu0 0.0
    %380 = vmatprep.subr.mxu0 0.0
    %381 = vmatpush1.xpose.msra.mxu0 0.0
    %382 = vmatprep.subr.mxu0 0.0
    %383 = vmatpush1.xpose.msra.mxu0 0.0
    %384 = vmatprep.subr.mxu0 0.0
    %385 = vmatpush1.xpose.msra.mxu0 0.0
    %386 = vmatprep.subr.mxu0 0.0
    %387 = vmatpush1.xpose.msra.mxu0 0.0
    %388 = vmatprep.mubr.f32.mxu0 0.0
    %389 = vmatmul.mubr.f32.gmra.mrb[0].mxu0 %v319
    %v390 = vpop.f32.mrb[0].mxu0
    %v391 = vadd.f32 0.0, %v390
    %v392 = vpop.f32.mrb[0].mxu0
    %393 = vdwg.mxu0
    %v394 = vmul.f32 %v56, 0.5
    %v395 = vmul.f32 %v57, 0.5
    %v396 = vmul.f32 %v58, 0.5
    %v397 = vmul.f32 %v59, 0.5
    %v398 = vmul.f32 %v394, 1.442695
    %v399 = vpow.pop %v398
    %v400 = vmul.f32 %v395, 1.442695
    %v401 = vpow.pop %v400
    %v402 = vmul.f32 %v396, 1.442695
    %v403 = vpow.pop %v402
    %v404 = vmul.f32 %v397, 1.442695
    %v405 = vpow.pop %v404
    %v410 = vcombine.high %v399, %v399
    %v412 = vunpack.c.l.s4 1966171168
    %v413 = vunpack.c.0.s8 %v412
    %v414 = vlaneseq
    %v415 = vshrl.u32 %v414, 7
    %v416 = vsub.s32 %v413, %v415
    %v417 = vrot.slane %v399, %v416
    %v419 = vunpack.c.l.s4 1966171168
    %v420 = vunpack.c.0.s8 %v419
    %v421 = vlaneseq
    %v422 = vshrl.u32 %v421, 7
    %v423 = vsub.s32 %v420, %v422
    %v424 = vrot.slane %v410, %v423
    %v425 = vcombine.high %v417, %v417
    %v427 = vunpack.c.l.s4 1966171168
    %v428 = vunpack.c.0.s8 %v427
    %v429 = vlaneseq
    %v430 = vshrl.u32 %v429, 7
    %v431 = vsub.s32 %v428, %v430
    %v432 = vrot.slane %v417, %v431
    %v434 = vunpack.c.l.s4 1966171168
    %v435 = vunpack.c.0.s8 %v434
    %v436 = vlaneseq
    %v437 = vshrl.u32 %v436, 7
    %v438 = vsub.s32 %v435, %v437
    %v439 = vrot.slane %v424, %v438
    %v441 = vunpack.c.l.s4 1966171168
    %v442 = vunpack.c.0.s8 %v441
    %v443 = vlaneseq
    %v444 = vshrl.u32 %v443, 7
    %v445 = vsub.s32 %v442, %v444
    %v446 = vrot.slane %v425, %v445
    %v447 = vcombine.high %v432, %v432
    %v448 = vcombine.high %v446, %v446
    %v449 = vcombine.high %v401, %v401
    %v451 = vunpack.c.l.s4 1966171168
    %v452 = vunpack.c.0.s8 %v451
    %v453 = vlaneseq
    %v454 = vshrl.u32 %v453, 7
    %v455 = vsub.s32 %v452, %v454
    %v456 = vrot.slane %v401, %v455
    %v458 = vunpack.c.l.s4 1966171168
    %v459 = vunpack.c.0.s8 %v458
    %v460 = vlaneseq
    %v461 = vshrl.u32 %v460, 7
    %v462 = vsub.s32 %v459, %v461
    %v463 = vrot.slane %v449, %v462
    %v464 = vcombine.high %v456, %v456
    %v466 = vunpack.c.l.s4 1966171168
    %v467 = vunpack.c.0.s8 %v466
    %v468 = vlaneseq
    %v469 = vshrl.u32 %v468, 7
    %v470 = vsub.s32 %v467, %v469
    %v471 = vrot.slane %v456, %v470
    %v473 = vunpack.c.l.s4 1966171168
    %v474 = vunpack.c.0.s8 %v473
    %v475 = vlaneseq
    %v476 = vshrl.u32 %v475, 7
    %v477 = vsub.s32 %v474, %v476
    %v478 = vrot.slane %v463, %v477
    %v480 = vunpack.c.l.s4 1966171168
    %v481 = vunpack.c.0.s8 %v480
    %v482 = vlaneseq
    %v483 = vshrl.u32 %v482, 7
    %v484 = vsub.s32 %v481, %v483
    %v485 = vrot.slane %v464, %v484
    %v486 = vcombine.high %v471, %v471
    %v487 = vcombine.high %v485, %v485
    %v488 = vcombine.high %v403, %v403
    %v490 = vunpack.c.l.s4 1966171168
    %v491 = vunpack.c.0.s8 %v490
    %v492 = vlaneseq
    %v493 = vshrl.u32 %v492, 7
    %v494 = vsub.s32 %v491, %v493
    %v495 = vrot.slane %v403, %v494
    %v497 = vunpack.c.l.s4 1966171168
    %v498 = vunpack.c.0.s8 %v497
    %v499 = vlaneseq
    %v500 = vshrl.u32 %v499, 7
    %v501 = vsub.s32 %v498, %v500
    %v502 = vrot.slane %v488, %v501
    %v503 = vcombine.high %v495, %v495
    %v505 = vunpack.c.l.s4 1966171168
    %v506 = vunpack.c.0.s8 %v505
    %v507 = vlaneseq
    %v508 = vshrl.u32 %v507, 7
    %v509 = vsub.s32 %v506, %v508
    %v510 = vrot.slane %v495, %v509
    %v512 = vunpack.c.l.s4 1966171168
    %v513 = vunpack.c.0.s8 %v512
    %v514 = vlaneseq
    %v515 = vshrl.u32 %v514, 7
    %v516 = vsub.s32 %v513, %v515
    %v517 = vrot.slane %v502, %v516
    %v519 = vunpack.c.l.s4 1966171168
    %v520 = vunpack.c.0.s8 %v519
    %v521 = vlaneseq
    %v522 = vshrl.u32 %v521, 7
    %v523 = vsub.s32 %v520, %v522
    %v524 = vrot.slane %v503, %v523
    %v525 = vcombine.high %v510, %v510
    %v526 = vcombine.high %v524, %v524
    %v527 = vcombine.high %v405, %v405
    %v529 = vunpack.c.l.s4 1966171168
    %v530 = vunpack.c.0.s8 %v529
    %v531 = vlaneseq
    %v532 = vshrl.u32 %v531, 7
    %v533 = vsub.s32 %v530, %v532
    %v534 = vrot.slane %v405, %v533
    %v536 = vunpack.c.l.s4 1966171168
    %v537 = vunpack.c.0.s8 %v536
    %v538 = vlaneseq
    %v539 = vshrl.u32 %v538, 7
    %v540 = vsub.s32 %v537, %v539
    %v541 = vrot.slane %v527, %v540
    %v542 = vcombine.high %v534, %v534
    %v544 = vunpack.c.l.s4 1966171168
    %v545 = vunpack.c.0.s8 %v544
    %v546 = vlaneseq
    %v547 = vshrl.u32 %v546, 7
    %v548 = vsub.s32 %v545, %v547
    %v549 = vrot.slane %v534, %v548
    %v551 = vunpack.c.l.s4 1966171168
    %v552 = vunpack.c.0.s8 %v551
    %v553 = vlaneseq
    %v554 = vshrl.u32 %v553, 7
    %v555 = vsub.s32 %v552, %v554
    %v556 = vrot.slane %v541, %v555
    %v558 = vunpack.c.l.s4 1966171168
    %v559 = vunpack.c.0.s8 %v558
    %v560 = vlaneseq
    %v561 = vshrl.u32 %v560, 7
    %v562 = vsub.s32 %v559, %v561
    %v563 = vrot.slane %v542, %v562
    %v564 = vcombine.high %v549, %v549
    %v565 = vcombine.high %v563, %v563
    %v566 = vlaneseq
    %v567 = vshrl.u32 %v566, 7
    %v568 = vsub.s32 0, %v567
    %v569 = vrot.slane %v432, %v568
    %v570 = vlaneseq
    %v571 = vshrl.u32 %v570, 7
    %v572 = vsub.s32 0, %v571
    %v573 = vrot.slane %v446, %v572
    %v574 = vlaneseq
    %v575 = vshrl.u32 %v574, 7
    %v576 = vsub.s32 0, %v575
    %v577 = vrot.slane %v447, %v576
    %v578 = vlaneseq
    %v579 = vshrl.u32 %v578, 7
    %v580 = vsub.s32 0, %v579
    %v581 = vrot.slane %v448, %v580
    %v582 = vlaneseq
    %v583 = vshrl.u32 %v582, 7
    %v584 = vsub.s32 0, %v583
    %v585 = vrot.slane %v439, %v584
    %v586 = vlaneseq
    %v587 = vshrl.u32 %v586, 7
    %v588 = vsub.s32 0, %v587
    %v589 = vrot.slane %v471, %v588
    %v590 = vlaneseq
    %v591 = vshrl.u32 %v590, 7
    %v592 = vsub.s32 0, %v591
    %v593 = vrot.slane %v485, %v592
    %v594 = vlaneseq
    %v595 = vshrl.u32 %v594, 7
    %v596 = vsub.s32 0, %v595
    %v597 = vrot.slane %v486, %v596
    %v598 = vlaneseq
    %v599 = vshrl.u32 %v598, 7
    %v600 = vsub.s32 0, %v599
    %v601 = vrot.slane %v487, %v600
    %v602 = vlaneseq
    %v603 = vshrl.u32 %v602, 7
    %v604 = vsub.s32 0, %v603
    %v605 = vrot.slane %v478, %v604
    %v606 = vlaneseq
    %v607 = vshrl.u32 %v606, 7
    %v608 = vsub.s32 0, %v607
    %v609 = vrot.slane %v510, %v608
    %v610 = vlaneseq
    %v611 = vshrl.u32 %v610, 7
    %v612 = vsub.s32 0, %v611
    %v613 = vrot.slane %v524, %v612
    %v614 = vlaneseq
    %v615 = vshrl.u32 %v614, 7
    %v616 = vsub.s32 0, %v615
    %v617 = vrot.slane %v525, %v616
    %v618 = vlaneseq
    %v619 = vshrl.u32 %v618, 7
    %v620 = vsub.s32 0, %v619
    %v621 = vrot.slane %v526, %v620
    %v622 = vlaneseq
    %v623 = vshrl.u32 %v622, 7
    %v624 = vsub.s32 0, %v623
    %v625 = vrot.slane %v517, %v624
    %v626 = vlaneseq
    %v627 = vshrl.u32 %v626, 7
    %v628 = vsub.s32 0, %v627
    %v629 = vrot.slane %v549, %v628
    %v630 = vlaneseq
    %v631 = vshrl.u32 %v630, 7
    %v632 = vsub.s32 0, %v631
    %v633 = vrot.slane %v563, %v632
    %v634 = vlaneseq
    %v635 = vshrl.u32 %v634, 7
    %v636 = vsub.s32 0, %v635
    %v637 = vrot.slane %v564, %v636
    %v638 = vlaneseq
    %v639 = vshrl.u32 %v638, 7
    %v640 = vsub.s32 0, %v639
    %v641 = vrot.slane %v565, %v640
    %v642 = vlaneseq
    %v643 = vshrl.u32 %v642, 7
    %v644 = vsub.s32 0, %v643
    %v645 = vrot.slane %v556, %v644
    %v666 = vmul.f32 %v32, %v569
    %v667 = vmul.f32 %v33, %v573
    %v668 = vmul.f32 %v34, %v577
    %v669 = vmul.f32 %v35, %v581
    %v670 = vmul.f32 %v36, %v585
    %v671 = vmul.f32 %v38, %v589
    %v672 = vmul.f32 %v39, %v593
    %v673 = vmul.f32 %v40, %v597
    %v674 = vmul.f32 %v41, %v601
    %v675 = vmul.f32 %v42, %v605
    %v676 = vmul.f32 %v44, %v609
    %v677 = vmul.f32 %v45, %v613
    %v678 = vmul.f32 %v46, %v617
    %v679 = vmul.f32 %v47, %v621
    %v680 = vmul.f32 %v48, %v625
    %v681 = vmul.f32 %v50, %v629
    %v682 = vmul.f32 %v51, %v633
    %v683 = vmul.f32 %v52, %v637
    %v684 = vmul.f32 %v53, %v641
    %v685 = vmul.f32 %v54, %v645
    %v687 = vsel %vm89, %v666, 0
    %v690 = vsel %vm89, %v32, 0
    %692 = vmatprep.subr.mxu0 0.0
    %693 = vmatpush1.xpose.msra.mxu0 %v690
    %694 = vmatprep.subr.mxu0 0.0
    %695 = vmatpush1.xpose.msra.mxu0 0.0
    %696 = vmatprep.subr.mxu0 0.0
    %697 = vmatpush1.xpose.msra.mxu0 0.0
    %698 = vmatprep.subr.mxu0 0.0
    %699 = vmatpush1.xpose.msra.mxu0 0.0
    %700 = vmatprep.subr.mxu0 0.0
    %701 = vmatpush1.xpose.msra.mxu0 0.0
    %702 = vmatprep.subr.mxu0 0.0
    %703 = vmatpush1.xpose.msra.mxu0 0.0
    %704 = vmatprep.subr.mxu0 0.0
    %705 = vmatpush1.xpose.msra.mxu0 0.0
    %706 = vmatprep.subr.mxu0 0.0
    %707 = vmatpush1.xpose.msra.mxu0 0.0
    %708 = vmatprep.subr.mxu0 0.0
    %709 = vmatpush1.xpose.msra.mxu0 0.0
    %710 = vmatprep.subr.mxu0 0.0
    %711 = vmatpush1.xpose.msra.mxu0 0.0
    %712 = vmatprep.subr.mxu0 0.0
    %713 = vmatpush1.xpose.msra.mxu0 0.0
    %714 = vmatprep.subr.mxu0 0.0
    %715 = vmatpush1.xpose.msra.mxu0 0.0
    %716 = vmatprep.subr.mxu0 0.0
    %717 = vmatpush1.xpose.msra.mxu0 0.0
    %718 = vmatprep.subr.mxu0 0.0
    %719 = vmatpush1.xpose.msra.mxu0 0.0
    %720 = vmatprep.subr.mxu0 0.0
    %721 = vmatpush1.xpose.msra.mxu0 0.0
    %722 = vmatprep.subr.mxu0 0.0
    %723 = vmatpush1.xpose.msra.mxu0 0.0
    %724 = vmatprep.subr.mxu0 0.0
    %725 = vmatpush1.xpose.msra.mxu0 0.0
    %726 = vmatprep.subr.mxu0 0.0
    %727 = vmatpush1.xpose.msra.mxu0 0.0
    %728 = vmatprep.subr.mxu0 0.0
    %729 = vmatpush1.xpose.msra.mxu0 0.0
    %730 = vmatprep.subr.mxu0 0.0
    %731 = vmatpush1.xpose.msra.mxu0 0.0
    %732 = vmatprep.subr.mxu0 0.0
    %733 = vmatpush1.xpose.msra.mxu0 0.0
    %734 = vmatprep.subr.mxu0 0.0
    %735 = vmatpush1.xpose.msra.mxu0 0.0
    %736 = vmatprep.subr.mxu0 0.0
    %737 = vmatpush1.xpose.msra.mxu0 0.0
    %738 = vmatprep.subr.mxu0 0.0
    %739 = vmatpush1.xpose.msra.mxu0 0.0
    %740 = vmatprep.subr.mxu0 0.0
    %741 = vmatpush1.xpose.msra.mxu0 0.0
    %742 = vmatprep.subr.mxu0 0.0
    %743 = vmatpush1.xpose.msra.mxu0 0.0
    %744 = vmatprep.subr.mxu0 0.0
    %745 = vmatpush1.xpose.msra.mxu0 0.0
    %746 = vmatprep.subr.mxu0 0.0
    %747 = vmatpush1.xpose.msra.mxu0 0.0
    %748 = vmatprep.subr.mxu0 0.0
    %749 = vmatpush1.xpose.msra.mxu0 0.0
    %750 = vmatprep.subr.mxu0 0.0
    %751 = vmatpush1.xpose.msra.mxu0 0.0
    %752 = vmatprep.subr.mxu0 0.0
    %753 = vmatpush1.xpose.msra.mxu0 0.0
    %754 = vmatprep.subr.mxu0 0.0
    %755 = vmatpush1.xpose.msra.mxu0 0.0
    %756 = vmatprep.mubr.f32.mxu0 0.0
    %757 = vmatmul.mubr.f32.gmra.mrb[0].mxu0 %v687
    %v758 = vpop.f32.mrb[0].mxu0
    %v759 = vadd.f32 0.0, %v758
    %v760 = vpop.f32.mrb[0].mxu0
    %761 = vdwg.mxu0
    %v763 = vsel %vm89, %v667, 0
    %v766 = vsel %vm89, %v33, 0
    %768 = vmatprep.subr.mxu0 0.0
    %769 = vmatpush1.xpose.msra.mxu0 %v766
    %770 = vmatprep.subr.mxu0 0.0
    %771 = vmatpush1.xpose.msra.mxu0 0.0
    %772 = vmatprep.subr.mxu0 0.0
    %773 = vmatpush1.xpose.msra.mxu0 0.0
    %774 = vmatprep.subr.mxu0 0.0
    %775 = vmatpush1.xpose.msra.mxu0 0.0
    %776 = vmatprep.subr.mxu0 0.0
    %777 = vmatpush1.xpose.msra.mxu0 0.0
    %778 = vmatprep.subr.mxu0 0.0
    %779 = vmatpush1.xpose.msra.mxu0 0.0
    %780 = vmatprep.subr.mxu0 0.0
    %781 = vmatpush1.xpose.msra.mxu0 0.0
    %782 = vmatprep.subr.mxu0 0.0
    %783 = vmatpush1.xpose.msra.mxu0 0.0
    %784 = vmatprep.subr.mxu0 0.0
    %785 = vmatpush1.xpose.msra.mxu0 0.0
    %786 = vmatprep.subr.mxu0 0.0
    %787 = vmatpush1.xpose.msra.mxu0 0.0
    %788 = vmatprep.subr.mxu0 0.0
    %789 = vmatpush1.xpose.msra.mxu0 0.0
    %790 = vmatprep.subr.mxu0 0.0
    %791 = vmatpush1.xpose.msra.mxu0 0.0
    %792 = vmatprep.subr.mxu0 0.0
    %793 = vmatpush1.xpose.msra.mxu0 0.0
    %794 = vmatprep.subr.mxu0 0.0
    %795 = vmatpush1.xpose.msra.mxu0 0.0
    %796 = vmatprep.subr.mxu0 0.0
    %797 = vmatpush1.xpose.msra.mxu0 0.0
    %798 = vmatprep.subr.mxu0 0.0
    %799 = vmatpush1.xpose.msra.mxu0 0.0
    %800 = vmatprep.subr.mxu0 0.0
    %801 = vmatpush1.xpose.msra.mxu0 0.0
    %802 = vmatprep.subr.mxu0 0.0
    %803 = vmatpush1.xpose.msra.mxu0 0.0
    %804 = vmatprep.subr.mxu0 0.0
    %805 = vmatpush1.xpose.msra.mxu0 0.0
    %806 = vmatprep.subr.mxu0 0.0
    %807 = vmatpush1.xpose.msra.mxu0 0.0
    %808 = vmatprep.subr.mxu0 0.0
    %809 = vmatpush1.xpose.msra.mxu0 0.0
    %810 = vmatprep.subr.mxu0 0.0
    %811 = vmatpush1.xpose.msra.mxu0 0.0
    %812 = vmatprep.subr.mxu0 0.0
    %813 = vmatpush1.xpose.msra.mxu0 0.0
    %814 = vmatprep.subr.mxu0 0.0
    %815 = vmatpush1.xpose.msra.mxu0 0.0
    %816 = vmatprep.subr.mxu0 0.0
    %817 = vmatpush1.xpose.msra.mxu0 0.0
    %818 = vmatprep.subr.mxu0 0.0
    %819 = vmatpush1.xpose.msra.mxu0 0.0
    %820 = vmatprep.subr.mxu0 0.0
    %821 = vmatpush1.xpose.msra.mxu0 0.0
    %822 = vmatprep.subr.mxu0 0.0
    %823 = vmatpush1.xpose.msra.mxu0 0.0
    %824 = vmatprep.subr.mxu0 0.0
    %825 = vmatpush1.xpose.msra.mxu0 0.0
    %826 = vmatprep.subr.mxu0 0.0
    %827 = vmatpush1.xpose.msra.mxu0 0.0
    %828 = vmatprep.subr.mxu0 0.0
    %829 = vmatpush1.xpose.msra.mxu0 0.0
    %830 = vmatprep.subr.mxu0 0.0
    %831 = vmatpush1.xpose.msra.mxu0 0.0
    %832 = vmatprep.mubr.f32.mxu0 0.0
    %833 = vmatmul.mubr.f32.gmra.mrb[0].mxu0 %v763
    %v834 = vpop.f32.mrb[0].mxu0
    %v835 = vadd.f32 0.0, %v834
    %v836 = vpop.f32.mrb[0].mxu0
    %837 = vdwg.mxu0
    %v839 = vsel %vm89, %v668, 0
    %v842 = vsel %vm89, %v34, 0
    %844 = vmatprep.subr.mxu0 0.0
    %845 = vmatpush1.xpose.msra.mxu0 %v842
    %846 = vmatprep.subr.mxu0 0.0
    %847 = vmatpush1.xpose.msra.mxu0 0.0
    %848 = vmatprep.subr.mxu0 0.0
    %849 = vmatpush1.xpose.msra.mxu0 0.0
    %850 = vmatprep.subr.mxu0 0.0
    %851 = vmatpush1.xpose.msra.mxu0 0.0
    %852 = vmatprep.subr.mxu0 0.0
    %853 = vmatpush1.xpose.msra.mxu0 0.0
    %854 = vmatprep.subr.mxu0 0.0
    %855 = vmatpush1.xpose.msra.mxu0 0.0
    %856 = vmatprep.subr.mxu0 0.0
    %857 = vmatpush1.xpose.msra.mxu0 0.0
    %858 = vmatprep.subr.mxu0 0.0
    %859 = vmatpush1.xpose.msra.mxu0 0.0
    %860 = vmatprep.subr.mxu0 0.0
    %861 = vmatpush1.xpose.msra.mxu0 0.0
    %862 = vmatprep.subr.mxu0 0.0
    %863 = vmatpush1.xpose.msra.mxu0 0.0
    %864 = vmatprep.subr.mxu0 0.0
    %865 = vmatpush1.xpose.msra.mxu0 0.0
    %866 = vmatprep.subr.mxu0 0.0
    %867 = vmatpush1.xpose.msra.mxu0 0.0
    %868 = vmatprep.subr.mxu0 0.0
    %869 = vmatpush1.xpose.msra.mxu0 0.0
    %870 = vmatprep.subr.mxu0 0.0
    %871 = vmatpush1.xpose.msra.mxu0 0.0
    %872 = vmatprep.subr.mxu0 0.0
    %873 = vmatpush1.xpose.msra.mxu0 0.0
    %874 = vmatprep.subr.mxu0 0.0
    %875 = vmatpush1.xpose.msra.mxu0 0.0
    %876 = vmatprep.subr.mxu0 0.0
    %877 = vmatpush1.xpose.msra.mxu0 0.0
    %878 = vmatprep.subr.mxu0 0.0
    %879 = vmatpush1.xpose.msra.mxu0 0.0
    %880 = vmatprep.subr.mxu0 0.0
    %881 = vmatpush1.xpose.msra.mxu0 0.0
    %882 = vmatprep.subr.mxu0 0.0
    %883 = vmatpush1.xpose.msra.mxu0 0.0
    %884 = vmatprep.subr.mxu0 0.0
    %885 = vmatpush1.xpose.msra.mxu0 0.0
    %886 = vmatprep.subr.mxu0 0.0
    %887 = vmatpush1.xpose.msra.mxu0 0.0
    %888 = vmatprep.subr.mxu0 0.0
    %889 = vmatpush1.xpose.msra.mxu0 0.0
    %890 = vmatprep.subr.mxu0 0.0
    %891 = vmatpush1.xpose.msra.mxu0 0.0
    %892 = vmatprep.subr.mxu0 0.0
    %893 = vmatpush1.xpose.msra.mxu0 0.0
    %894 = vmatprep.subr.mxu0 0.0
    %895 = vmatpush1.xpose.msra.mxu0 0.0
    %896 = vmatprep.subr.mxu0 0.0
    %897 = vmatpush1.xpose.msra.mxu0 0.0
    %898 = vmatprep.subr.mxu0 0.0
    %899 = vmatpush1.xpose.msra.mxu0 0.0
    %900 = vmatprep.subr.mxu0 0.0
    %901 = vmatpush1.xpose.msra.mxu0 0.0
    %902 = vmatprep.subr.mxu0 0.0
    %903 = vmatpush1.xpose.msra.mxu0 0.0
    %904 = vmatprep.subr.mxu0 0.0
    %905 = vmatpush1.xpose.msra.mxu0 0.0
    %906 = vmatprep.subr.mxu0 0.0
    %907 = vmatpush1.xpose.msra.mxu0 0.0
    %908 = vmatprep.mubr.f32.mxu0 0.0
    %909 = vmatmul.mubr.f32.gmra.mrb[0].mxu0 %v839
    %v910 = vpop.f32.mrb[0].mxu0
    %v911 = vadd.f32 0.0, %v910
    %v912 = vpop.f32.mrb[0].mxu0
    %913 = vdwg.mxu0
    %v915 = vsel %vm89, %v669, 0
    %v918 = vsel %vm89, %v35, 0
    %920 = vmatprep.subr.mxu0 0.0
    %921 = vmatpush1.xpose.msra.mxu0 %v918
    %922 = vmatprep.subr.mxu0 0.0
    %923 = vmatpush1.xpose.msra.mxu0 0.0
    %924 = vmatprep.subr.mxu0 0.0
    %925 = vmatpush1.xpose.msra.mxu0 0.0
    %926 = vmatprep.subr.mxu0 0.0
    %927 = vmatpush1.xpose.msra.mxu0 0.0
    %928 = vmatprep.subr.mxu0 0.0
    %929 = vmatpush1.xpose.msra.mxu0 0.0
    %930 = vmatprep.subr.mxu0 0.0
    %931 = vmatpush1.xpose.msra.mxu0 0.0
    %932 = vmatprep.subr.mxu0 0.0
    %933 = vmatpush1.xpose.msra.mxu0 0.0
    %934 = vmatprep.subr.mxu0 0.0
    %935 = vmatpush1.xpose.msra.mxu0 0.0
    %936 = vmatprep.subr.mxu0 0.0
    %937 = vmatpush1.xpose.msra.mxu0 0.0
    %938 = vmatprep.subr.mxu0 0.0
    %939 = vmatpush1.xpose.msra.mxu0 0.0
    %940 = vmatprep.subr.mxu0 0.0
    %941 = vmatpush1.xpose.msra.mxu0 0.0
    %942 = vmatprep.subr.mxu0 0.0
    %943 = vmatpush1.xpose.msra.mxu0 0.0
    %944 = vmatprep.subr.mxu0 0.0
    %945 = vmatpush1.xpose.msra.mxu0 0.0
    %946 = vmatprep.subr.mxu0 0.0
    %947 = vmatpush1.xpose.msra.mxu0 0.0
    %948 = vmatprep.subr.mxu0 0.0
    %949 = vmatpush1.xpose.msra.mxu0 0.0
    %950 = vmatprep.subr.mxu0 0.0
    %951 = vmatpush1.xpose.msra.mxu0 0.0
    %952 = vmatprep.subr.mxu0 0.0
    %953 = vmatpush1.xpose.msra.mxu0 0.0
    %954 = vmatprep.subr.mxu0 0.0
    %955 = vmatpush1.xpose.msra.mxu0 0.0
    %956 = vmatprep.subr.mxu0 0.0
    %957 = vmatpush1.xpose.msra.mxu0 0.0
    %958 = vmatprep.subr.mxu0 0.0
    %959 = vmatpush1.xpose.msra.mxu0 0.0
    %960 = vmatprep.subr.mxu0 0.0
    %961 = vmatpush1.xpose.msra.mxu0 0.0
    %962 = vmatprep.subr.mxu0 0.0
    %963 = vmatpush1.xpose.msra.mxu0 0.0
    %964 = vmatprep.subr.mxu0 0.0
    %965 = vmatpush1.xpose.msra.mxu0 0.0
    %966 = vmatprep.subr.mxu0 0.0
    %967 = vmatpush1.xpose.msra.mxu0 0.0
    %968 = vmatprep.subr.mxu0 0.0
    %969 = vmatpush1.xpose.msra.mxu0 0.0
    %970 = vmatprep.subr.mxu0 0.0
    %971 = vmatpush1.xpose.msra.mxu0 0.0
    %972 = vmatprep.subr.mxu0 0.0
    %973 = vmatpush1.xpose.msra.mxu0 0.0
    %974 = vmatprep.subr.mxu0 0.0
    %975 = vmatpush1.xpose.msra.mxu0 0.0
    %976 = vmatprep.subr.mxu0 0.0
    %977 = vmatpush1.xpose.msra.mxu0 0.0
    %978 = vmatprep.subr.mxu0 0.0
    %979 = vmatpush1.xpose.msra.mxu0 0.0
    %980 = vmatprep.subr.mxu0 0.0
    %981 = vmatpush1.xpose.msra.mxu0 0.0
    %982 = vmatprep.subr.mxu0 0.0
    %983 = vmatpush1.xpose.msra.mxu0 0.0
    %984 = vmatprep.mubr.f32.mxu0 0.0
    %985 = vmatmul.mubr.f32.gmra.mrb[0].mxu0 %v915
    %v986 = vpop.f32.mrb[0].mxu0
    %v987 = vadd.f32 0.0, %v986
    %v988 = vpop.f32.mrb[0].mxu0
    %989 = vdwg.mxu0
    %v991 = vsel %vm89, %v670, 0
    %v994 = vsel %vm89, %v36, 0
    %996 = vmatprep.subr.mxu0 0.0
    %997 = vmatpush1.xpose.msra.mxu0 %v994
    %998 = vmatprep.subr.mxu0 0.0
    %999 = vmatpush1.xpose.msra.mxu0 0.0
    %1000 = vmatprep.subr.mxu0 0.0
    %1001 = vmatpush1.xpose.msra.mxu0 0.0
    %1002 = vmatprep.subr.mxu0 0.0
    %1003 = vmatpush1.xpose.msra.mxu0 0.0
    %1004 = vmatprep.subr.mxu0 0.0
    %1005 = vmatpush1.xpose.msra.mxu0 0.0
    %1006 = vmatprep.subr.mxu0 0.0
    %1007 = vmatpush1.xpose.msra.mxu0 0.0
    %1008 = vmatprep.subr.mxu0 0.0
    %1009 = vmatpush1.xpose.msra.mxu0 0.0
    %1010 = vmatprep.subr.mxu0 0.0
    %1011 = vmatpush1.xpose.msra.mxu0 0.0
    %1012 = vmatprep.subr.mxu0 0.0
    %1013 = vmatpush1.xpose.msra.mxu0 0.0
    %1014 = vmatprep.subr.mxu0 0.0
    %1015 = vmatpush1.xpose.msra.mxu0 0.0
    %1016 = vmatprep.subr.mxu0 0.0
    %1017 = vmatpush1.xpose.msra.mxu0 0.0
    %1018 = vmatprep.subr.mxu0 0.0
    %1019 = vmatpush1.xpose.msra.mxu0 0.0
    %1020 = vmatprep.subr.mxu0 0.0
    %1021 = vmatpush1.xpose.msra.mxu0 0.0
    %1022 = vmatprep.subr.mxu0 0.0
    %1023 = vmatpush1.xpose.msra.mxu0 0.0
    %1024 = vmatprep.subr.mxu0 0.0
    %1025 = vmatpush1.xpose.msra.mxu0 0.0
    %1026 = vmatprep.subr.mxu0 0.0
    %1027 = vmatpush1.xpose.msra.mxu0 0.0
    %1028 = vmatprep.subr.mxu0 0.0
    %1029 = vmatpush1.xpose.msra.mxu0 0.0
    %1030 = vmatprep.subr.mxu0 0.0
    %1031 = vmatpush1.xpose.msra.mxu0 0.0
    %1032 = vmatprep.subr.mxu0 0.0
    %1033 = vmatpush1.xpose.msra.mxu0 0.0
    %1034 = vmatprep.subr.mxu0 0.0
    %1035 = vmatpush1.xpose.msra.mxu0 0.0
    %1036 = vmatprep.subr.mxu0 0.0
    %1037 = vmatpush1.xpose.msra.mxu0 0.0
    %1038 = vmatprep.subr.mxu0 0.0
    %1039 = vmatpush1.xpose.msra.mxu0 0.0
    %1040 = vmatprep.subr.mxu0 0.0
    %1041 = vmatpush1.xpose.msra.mxu0 0.0
    %1042 = vmatprep.subr.mxu0 0.0
    %1043 = vmatpush1.xpose.msra.mxu0 0.0
    %1044 = vmatprep.subr.mxu0 0.0
    %1045 = vmatpush1.xpose.msra.mxu0 0.0
    %1046 = vmatprep.subr.mxu0 0.0
    %1047 = vmatpush1.xpose.msra.mxu0 0.0
    %1048 = vmatprep.subr.mxu0 0.0
    %1049 = vmatpush1.xpose.msra.mxu0 0.0
    %1050 = vmatprep.subr.mxu0 0.0
    %1051 = vmatpush1.xpose.msra.mxu0 0.0
    %1052 = vmatprep.subr.mxu0 0.0
    %1053 = vmatpush1.xpose.msra.mxu0 0.0
    %1054 = vmatprep.subr.mxu0 0.0
    %1055 = vmatpush1.xpose.msra.mxu0 0.0
    %1056 = vmatprep.subr.mxu0 0.0
    %1057 = vmatpush1.xpose.msra.mxu0 0.0
    %1058 = vmatprep.subr.mxu0 0.0
    %1059 = vmatpush1.xpose.msra.mxu0 0.0
    %1060 = vmatprep.mubr.f32.mxu0 0.0
    %1061 = vmatmul.mubr.f32.gmra.mrb[0].mxu0 %v991
    %v1062 = vpop.f32.mrb[0].mxu0
    %v1063 = vadd.f32 0.0, %v1062
    %v1064 = vpop.f32.mrb[0].mxu0
    %1065 = vdwg.mxu0
    %v1067 = vsel %vm89, %v671, 0
    %v1070 = vsel %vm89, %v38, 0
    %1072 = vmatprep.subr.mxu0 0.0
    %1073 = vmatpush1.xpose.msra.mxu0 %v1070
    %1074 = vmatprep.subr.mxu0 0.0
    %1075 = vmatpush1.xpose.msra.mxu0 0.0
    %1076 = vmatprep.subr.mxu0 0.0
    %1077 = vmatpush1.xpose.msra.mxu0 0.0
    %1078 = vmatprep.subr.mxu0 0.0
    %1079 = vmatpush1.xpose.msra.mxu0 0.0
    %1080 = vmatprep.subr.mxu0 0.0
    %1081 = vmatpush1.xpose.msra.mxu0 0.0
    %1082 = vmatprep.subr.mxu0 0.0
    %1083 = vmatpush1.xpose.msra.mxu0 0.0
    %1084 = vmatprep.subr.mxu0 0.0
    %1085 = vmatpush1.xpose.msra.mxu0 0.0
    %1086 = vmatprep.subr.mxu0 0.0
    %1087 = vmatpush1.xpose.msra.mxu0 0.0
    %1088 = vmatprep.subr.mxu0 0.0
    %1089 = vmatpush1.xpose.msra.mxu0 0.0
    %1090 = vmatprep.subr.mxu0 0.0
    %1091 = vmatpush1.xpose.msra.mxu0 0.0
    %1092 = vmatprep.subr.mxu0 0.0
    %1093 = vmatpush1.xpose.msra.mxu0 0.0
    %1094 = vmatprep.subr.mxu0 0.0
    %1095 = vmatpush1.xpose.msra.mxu0 0.0
    %1096 = vmatprep.subr.mxu0 0.0
    %1097 = vmatpush1.xpose.msra.mxu0 0.0
    %1098 = vmatprep.subr.mxu0 0.0
    %1099 = vmatpush1.xpose.msra.mxu0 0.0
    %1100 = vmatprep.subr.mxu0 0.0
    %1101 = vmatpush1.xpose.msra.mxu0 0.0
    %1102 = vmatprep.subr.mxu0 0.0
    %1103 = vmatpush1.xpose.msra.mxu0 0.0
    %1104 = vmatprep.subr.mxu0 0.0
    %1105 = vmatpush1.xpose.msra.mxu0 0.0
    %1106 = vmatprep.subr.mxu0 0.0
    %1107 = vmatpush1.xpose.msra.mxu0 0.0
    %1108 = vmatprep.subr.mxu0 0.0
    %1109 = vmatpush1.xpose.msra.mxu0 0.0
    %1110 = vmatprep.subr.mxu0 0.0
    %1111 = vmatpush1.xpose.msra.mxu0 0.0
    %1112 = vmatprep.subr.mxu0 0.0
    %1113 = vmatpush1.xpose.msra.mxu0 0.0
    %1114 = vmatprep.subr.mxu0 0.0
    %1115 = vmatpush1.xpose.msra.mxu0 0.0
    %1116 = vmatprep.subr.mxu0 0.0
    %1117 = vmatpush1.xpose.msra.mxu0 0.0
    %1118 = vmatprep.subr.mxu0 0.0
    %1119 = vmatpush1.xpose.msra.mxu0 0.0
    %1120 = vmatprep.subr.mxu0 0.0
    %1121 = vmatpush1.xpose.msra.mxu0 0.0
    %1122 = vmatprep.subr.mxu0 0.0
    %1123 = vmatpush1.xpose.msra.mxu0 0.0
    %1124 = vmatprep.subr.mxu0 0.0
    %1125 = vmatpush1.xpose.msra.mxu0 0.0
    %1126 = vmatprep.subr.mxu0 0.0
    %1127 = vmatpush1.xpose.msra.mxu0 0.0
    %1128 = vmatprep.subr.mxu0 0.0
    %1129 = vmatpush1.xpose.msra.mxu0 0.0
    %1130 = vmatprep.subr.mxu0 0.0
    %1131 = vmatpush1.xpose.msra.mxu0 0.0
    %1132 = vmatprep.subr.mxu0 0.0
    %1133 = vmatpush1.xpose.msra.mxu0 0.0
    %1134 = vmatprep.subr.mxu0 0.0
    %1135 = vmatpush1.xpose.msra.mxu0 0.0
    %1136 = vmatprep.mubr.f32.mxu0 0.0
    %1137 = vmatmul.mubr.f32.gmra.mrb[0].mxu0 %v1067
    %v1138 = vpop.f32.mrb[0].mxu0
    %v1139 = vadd.f32 0.0, %v1138
    %v1140 = vpop.f32.mrb[0].mxu0
    %1141 = vdwg.mxu0
    %v1143 = vsel %vm89, %v672, 0
    %v1146 = vsel %vm89, %v39, 0
    %1148 = vmatprep.subr.mxu0 0.0
    %1149 = vmatpush1.xpose.msra.mxu0 %v1146
    %1150 = vmatprep.subr.mxu0 0.0
    %1151 = vmatpush1.xpose.msra.mxu0 0.0
    %1152 = vmatprep.subr.mxu0 0.0
    %1153 = vmatpush1.xpose.msra.mxu0 0.0
    %1154 = vmatprep.subr.mxu0 0.0
    %1155 = vmatpush1.xpose.msra.mxu0 0.0
    %1156 = vmatprep.subr.mxu0 0.0
    %1157 = vmatpush1.xpose.msra.mxu0 0.0
    %1158 = vmatprep.subr.mxu0 0.0
    %1159 = vmatpush1.xpose.msra.mxu0 0.0
    %1160 = vmatprep.subr.mxu0 0.0
    %1161 = vmatpush1.xpose.msra.mxu0 0.0
    %1162 = vmatprep.subr.mxu0 0.0
    %1163 = vmatpush1.xpose.msra.mxu0 0.0
    %1164 = vmatprep.subr.mxu0 0.0
    %1165 = vmatpush1.xpose.msra.mxu0 0.0
    %1166 = vmatprep.subr.mxu0 0.0
    %1167 = vmatpush1.xpose.msra.mxu0 0.0
    %1168 = vmatprep.subr.mxu0 0.0
    %1169 = vmatpush1.xpose.msra.mxu0 0.0
    %1170 = vmatprep.subr.mxu0 0.0
    %1171 = vmatpush1.xpose.msra.mxu0 0.0
    %1172 = vmatprep.subr.mxu0 0.0
    %1173 = vmatpush1.xpose.msra.mxu0 0.0
    %1174 = vmatprep.subr.mxu0 0.0
    %1175 = vmatpush1.xpose.msra.mxu0 0.0
    %1176 = vmatprep.subr.mxu0 0.0
    %1177 = vmatpush1.xpose.msra.mxu0 0.0
    %1178 = vmatprep.subr.mxu0 0.0
    %1179 = vmatpush1.xpose.msra.mxu0 0.0
    %1180 = vmatprep.subr.mxu0 0.0
    %1181 = vmatpush1.xpose.msra.mxu0 0.0
    %1182 = vmatprep.subr.mxu0 0.0
    %1183 = vmatpush1.xpose.msra.mxu0 0.0
    %1184 = vmatprep.subr.mxu0 0.0
    %1185 = vmatpush1.xpose.msra.mxu0 0.0
    %1186 = vmatprep.subr.mxu0 0.0
    %1187 = vmatpush1.xpose.msra.mxu0 0.0
    %1188 = vmatprep.subr.mxu0 0.0
    %1189 = vmatpush1.xpose.msra.mxu0 0.0
    %1190 = vmatprep.subr.mxu0 0.0
    %1191 = vmatpush1.xpose.msra.mxu0 0.0
    %1192 = vmatprep.subr.mxu0 0.0
    %1193 = vmatpush1.xpose.msra.mxu0 0.0
    %1194 = vmatprep.subr.mxu0 0.0
    %1195 = vmatpush1.xpose.msra.mxu0 0.0
    %1196 = vmatprep.subr.mxu0 0.0
    %1197 = vmatpush1.xpose.msra.mxu0 0.0
    %1198 = vmatprep.subr.mxu0 0.0
    %1199 = vmatpush1.xpose.msra.mxu0 0.0
    %1200 = vmatprep.subr.mxu0 0.0
    %1201 = vmatpush1.xpose.msra.mxu0 0.0
    %1202 = vmatprep.subr.mxu0 0.0
    %1203 = vmatpush1.xpose.msra.mxu0 0.0
    %1204 = vmatprep.subr.mxu0 0.0
    %1205 = vmatpush1.xpose.msra.mxu0 0.0
    %1206 = vmatprep.subr.mxu0 0.0
    %1207 = vmatpush1.xpose.msra.mxu0 0.0
    %1208 = vmatprep.subr.mxu0 0.0
    %1209 = vmatpush1.xpose.msra.mxu0 0.0
    %1210 = vmatprep.subr.mxu0 0.0
    %1211 = vmatpush1.xpose.msra.mxu0 0.0
    %1212 = vmatprep.mubr.f32.mxu0 0.0
    %1213 = vmatmul.mubr.f32.gmra.mrb[0].mxu0 %v1143
    %v1214 = vpop.f32.mrb[0].mxu0
    %v1215 = vadd.f32 0.0, %v1214
    %v1216 = vpop.f32.mrb[0].mxu0
    %1217 = vdwg.mxu0
    %v1219 = vsel %vm89, %v673, 0
    %v1222 = vsel %vm89, %v40, 0
    %1224 = vmatprep.subr.mxu0 0.0
    %1225 = vmatpush1.xpose.msra.mxu0 %v1222
    %1226 = vmatprep.subr.mxu0 0.0
    %1227 = vmatpush1.xpose.msra.mxu0 0.0
    %1228 = vmatprep.subr.mxu0 0.0
    %1229 = vmatpush1.xpose.msra.mxu0 0.0
    %1230 = vmatprep.subr.mxu0 0.0
    %1231 = vmatpush1.xpose.msra.mxu0 0.0
    %1232 = vmatprep.subr.mxu0 0.0
    %1233 = vmatpush1.xpose.msra.mxu0 0.0
    %1234 = vmatprep.subr.mxu0 0.0
    %1235 = vmatpush1.xpose.msra.mxu0 0.0
    %1236 = vmatprep.subr.mxu0 0.0
    %1237 = vmatpush1.xpose.msra.mxu0 0.0
    %1238 = vmatprep.subr.mxu0 0.0
    %1239 = vmatpush1.xpose.msra.mxu0 0.0
    %1240 = vmatprep.subr.mxu0 0.0
    %1241 = vmatpush1.xpose.msra.mxu0 0.0
    %1242 = vmatprep.subr.mxu0 0.0
    %1243 = vmatpush1.xpose.msra.mxu0 0.0
    %1244 = vmatprep.subr.mxu0 0.0
    %1245 = vmatpush1.xpose.msra.mxu0 0.0
    %1246 = vmatprep.subr.mxu0 0.0
    %1247 = vmatpush1.xpose.msra.mxu0 0.0
    %1248 = vmatprep.subr.mxu0 0.0
    %1249 = vmatpush1.xpose.msra.mxu0 0.0
    %1250 = vmatprep.subr.mxu0 0.0
    %1251 = vmatpush1.xpose.msra.mxu0 0.0
    %1252 = vmatprep.subr.mxu0 0.0
    %1253 = vmatpush1.xpose.msra.mxu0 0.0
    %1254 = vmatprep.subr.mxu0 0.0
    %1255 = vmatpush1.xpose.msra.mxu0 0.0
    %1256 = vmatprep.subr.mxu0 0.0
    %1257 = vmatpush1.xpose.msra.mxu0 0.0
    %1258 = vmatprep.subr.mxu0 0.0
    %1259 = vmatpush1.xpose.msra.mxu0 0.0
    %1260 = vmatprep.subr.mxu0 0.0
    %1261 = vmatpush1.xpose.msra.mxu0 0.0
    %1262 = vmatprep.subr.mxu0 0.0
    %1263 = vmatpush1.xpose.msra.mxu0 0.0
    %1264 = vmatprep.subr.mxu0 0.0
    %1265 = vmatpush1.xpose.msra.mxu0 0.0
    %1266 = vmatprep.subr.mxu0 0.0
    %1267 = vmatpush1.xpose.msra.mxu0 0.0
    %1268 = vmatprep.subr.mxu0 0.0
    %1269 = vmatpush1.xpose.msra.mxu0 0.0
    %1270 = vmatprep.subr.mxu0 0.0
    %1271 = vmatpush1.xpose.msra.mxu0 0.0
    %1272 = vmatprep.subr.mxu0 0.0
    %1273 = vmatpush1.xpose.msra.mxu0 0.0
    %1274 = vmatprep.subr.mxu0 0.0
    %1275 = vmatpush1.xpose.msra.mxu0 0.0
    %1276 = vmatprep.subr.mxu0 0.0
    %1277 = vmatpush1.xpose.msra.mxu0 0.0
    %1278 = vmatprep.subr.mxu0 0.0
    %1279 = vmatpush1.xpose.msra.mxu0 0.0
    %1280 = vmatprep.subr.mxu0 0.0
    %1281 = vmatpush1.xpose.msra.mxu0 0.0
    %1282 = vmatprep.subr.mxu0 0.0
    %1283 = vmatpush1.xpose.msra.mxu0 0.0
    %1284 = vmatprep.subr.mxu0 0.0
    %1285 = vmatpush1.xpose.msra.mxu0 0.0
    %1286 = vmatprep.subr.mxu0 0.0
    %1287 = vmatpush1.xpose.msra.mxu0 0.0
    %1288 = vmatprep.mubr.f32.mxu0 0.0
    %1289 = vmatmul.mubr.f32.gmra.mrb[0].mxu0 %v1219
    %v1290 = vpop.f32.mrb[0].mxu0
    %v1291 = vadd.f32 0.0, %v1290
    %v1292 = vpop.f32.mrb[0].mxu0
    %1293 = vdwg.mxu0
    %v1295 = vsel %vm89, %v674, 0
    %v1298 = vsel %vm89, %v41, 0
    %1300 = vmatprep.subr.mxu0 0.0
    %1301 = vmatpush1.xpose.msra.mxu0 %v1298
    %1302 = vmatprep.subr.mxu0 0.0
    %1303 = vmatpush1.xpose.msra.mxu0 0.0
    %1304 = vmatprep.subr.mxu0 0.0
    %1305 = vmatpush1.xpose.msra.mxu0 0.0
    %1306 = vmatprep.subr.mxu0 0.0
    %1307 = vmatpush1.xpose.msra.mxu0 0.0
    %1308 = vmatprep.subr.mxu0 0.0
    %1309 = vmatpush1.xpose.msra.mxu0 0.0
    %1310 = vmatprep.subr.mxu0 0.0
    %1311 = vmatpush1.xpose.msra.mxu0 0.0
    %1312 = vmatprep.subr.mxu0 0.0
    %1313 = vmatpush1.xpose.msra.mxu0 0.0
    %1314 = vmatprep.subr.mxu0 0.0
    %1315 = vmatpush1.xpose.msra.mxu0 0.0
    %1316 = vmatprep.subr.mxu0 0.0
    %1317 = vmatpush1.xpose.msra.mxu0 0.0
    %1318 = vmatprep.subr.mxu0 0.0
    %1319 = vmatpush1.xpose.msra.mxu0 0.0
    %1320 = vmatprep.subr.mxu0 0.0
    %1321 = vmatpush1.xpose.msra.mxu0 0.0
    %1322 = vmatprep.subr.mxu0 0.0
    %1323 = vmatpush1.xpose.msra.mxu0 0.0
    %1324 = vmatprep.subr.mxu0 0.0
    %1325 = vmatpush1.xpose.msra.mxu0 0.0
    %1326 = vmatprep.subr.mxu0 0.0
    %1327 = vmatpush1.xpose.msra.mxu0 0.0
    %1328 = vmatprep.subr.mxu0 0.0
    %1329 = vmatpush1.xpose.msra.mxu0 0.0
    %1330 = vmatprep.subr.mxu0 0.0
    %1331 = vmatpush1.xpose.msra.mxu0 0.0
    %1332 = vmatprep.subr.mxu0 0.0
    %1333 = vmatpush1.xpose.msra.mxu0 0.0
    %1334 = vmatprep.subr.mxu0 0.0
    %1335 = vmatpush1.xpose.msra.mxu0 0.0
    %1336 = vmatprep.subr.mxu0 0.0
    %1337 = vmatpush1.xpose.msra.mxu0 0.0
    %1338 = vmatprep.subr.mxu0 0.0
    %1339 = vmatpush1.xpose.msra.mxu0 0.0
    %1340 = vmatprep.subr.mxu0 0.0
    %1341 = vmatpush1.xpose.msra.mxu0 0.0
    %1342 = vmatprep.subr.mxu0 0.0
    %1343 = vmatpush1.xpose.msra.mxu0 0.0
    %1344 = vmatprep.subr.mxu0 0.0
    %1345 = vmatpush1.xpose.msra.mxu0 0.0
    %1346 = vmatprep.subr.mxu0 0.0
    %1347 = vmatpush1.xpose.msra.mxu0 0.0
    %1348 = vmatprep.subr.mxu0 0.0
    %1349 = vmatpush1.xpose.msra.mxu0 0.0
    %1350 = vmatprep.subr.mxu0 0.0
    %1351 = vmatpush1.xpose.msra.mxu0 0.0
    %1352 = vmatprep.subr.mxu0 0.0
    %1353 = vmatpush1.xpose.msra.mxu0 0.0
    %1354 = vmatprep.subr.mxu0 0.0
    %1355 = vmatpush1.xpose.msra.mxu0 0.0
    %1356 = vmatprep.subr.mxu0 0.0
    %1357 = vmatpush1.xpose.msra.mxu0 0.0
    %1358 = vmatprep.subr.mxu0 0.0
    %1359 = vmatpush1.xpose.msra.mxu0 0.0
    %1360 = vmatprep.subr.mxu0 0.0
    %1361 = vmatpush1.xpose.msra.mxu0 0.0
    %1362 = vmatprep.subr.mxu0 0.0
    %1363 = vmatpush1.xpose.msra.mxu0 0.0
    %1364 = vmatprep.mubr.f32.mxu0 0.0
    %1365 = vmatmul.mubr.f32.gmra.mrb[0].mxu0 %v1295
    %v1366 = vpop.f32.mrb[0].mxu0
    %v1367 = vadd.f32 0.0, %v1366
    %v1368 = vpop.f32.mrb[0].mxu0
    %1369 = vdwg.mxu0
    %v1371 = vsel %vm89, %v675, 0
    %v1374 = vsel %vm89, %v42, 0
    %1376 = vmatprep.subr.mxu0 0.0
    %1377 = vmatpush1.xpose.msra.mxu0 %v1374
    %1378 = vmatprep.subr.mxu0 0.0
    %1379 = vmatpush1.xpose.msra.mxu0 0.0
    %1380 = vmatprep.subr.mxu0 0.0
    %1381 = vmatpush1.xpose.msra.mxu0 0.0
    %1382 = vmatprep.subr.mxu0 0.0
    %1383 = vmatpush1.xpose.msra.mxu0 0.0
    %1384 = vmatprep.subr.mxu0 0.0
    %1385 = vmatpush1.xpose.msra.mxu0 0.0
    %1386 = vmatprep.subr.mxu0 0.0
    %1387 = vmatpush1.xpose.msra.mxu0 0.0
    %1388 = vmatprep.subr.mxu0 0.0
    %1389 = vmatpush1.xpose.msra.mxu0 0.0
    %1390 = vmatprep.subr.mxu0 0.0
    %1391 = vmatpush1.xpose.msra.mxu0 0.0
    %1392 = vmatprep.subr.mxu0 0.0
    %1393 = vmatpush1.xpose.msra.mxu0 0.0
    %1394 = vmatprep.subr.mxu0 0.0
    %1395 = vmatpush1.xpose.msra.mxu0 0.0
    %1396 = vmatprep.subr.mxu0 0.0
    %1397 = vmatpush1.xpose.msra.mxu0 0.0
    %1398 = vmatprep.subr.mxu0 0.0
    %1399 = vmatpush1.xpose.msra.mxu0 0.0
    %1400 = vmatprep.subr.mxu0 0.0
    %1401 = vmatpush1.xpose.msra.mxu0 0.0
    %1402 = vmatprep.subr.mxu0 0.0
    %1403 = vmatpush1.xpose.msra.mxu0 0.0
    %1404 = vmatprep.subr.mxu0 0.0
    %1405 = vmatpush1.xpose.msra.mxu0 0.0
    %1406 = vmatprep.subr.mxu0 0.0
    %1407 = vmatpush1.xpose.msra.mxu0 0.0
    %1408 = vmatprep.subr.mxu0 0.0
    %1409 = vmatpush1.xpose.msra.mxu0 0.0
    %1410 = vmatprep.subr.mxu0 0.0
    %1411 = vmatpush1.xpose.msra.mxu0 0.0
    %1412 = vmatprep.subr.mxu0 0.0
    %1413 = vmatpush1.xpose.msra.mxu0 0.0
    %1414 = vmatprep.subr.mxu0 0.0
    %1415 = vmatpush1.xpose.msra.mxu0 0.0
    %1416 = vmatprep.subr.mxu0 0.0
    %1417 = vmatpush1.xpose.msra.mxu0 0.0
    %1418 = vmatprep.subr.mxu0 0.0
    %1419 = vmatpush1.xpose.msra.mxu0 0.0
    %1420 = vmatprep.subr.mxu0 0.0
    %1421 = vmatpush1.xpose.msra.mxu0 0.0
    %1422 = vmatprep.subr.mxu0 0.0
    %1423 = vmatpush1.xpose.msra.mxu0 0.0
    %1424 = vmatprep.subr.mxu0 0.0
    %1425 = vmatpush1.xpose.msra.mxu0 0.0
    %1426 = vmatprep.subr.mxu0 0.0
    %1427 = vmatpush1.xpose.msra.mxu0 0.0
    %1428 = vmatprep.subr.mxu0 0.0
    %1429 = vmatpush1.xpose.msra.mxu0 0.0
    %1430 = vmatprep.subr.mxu0 0.0
    %1431 = vmatpush1.xpose.msra.mxu0 0.0
    %1432 = vmatprep.subr.mxu0 0.0
    %1433 = vmatpush1.xpose.msra.mxu0 0.0
    %1434 = vmatprep.subr.mxu0 0.0
    %1435 = vmatpush1.xpose.msra.mxu0 0.0
    %1436 = vmatprep.subr.mxu0 0.0
    %1437 = vmatpush1.xpose.msra.mxu0 0.0
    %1438 = vmatprep.subr.mxu0 0.0
    %1439 = vmatpush1.xpose.msra.mxu0 0.0
    %1440 = vmatprep.mubr.f32.mxu0 0.0
    %1441 = vmatmul.mubr.f32.gmra.mrb[0].mxu0 %v1371
    %v1442 = vpop.f32.mrb[0].mxu0
    %v1443 = vadd.f32 0.0, %v1442
    %v1444 = vpop.f32.mrb[0].mxu0
    %1445 = vdwg.mxu0
    %v1447 = vsel %vm89, %v676, 0
    %v1450 = vsel %vm89, %v44, 0
    %1452 = vmatprep.subr.mxu0 0.0
    %1453 = vmatpush1.xpose.msra.mxu0 %v1450
    %1454 = vmatprep.subr.mxu0 0.0
    %1455 = vmatpush1.xpose.msra.mxu0 0.0
    %1456 = vmatprep.subr.mxu0 0.0
    %1457 = vmatpush1.xpose.msra.mxu0 0.0
    %1458 = vmatprep.subr.mxu0 0.0
    %1459 = vmatpush1.xpose.msra.mxu0 0.0
    %1460 = vmatprep.subr.mxu0 0.0
    %1461 = vmatpush1.xpose.msra.mxu0 0.0
    %1462 = vmatprep.subr.mxu0 0.0
    %1463 = vmatpush1.xpose.msra.mxu0 0.0
    %1464 = vmatprep.subr.mxu0 0.0
    %1465 = vmatpush1.xpose.msra.mxu0 0.0
    %1466 = vmatprep.subr.mxu0 0.0
    %1467 = vmatpush1.xpose.msra.mxu0 0.0
    %1468 = vmatprep.subr.mxu0 0.0
    %1469 = vmatpush1.xpose.msra.mxu0 0.0
    %1470 = vmatprep.subr.mxu0 0.0
    %1471 = vmatpush1.xpose.msra.mxu0 0.0
    %1472 = vmatprep.subr.mxu0 0.0
    %1473 = vmatpush1.xpose.msra.mxu0 0.0
    %1474 = vmatprep.subr.mxu0 0.0
    %1475 = vmatpush1.xpose.msra.mxu0 0.0
    %1476 = vmatprep.subr.mxu0 0.0
    %1477 = vmatpush1.xpose.msra.mxu0 0.0
    %1478 = vmatprep.subr.mxu0 0.0
    %1479 = vmatpush1.xpose.msra.mxu0 0.0
    %1480 = vmatprep.subr.mxu0 0.0
    %1481 = vmatpush1.xpose.msra.mxu0 0.0
    %1482 = vmatprep.subr.mxu0 0.0
    %1483 = vmatpush1.xpose.msra.mxu0 0.0
    %1484 = vmatprep.subr.mxu0 0.0
    %1485 = vmatpush1.xpose.msra.mxu0 0.0
    %1486 = vmatprep.subr.mxu0 0.0
    %1487 = vmatpush1.xpose.msra.mxu0 0.0
    %1488 = vmatprep.subr.mxu0 0.0
    %1489 = vmatpush1.xpose.msra.mxu0 0.0
    %1490 = vmatprep.subr.mxu0 0.0
    %1491 = vmatpush1.xpose.msra.mxu0 0.0
    %1492 = vmatprep.subr.mxu0 0.0
    %1493 = vmatpush1.xpose.msra.mxu0 0.0
    %1494 = vmatprep.subr.mxu0 0.0
    %1495 = vmatpush1.xpose.msra.mxu0 0.0
    %1496 = vmatprep.subr.mxu0 0.0
    %1497 = vmatpush1.xpose.msra.mxu0 0.0
    %1498 = vmatprep.subr.mxu0 0.0
    %1499 = vmatpush1.xpose.msra.mxu0 0.0
    %1500 = vmatprep.subr.mxu0 0.0
    %1501 = vmatpush1.xpose.msra.mxu0 0.0
    %1502 = vmatprep.subr.mxu0 0.0
    %1503 = vmatpush1.xpose.msra.mxu0 0.0
    %1504 = vmatprep.subr.mxu0 0.0
    %1505 = vmatpush1.xpose.msra.mxu0 0.0
    %1506 = vmatprep.subr.mxu0 0.0
    %1507 = vmatpush1.xpose.msra.mxu0 0.0
    %1508 = vmatprep.subr.mxu0 0.0
    %1509 = vmatpush1.xpose.msra.mxu0 0.0
    %1510 = vmatprep.subr.mxu0 0.0
    %1511 = vmatpush1.xpose.msra.mxu0 0.0
    %1512 = vmatprep.subr.mxu0 0.0
    %1513 = vmatpush1.xpose.msra.mxu0 0.0
    %1514 = vmatprep.subr.mxu0 0.0
    %1515 = vmatpush1.xpose.msra.mxu0 0.0
    %1516 = vmatprep.mubr.f32.mxu0 0.0
    %1517 = vmatmul.mubr.f32.gmra.mrb[0].mxu0 %v1447
    %v1518 = vpop.f32.mrb[0].mxu0
    %v1519 = vadd.f32 0.0, %v1518
    %v1520 = vpop.f32.mrb[0].mxu0
    %1521 = vdwg.mxu0
    %v1523 = vsel %vm89, %v677, 0
    %v1526 = vsel %vm89, %v45, 0
    %1528 = vmatprep.subr.mxu0 0.0
    %1529 = vmatpush1.xpose.msra.mxu0 %v1526
    %1530 = vmatprep.subr.mxu0 0.0
    %1531 = vmatpush1.xpose.msra.mxu0 0.0
    %1532 = vmatprep.subr.mxu0 0.0
    %1533 = vmatpush1.xpose.msra.mxu0 0.0
    %1534 = vmatprep.subr.mxu0 0.0
    %1535 = vmatpush1.xpose.msra.mxu0 0.0
    %1536 = vmatprep.subr.mxu0 0.0
    %1537 = vmatpush1.xpose.msra.mxu0 0.0
    %1538 = vmatprep.subr.mxu0 0.0
    %1539 = vmatpush1.xpose.msra.mxu0 0.0
    %1540 = vmatprep.subr.mxu0 0.0
    %1541 = vmatpush1.xpose.msra.mxu0 0.0
    %1542 = vmatprep.subr.mxu0 0.0
    %1543 = vmatpush1.xpose.msra.mxu0 0.0
    %1544 = vmatprep.subr.mxu0 0.0
    %1545 = vmatpush1.xpose.msra.mxu0 0.0
    %1546 = vmatprep.subr.mxu0 0.0
    %1547 = vmatpush1.xpose.msra.mxu0 0.0
    %1548 = vmatprep.subr.mxu0 0.0
    %1549 = vmatpush1.xpose.msra.mxu0 0.0
    %1550 = vmatprep.subr.mxu0 0.0
    %1551 = vmatpush1.xpose.msra.mxu0 0.0
    %1552 = vmatprep.subr.mxu0 0.0
    %1553 = vmatpush1.xpose.msra.mxu0 0.0
    %1554 = vmatprep.subr.mxu0 0.0
    %1555 = vmatpush1.xpose.msra.mxu0 0.0
    %1556 = vmatprep.subr.mxu0 0.0
    %1557 = vmatpush1.xpose.msra.mxu0 0.0
    %1558 = vmatprep.subr.mxu0 0.0
    %1559 = vmatpush1.xpose.msra.mxu0 0.0
    %1560 = vmatprep.subr.mxu0 0.0
    %1561 = vmatpush1.xpose.msra.mxu0 0.0
    %1562 = vmatprep.subr.mxu0 0.0
    %1563 = vmatpush1.xpose.msra.mxu0 0.0
    %1564 = vmatprep.subr.mxu0 0.0
    %1565 = vmatpush1.xpose.msra.mxu0 0.0
    %1566 = vmatprep.subr.mxu0 0.0
    %1567 = vmatpush1.xpose.msra.mxu0 0.0
    %1568 = vmatprep.subr.mxu0 0.0
    %1569 = vmatpush1.xpose.msra.mxu0 0.0
    %1570 = vmatprep.subr.mxu0 0.0
    %1571 = vmatpush1.xpose.msra.mxu0 0.0
    %1572 = vmatprep.subr.mxu0 0.0
    %1573 = vmatpush1.xpose.msra.mxu0 0.0
    %1574 = vmatprep.subr.mxu0 0.0
    %1575 = vmatpush1.xpose.msra.mxu0 0.0
    %1576 = vmatprep.subr.mxu0 0.0
    %1577 = vmatpush1.xpose.msra.mxu0 0.0
    %1578 = vmatprep.subr.mxu0 0.0
    %1579 = vmatpush1.xpose.msra.mxu0 0.0
    %1580 = vmatprep.subr.mxu0 0.0
    %1581 = vmatpush1.xpose.msra.mxu0 0.0
    %1582 = vmatprep.subr.mxu0 0.0
    %1583 = vmatpush1.xpose.msra.mxu0 0.0
    %1584 = vmatprep.subr.mxu0 0.0
    %1585 = vmatpush1.xpose.msra.mxu0 0.0
    %1586 = vmatprep.subr.mxu0 0.0
    %1587 = vmatpush1.xpose.msra.mxu0 0.0
    %1588 = vmatprep.subr.mxu0 0.0
    %1589 = vmatpush1.xpose.msra.mxu0 0.0
    %1590 = vmatprep.subr.mxu0 0.0
    %1591 = vmatpush1.xpose.msra.mxu0 0.0
    %1592 = vmatprep.mubr.f32.mxu0 0.0
    %1593 = vmatmul.mubr.f32.gmra.mrb[0].mxu0 %v1523
    %v1594 = vpop.f32.mrb[0].mxu0
    %v1595 = vadd.f32 0.0, %v1594
    %v1596 = vpop.f32.mrb[0].mxu0
    %1597 = vdwg.mxu0
    %v1599 = vsel %vm89, %v678, 0
    %v1602 = vsel %vm89, %v46, 0
    %1604 = vmatprep.subr.mxu0 0.0
    %1605 = vmatpush1.xpose.msra.mxu0 %v1602
    %1606 = vmatprep.subr.mxu0 0.0
    %1607 = vmatpush1.xpose.msra.mxu0 0.0
    %1608 = vmatprep.subr.mxu0 0.0
    %1609 = vmatpush1.xpose.msra.mxu0 0.0
    %1610 = vmatprep.subr.mxu0 0.0
    %1611 = vmatpush1.xpose.msra.mxu0 0.0
    %1612 = vmatprep.subr.mxu0 0.0
    %1613 = vmatpush1.xpose.msra.mxu0 0.0
    %1614 = vmatprep.subr.mxu0 0.0
    %1615 = vmatpush1.xpose.msra.mxu0 0.0
    %1616 = vmatprep.subr.mxu0 0.0
    %1617 = vmatpush1.xpose.msra.mxu0 0.0
    %1618 = vmatprep.subr.mxu0 0.0
    %1619 = vmatpush1.xpose.msra.mxu0 0.0
    %1620 = vmatprep.subr.mxu0 0.0
    %1621 = vmatpush1.xpose.msra.mxu0 0.0
    %1622 = vmatprep.subr.mxu0 0.0
    %1623 = vmatpush1.xpose.msra.mxu0 0.0
    %1624 = vmatprep.subr.mxu0 0.0
    %1625 = vmatpush1.xpose.msra.mxu0 0.0
    %1626 = vmatprep.subr.mxu0 0.0
    %1627 = vmatpush1.xpose.msra.mxu0 0.0
    %1628 = vmatprep.subr.mxu0 0.0
    %1629 = vmatpush1.xpose.msra.mxu0 0.0
    %1630 = vmatprep.subr.mxu0 0.0
    %1631 = vmatpush1.xpose.msra.mxu0 0.0
    %1632 = vmatprep.subr.mxu0 0.0
    %1633 = vmatpush1.xpose.msra.mxu0 0.0
    %1634 = vmatprep.subr.mxu0 0.0
    %1635 = vmatpush1.xpose.msra.mxu0 0.0
    %1636 = vmatprep.subr.mxu0 0.0
    %1637 = vmatpush1.xpose.msra.mxu0 0.0
    %1638 = vmatprep.subr.mxu0 0.0
    %1639 = vmatpush1.xpose.msra.mxu0 0.0
    %1640 = vmatprep.subr.mxu0 0.0
    %1641 = vmatpush1.xpose.msra.mxu0 0.0
    %1642 = vmatprep.subr.mxu0 0.0
    %1643 = vmatpush1.xpose.msra.mxu0 0.0
    %1644 = vmatprep.subr.mxu0 0.0
    %1645 = vmatpush1.xpose.msra.mxu0 0.0
    %1646 = vmatprep.subr.mxu0 0.0
    %1647 = vmatpush1.xpose.msra.mxu0 0.0
    %1648 = vmatprep.subr.mxu0 0.0
    %1649 = vmatpush1.xpose.msra.mxu0 0.0
    %1650 = vmatprep.subr.mxu0 0.0
    %1651 = vmatpush1.xpose.msra.mxu0 0.0
    %1652 = vmatprep.subr.mxu0 0.0
    %1653 = vmatpush1.xpose.msra.mxu0 0.0
    %1654 = vmatprep.subr.mxu0 0.0
    %1655 = vmatpush1.xpose.msra.mxu0 0.0
    %1656 = vmatprep.subr.mxu0 0.0
    %1657 = vmatpush1.xpose.msra.mxu0 0.0
    %1658 = vmatprep.subr.mxu0 0.0
    %1659 = vmatpush1.xpose.msra.mxu0 0.0
    %1660 = vmatprep.subr.mxu0 0.0
    %1661 = vmatpush1.xpose.msra.mxu0 0.0
    %1662 = vmatprep.subr.mxu0 0.0
    %1663 = vmatpush1.xpose.msra.mxu0 0.0
    %1664 = vmatprep.subr.mxu0 0.0
    %1665 = vmatpush1.xpose.msra.mxu0 0.0
    %1666 = vmatprep.subr.mxu0 0.0
    %1667 = vmatpush1.xpose.msra.mxu0 0.0
    %1668 = vmatprep.mubr.f32.mxu0 0.0
    %1669 = vmatmul.mubr.f32.gmra.mrb[0].mxu0 %v1599
    %v1670 = vpop.f32.mrb[0].mxu0
    %v1671 = vadd.f32 0.0, %v1670
    %v1672 = vpop.f32.mrb[0].mxu0
    %1673 = vdwg.mxu0
    %v1675 = vsel %vm89, %v679, 0
    %v1678 = vsel %vm89, %v47, 0
    %1680 = vmatprep.subr.mxu0 0.0
    %1681 = vmatpush1.xpose.msra.mxu0 %v1678
    %1682 = vmatprep.subr.mxu0 0.0
    %1683 = vmatpush1.xpose.msra.mxu0 0.0
    %1684 = vmatprep.subr.mxu0 0.0
    %1685 = vmatpush1.xpose.msra.mxu0 0.0
    %1686 = vmatprep.subr.mxu0 0.0
    %1687 = vmatpush1.xpose.msra.mxu0 0.0
    %1688 = vmatprep.subr.mxu0 0.0
    %1689 = vmatpush1.xpose.msra.mxu0 0.0
    %1690 = vmatprep.subr.mxu0 0.0
    %1691 = vmatpush1.xpose.msra.mxu0 0.0
    %1692 = vmatprep.subr.mxu0 0.0
    %1693 = vmatpush1.xpose.msra.mxu0 0.0
    %1694 = vmatprep.subr.mxu0 0.0
    %1695 = vmatpush1.xpose.msra.mxu0 0.0
    %1696 = vmatprep.subr.mxu0 0.0
    %1697 = vmatpush1.xpose.msra.mxu0 0.0
    %1698 = vmatprep.subr.mxu0 0.0
    %1699 = vmatpush1.xpose.msra.mxu0 0.0
    %1700 = vmatprep.subr.mxu0 0.0
    %1701 = vmatpush1.xpose.msra.mxu0 0.0
    %1702 = vmatprep.subr.mxu0 0.0
    %1703 = vmatpush1.xpose.msra.mxu0 0.0
    %1704 = vmatprep.subr.mxu0 0.0
    %1705 = vmatpush1.xpose.msra.mxu0 0.0
    %1706 = vmatprep.subr.mxu0 0.0
    %1707 = vmatpush1.xpose.msra.mxu0 0.0
    %1708 = vmatprep.subr.mxu0 0.0
    %1709 = vmatpush1.xpose.msra.mxu0 0.0
    %1710 = vmatprep.subr.mxu0 0.0
    %1711 = vmatpush1.xpose.msra.mxu0 0.0
    %1712 = vmatprep.subr.mxu0 0.0
    %1713 = vmatpush1.xpose.msra.mxu0 0.0
    %1714 = vmatprep.subr.mxu0 0.0
    %1715 = vmatpush1.xpose.msra.mxu0 0.0
    %1716 = vmatprep.subr.mxu0 0.0
    %1717 = vmatpush1.xpose.msra.mxu0 0.0
    %1718 = vmatprep.subr.mxu0 0.0
    %1719 = vmatpush1.xpose.msra.mxu0 0.0
    %1720 = vmatprep.subr.mxu0 0.0
    %1721 = vmatpush1.xpose.msra.mxu0 0.0
    %1722 = vmatprep.subr.mxu0 0.0
    %1723 = vmatpush1.xpose.msra.mxu0 0.0
    %1724 = vmatprep.subr.mxu0 0.0
    %1725 = vmatpush1.xpose.msra.mxu0 0.0
    %1726 = vmatprep.subr.mxu0 0.0
    %1727 = vmatpush1.xpose.msra.mxu0 0.0
    %1728 = vmatprep.subr.mxu0 0.0
    %1729 = vmatpush1.xpose.msra.mxu0 0.0
    %1730 = vmatprep.subr.mxu0 0.0
    %1731 = vmatpush1.xpose.msra.mxu0 0.0
    %1732 = vmatprep.subr.mxu0 0.0
    %1733 = vmatpush1.xpose.msra.mxu0 0.0
    %1734 = vmatprep.subr.mxu0 0.0
    %1735 = vmatpush1.xpose.msra.mxu0 0.0
    %1736 = vmatprep.subr.mxu0 0.0
    %1737 = vmatpush1.xpose.msra.mxu0 0.0
    %1738 = vmatprep.subr.mxu0 0.0
    %1739 = vmatpush1.xpose.msra.mxu0 0.0
    %1740 = vmatprep.subr.mxu0 0.0
    %1741 = vmatpush1.xpose.msra.mxu0 0.0
    %1742 = vmatprep.subr.mxu0 0.0
    %1743 = vmatpush1.xpose.msra.mxu0 0.0
    %1744 = vmatprep.mubr.f32.mxu0 0.0
    %1745 = vmatmul.mubr.f32.gmra.mrb[0].mxu0 %v1675
    %v1746 = vpop.f32.mrb[0].mxu0
    %v1747 = vadd.f32 0.0, %v1746
    %v1748 = vpop.f32.mrb[0].mxu0
    %1749 = vdwg.mxu0
    %v1751 = vsel %vm89, %v680, 0
    %v1754 = vsel %vm89, %v48, 0
    %1756 = vmatprep.subr.mxu0 0.0
    %1757 = vmatpush1.xpose.msra.mxu0 %v1754
    %1758 = vmatprep.subr.mxu0 0.0
    %1759 = vmatpush1.xpose.msra.mxu0 0.0
    %1760 = vmatprep.subr.mxu0 0.0
    %1761 = vmatpush1.xpose.msra.mxu0 0.0
    %1762 = vmatprep.subr.mxu0 0.0
    %1763 = vmatpush1.xpose.msra.mxu0 0.0
    %1764 = vmatprep.subr.mxu0 0.0
    %1765 = vmatpush1.xpose.msra.mxu0 0.0
    %1766 = vmatprep.subr.mxu0 0.0
    %1767 = vmatpush1.xpose.msra.mxu0 0.0
    %1768 = vmatprep.subr.mxu0 0.0
    %1769 = vmatpush1.xpose.msra.mxu0 0.0
    %1770 = vmatprep.subr.mxu0 0.0
    %1771 = vmatpush1.xpose.msra.mxu0 0.0
    %1772 = vmatprep.subr.mxu0 0.0
    %1773 = vmatpush1.xpose.msra.mxu0 0.0
    %1774 = vmatprep.subr.mxu0 0.0
    %1775 = vmatpush1.xpose.msra.mxu0 0.0
    %1776 = vmatprep.subr.mxu0 0.0
    %1777 = vmatpush1.xpose.msra.mxu0 0.0
    %1778 = vmatprep.subr.mxu0 0.0
    %1779 = vmatpush1.xpose.msra.mxu0 0.0
    %1780 = vmatprep.subr.mxu0 0.0
    %1781 = vmatpush1.xpose.msra.mxu0 0.0
    %1782 = vmatprep.subr.mxu0 0.0
    %1783 = vmatpush1.xpose.msra.mxu0 0.0
    %1784 = vmatprep.subr.mxu0 0.0
    %1785 = vmatpush1.xpose.msra.mxu0 0.0
    %1786 = vmatprep.subr.mxu0 0.0
    %1787 = vmatpush1.xpose.msra.mxu0 0.0
    %1788 = vmatprep.subr.mxu0 0.0
    %1789 = vmatpush1.xpose.msra.mxu0 0.0
    %1790 = vmatprep.subr.mxu0 0.0
    %1791 = vmatpush1.xpose.msra.mxu0 0.0
    %1792 = vmatprep.subr.mxu0 0.0
    %1793 = vmatpush1.xpose.msra.mxu0 0.0
    %1794 = vmatprep.subr.mxu0 0.0
    %1795 = vmatpush1.xpose.msra.mxu0 0.0
    %1796 = vmatprep.subr.mxu0 0.0
    %1797 = vmatpush1.xpose.msra.mxu0 0.0
    %1798 = vmatprep.subr.mxu0 0.0
    %1799 = vmatpush1.xpose.msra.mxu0 0.0
    %1800 = vmatprep.subr.mxu0 0.0
    %1801 = vmatpush1.xpose.msra.mxu0 0.0
    %1802 = vmatprep.subr.mxu0 0.0
    %1803 = vmatpush1.xpose.msra.mxu0 0.0
    %1804 = vmatprep.subr.mxu0 0.0
    %1805 = vmatpush1.xpose.msra.mxu0 0.0
    %1806 = vmatprep.subr.mxu0 0.0
    %1807 = vmatpush1.xpose.msra.mxu0 0.0
    %1808 = vmatprep.subr.mxu0 0.0
    %1809 = vmatpush1.xpose.msra.mxu0 0.0
    %1810 = vmatprep.subr.mxu0 0.0
    %1811 = vmatpush1.xpose.msra.mxu0 0.0
    %1812 = vmatprep.subr.mxu0 0.0
    %1813 = vmatpush1.xpose.msra.mxu0 0.0
    %1814 = vmatprep.subr.mxu0 0.0
    %1815 = vmatpush1.xpose.msra.mxu0 0.0
    %1816 = vmatprep.subr.mxu0 0.0
    %1817 = vmatpush1.xpose.msra.mxu0 0.0
    %1818 = vmatprep.subr.mxu0 0.0
    %1819 = vmatpush1.xpose.msra.mxu0 0.0
    %1820 = vmatprep.mubr.f32.mxu0 0.0
    %1821 = vmatmul.mubr.f32.gmra.mrb[0].mxu0 %v1751
    %v1822 = vpop.f32.mrb[0].mxu0
    %v1823 = vadd.f32 0.0, %v1822
    %v1824 = vpop.f32.mrb[0].mxu0
    %1825 = vdwg.mxu0
    %v1827 = vsel %vm89, %v681, 0
    %v1830 = vsel %vm89, %v50, 0
    %1832 = vmatprep.subr.mxu0 0.0
    %1833 = vmatpush1.xpose.msra.mxu0 %v1830
    %1834 = vmatprep.subr.mxu0 0.0
    %1835 = vmatpush1.xpose.msra.mxu0 0.0
    %1836 = vmatprep.subr.mxu0 0.0
    %1837 = vmatpush1.xpose.msra.mxu0 0.0
    %1838 = vmatprep.subr.mxu0 0.0
    %1839 = vmatpush1.xpose.msra.mxu0 0.0
    %1840 = vmatprep.subr.mxu0 0.0
    %1841 = vmatpush1.xpose.msra.mxu0 0.0
    %1842 = vmatprep.subr.mxu0 0.0
    %1843 = vmatpush1.xpose.msra.mxu0 0.0
    %1844 = vmatprep.subr.mxu0 0.0
    %1845 = vmatpush1.xpose.msra.mxu0 0.0
    %1846 = vmatprep.subr.mxu0 0.0
    %1847 = vmatpush1.xpose.msra.mxu0 0.0
    %1848 = vmatprep.subr.mxu0 0.0
    %1849 = vmatpush1.xpose.msra.mxu0 0.0
    %1850 = vmatprep.subr.mxu0 0.0
    %1851 = vmatpush1.xpose.msra.mxu0 0.0
    %1852 = vmatprep.subr.mxu0 0.0
    %1853 = vmatpush1.xpose.msra.mxu0 0.0
    %1854 = vmatprep.subr.mxu0 0.0
    %1855 = vmatpush1.xpose.msra.mxu0 0.0
    %1856 = vmatprep.subr.mxu0 0.0
    %1857 = vmatpush1.xpose.msra.mxu0 0.0
    %1858 = vmatprep.subr.mxu0 0.0
    %1859 = vmatpush1.xpose.msra.mxu0 0.0
    %1860 = vmatprep.subr.mxu0 0.0
    %1861 = vmatpush1.xpose.msra.mxu0 0.0
    %1862 = vmatprep.subr.mxu0 0.0
    %1863 = vmatpush1.xpose.msra.mxu0 0.0
    %1864 = vmatprep.subr.mxu0 0.0
    %1865 = vmatpush1.xpose.msra.mxu0 0.0
    %1866 = vmatprep.subr.mxu0 0.0
    %1867 = vmatpush1.xpose.msra.mxu0 0.0
    %1868 = vmatprep.subr.mxu0 0.0
    %1869 = vmatpush1.xpose.msra.mxu0 0.0
    %1870 = vmatprep.subr.mxu0 0.0
    %1871 = vmatpush1.xpose.msra.mxu0 0.0
    %1872 = vmatprep.subr.mxu0 0.0
    %1873 = vmatpush1.xpose.msra.mxu0 0.0
    %1874 = vmatprep.subr.mxu0 0.0
    %1875 = vmatpush1.xpose.msra.mxu0 0.0
    %1876 = vmatprep.subr.mxu0 0.0
    %1877 = vmatpush1.xpose.msra.mxu0 0.0
    %1878 = vmatprep.subr.mxu0 0.0
    %1879 = vmatpush1.xpose.msra.mxu0 0.0
    %1880 = vmatprep.subr.mxu0 0.0
    %1881 = vmatpush1.xpose.msra.mxu0 0.0
    %1882 = vmatprep.subr.mxu0 0.0
    %1883 = vmatpush1.xpose.msra.mxu0 0.0
    %1884 = vmatprep.subr.mxu0 0.0
    %1885 = vmatpush1.xpose.msra.mxu0 0.0
    %1886 = vmatprep.subr.mxu0 0.0
    %1887 = vmatpush1.xpose.msra.mxu0 0.0
    %1888 = vmatprep.subr.mxu0 0.0
    %1889 = vmatpush1.xpose.msra.mxu0 0.0
    %1890 = vmatprep.subr.mxu0 0.0
    %1891 = vmatpush1.xpose.msra.mxu0 0.0
    %1892 = vmatprep.subr.mxu0 0.0
    %1893 = vmatpush1.xpose.msra.mxu0 0.0
    %1894 = vmatprep.subr.mxu0 0.0
    %1895 = vmatpush1.xpose.msra.mxu0 0.0
    %1896 = vmatprep.mubr.f32.mxu0 0.0
    %1897 = vmatmul.mubr.f32.gmra.mrb[0].mxu0 %v1827
    %v1898 = vpop.f32.mrb[0].mxu0
    %v1899 = vadd.f32 0.0, %v1898
    %v1900 = vpop.f32.mrb[0].mxu0
    %1901 = vdwg.mxu0
    %v1903 = vsel %vm89, %v682, 0
    %v1906 = vsel %vm89, %v51, 0
    %1908 = vmatprep.subr.mxu0 0.0
    %1909 = vmatpush1.xpose.msra.mxu0 %v1906
    %1910 = vmatprep.subr.mxu0 0.0
    %1911 = vmatpush1.xpose.msra.mxu0 0.0
    %1912 = vmatprep.subr.mxu0 0.0
    %1913 = vmatpush1.xpose.msra.mxu0 0.0
    %1914 = vmatprep.subr.mxu0 0.0
    %1915 = vmatpush1.xpose.msra.mxu0 0.0
    %1916 = vmatprep.subr.mxu0 0.0
    %1917 = vmatpush1.xpose.msra.mxu0 0.0
    %1918 = vmatprep.subr.mxu0 0.0
    %1919 = vmatpush1.xpose.msra.mxu0 0.0
    %1920 = vmatprep.subr.mxu0 0.0
    %1921 = vmatpush1.xpose.msra.mxu0 0.0
    %1922 = vmatprep.subr.mxu0 0.0
    %1923 = vmatpush1.xpose.msra.mxu0 0.0
    %1924 = vmatprep.subr.mxu0 0.0
    %1925 = vmatpush1.xpose.msra.mxu0 0.0
    %1926 = vmatprep.subr.mxu0 0.0
    %1927 = vmatpush1.xpose.msra.mxu0 0.0
    %1928 = vmatprep.subr.mxu0 0.0
    %1929 = vmatpush1.xpose.msra.mxu0 0.0
    %1930 = vmatprep.subr.mxu0 0.0
    %1931 = vmatpush1.xpose.msra.mxu0 0.0
    %1932 = vmatprep.subr.mxu0 0.0
    %1933 = vmatpush1.xpose.msra.mxu0 0.0
    %1934 = vmatprep.subr.mxu0 0.0
    %1935 = vmatpush1.xpose.msra.mxu0 0.0
    %1936 = vmatprep.subr.mxu0 0.0
    %1937 = vmatpush1.xpose.msra.mxu0 0.0
    %1938 = vmatprep.subr.mxu0 0.0
    %1939 = vmatpush1.xpose.msra.mxu0 0.0
    %1940 = vmatprep.subr.mxu0 0.0
    %1941 = vmatpush1.xpose.msra.mxu0 0.0
    %1942 = vmatprep.subr.mxu0 0.0
    %1943 = vmatpush1.xpose.msra.mxu0 0.0
    %1944 = vmatprep.subr.mxu0 0.0
    %1945 = vmatpush1.xpose.msra.mxu0 0.0
    %1946 = vmatprep.subr.mxu0 0.0
    %1947 = vmatpush1.xpose.msra.mxu0 0.0
    %1948 = vmatprep.subr.mxu0 0.0
    %1949 = vmatpush1.xpose.msra.mxu0 0.0
    %1950 = vmatprep.subr.mxu0 0.0
    %1951 = vmatpush1.xpose.msra.mxu0 0.0
    %1952 = vmatprep.subr.mxu0 0.0
    %1953 = vmatpush1.xpose.msra.mxu0 0.0
    %1954 = vmatprep.subr.mxu0 0.0
    %1955 = vmatpush1.xpose.msra.mxu0 0.0
    %1956 = vmatprep.subr.mxu0 0.0
    %1957 = vmatpush1.xpose.msra.mxu0 0.0
    %1958 = vmatprep.subr.mxu0 0.0
    %1959 = vmatpush1.xpose.msra.mxu0 0.0
    %1960 = vmatprep.subr.mxu0 0.0
    %1961 = vmatpush1.xpose.msra.mxu0 0.0
    %1962 = vmatprep.subr.mxu0 0.0
    %1963 = vmatpush1.xpose.msra.mxu0 0.0
    %1964 = vmatprep.subr.mxu0 0.0
    %1965 = vmatpush1.xpose.msra.mxu0 0.0
    %1966 = vmatprep.subr.mxu0 0.0
    %1967 = vmatpush1.xpose.msra.mxu0 0.0
    %1968 = vmatprep.subr.mxu0 0.0
    %1969 = vmatpush1.xpose.msra.mxu0 0.0
    %1970 = vmatprep.subr.mxu0 0.0
    %1971 = vmatpush1.xpose.msra.mxu0 0.0
    %1972 = vmatprep.mubr.f32.mxu0 0.0
    %1973 = vmatmul.mubr.f32.gmra.mrb[0].mxu0 %v1903
    %v1974 = vpop.f32.mrb[0].mxu0
    %v1975 = vadd.f32 0.0, %v1974
    %v1976 = vpop.f32.mrb[0].mxu0
    %1977 = vdwg.mxu0
    %v1979 = vsel %vm89, %v683, 0
    %v1982 = vsel %vm89, %v52, 0
    %1984 = vmatprep.subr.mxu0 0.0
    %1985 = vmatpush1.xpose.msra.mxu0 %v1982
    %1986 = vmatprep.subr.mxu0 0.0
    %1987 = vmatpush1.xpose.msra.mxu0 0.0
    %1988 = vmatprep.subr.mxu0 0.0
    %1989 = vmatpush1.xpose.msra.mxu0 0.0
    %1990 = vmatprep.subr.mxu0 0.0
    %1991 = vmatpush1.xpose.msra.mxu0 0.0
    %1992 = vmatprep.subr.mxu0 0.0
    %1993 = vmatpush1.xpose.msra.mxu0 0.0
    %1994 = vmatprep.subr.mxu0 0.0
    %1995 = vmatpush1.xpose.msra.mxu0 0.0
    %1996 = vmatprep.subr.mxu0 0.0
    %1997 = vmatpush1.xpose.msra.mxu0 0.0
    %1998 = vmatprep.subr.mxu0 0.0
    %1999 = vmatpush1.xpose.msra.mxu0 0.0
    %2000 = vmatprep.subr.mxu0 0.0
    %2001 = vmatpush1.xpose.msra.mxu0 0.0
    %2002 = vmatprep.subr.mxu0 0.0
    %2003 = vmatpush1.xpose.msra.mxu0 0.0
    %2004 = vmatprep.subr.mxu0 0.0
    %2005 = vmatpush1.xpose.msra.mxu0 0.0
    %2006 = vmatprep.subr.mxu0 0.0
    %2007 = vmatpush1.xpose.msra.mxu0 0.0
    %2008 = vmatprep.subr.mxu0 0.0
    %2009 = vmatpush1.xpose.msra.mxu0 0.0
    %2010 = vmatprep.subr.mxu0 0.0
    %2011 = vmatpush1.xpose.msra.mxu0 0.0
    %2012 = vmatprep.subr.mxu0 0.0
    %2013 = vmatpush1.xpose.msra.mxu0 0.0
    %2014 = vmatprep.subr.mxu0 0.0
    %2015 = vmatpush1.xpose.msra.mxu0 0.0
    %2016 = vmatprep.subr.mxu0 0.0
    %2017 = vmatpush1.xpose.msra.mxu0 0.0
    %2018 = vmatprep.subr.mxu0 0.0
    %2019 = vmatpush1.xpose.msra.mxu0 0.0
    %2020 = vmatprep.subr.mxu0 0.0
    %2021 = vmatpush1.xpose.msra.mxu0 0.0
    %2022 = vmatprep.subr.mxu0 0.0
    %2023 = vmatpush1.xpose.msra.mxu0 0.0
    %2024 = vmatprep.subr.mxu0 0.0
    %2025 = vmatpush1.xpose.msra.mxu0 0.0
    %2026 = vmatprep.subr.mxu0 0.0
    %2027 = vmatpush1.xpose.msra.mxu0 0.0
    %2028 = vmatprep.subr.mxu0 0.0
    %2029 = vmatpush1.xpose.msra.mxu0 0.0
    %2030 = vmatprep.subr.mxu0 0.0
    %2031 = vmatpush1.xpose.msra.mxu0 0.0
    %2032 = vmatprep.subr.mxu0 0.0
    %2033 = vmatpush1.xpose.msra.mxu0 0.0
    %2034 = vmatprep.subr.mxu0 0.0
    %2035 = vmatpush1.xpose.msra.mxu0 0.0
    %2036 = vmatprep.subr.mxu0 0.0
    %2037 = vmatpush1.xpose.msra.mxu0 0.0
    %2038 = vmatprep.subr.mxu0 0.0
    %2039 = vmatpush1.xpose.msra.mxu0 0.0
    %2040 = vmatprep.subr.mxu0 0.0
    %2041 = vmatpush1.xpose.msra.mxu0 0.0
    %2042 = vmatprep.subr.mxu0 0.0
    %2043 = vmatpush1.xpose.msra.mxu0 0.0
    %2044 = vmatprep.subr.mxu0 0.0
    %2045 = vmatpush1.xpose.msra.mxu0 0.0
    %2046 = vmatprep.subr.mxu0 0.0
    %2047 = vmatpush1.xpose.msra.mxu0 0.0
    %2048 = vmatprep.mubr.f32.mxu0 0.0
    %2049 = vmatmul.mubr.f32.gmra.mrb[0].mxu0 %v1979
    %v2050 = vpop.f32.mrb[0].mxu0
    %v2051 = vadd.f32 0.0, %v2050
    %v2052 = vpop.f32.mrb[0].mxu0
    %2053 = vdwg.mxu0
    %v2055 = vsel %vm89, %v684, 0
    %v2058 = vsel %vm89, %v53, 0
    %2060 = vmatprep.subr.mxu0 0.0
    %2061 = vmatpush1.xpose.msra.mxu0 %v2058
    %2062 = vmatprep.subr.mxu0 0.0
    %2063 = vmatpush1.xpose.msra.mxu0 0.0
    %2064 = vmatprep.subr.mxu0 0.0
    %2065 = vmatpush1.xpose.msra.mxu0 0.0
    %2066 = vmatprep.subr.mxu0 0.0
    %2067 = vmatpush1.xpose.msra.mxu0 0.0
    %2068 = vmatprep.subr.mxu0 0.0
    %2069 = vmatpush1.xpose.msra.mxu0 0.0
    %2070 = vmatprep.subr.mxu0 0.0
    %2071 = vmatpush1.xpose.msra.mxu0 0.0
    %2072 = vmatprep.subr.mxu0 0.0
    %2073 = vmatpush1.xpose.msra.mxu0 0.0
    %2074 = vmatprep.subr.mxu0 0.0
    %2075 = vmatpush1.xpose.msra.mxu0 0.0
    %2076 = vmatprep.subr.mxu0 0.0
    %2077 = vmatpush1.xpose.msra.mxu0 0.0
    %2078 = vmatprep.subr.mxu0 0.0
    %2079 = vmatpush1.xpose.msra.mxu0 0.0
    %2080 = vmatprep.subr.mxu0 0.0
    %2081 = vmatpush1.xpose.msra.mxu0 0.0
    %2082 = vmatprep.subr.mxu0 0.0
    %2083 = vmatpush1.xpose.msra.mxu0 0.0
    %2084 = vmatprep.subr.mxu0 0.0
    %2085 = vmatpush1.xpose.msra.mxu0 0.0
    %2086 = vmatprep.subr.mxu0 0.0
    %2087 = vmatpush1.xpose.msra.mxu0 0.0
    %2088 = vmatprep.subr.mxu0 0.0
    %2089 = vmatpush1.xpose.msra.mxu0 0.0
    %2090 = vmatprep.subr.mxu0 0.0
    %2091 = vmatpush1.xpose.msra.mxu0 0.0
    %2092 = vmatprep.subr.mxu0 0.0
    %2093 = vmatpush1.xpose.msra.mxu0 0.0
    %2094 = vmatprep.subr.mxu0 0.0
    %2095 = vmatpush1.xpose.msra.mxu0 0.0
    %2096 = vmatprep.subr.mxu0 0.0
    %2097 = vmatpush1.xpose.msra.mxu0 0.0
    %2098 = vmatprep.subr.mxu0 0.0
    %2099 = vmatpush1.xpose.msra.mxu0 0.0
    %2100 = vmatprep.subr.mxu0 0.0
    %2101 = vmatpush1.xpose.msra.mxu0 0.0
    %2102 = vmatprep.subr.mxu0 0.0
    %2103 = vmatpush1.xpose.msra.mxu0 0.0
    %2104 = vmatprep.subr.mxu0 0.0
    %2105 = vmatpush1.xpose.msra.mxu0 0.0
    %2106 = vmatprep.subr.mxu0 0.0
    %2107 = vmatpush1.xpose.msra.mxu0 0.0
    %2108 = vmatprep.subr.mxu0 0.0
    %2109 = vmatpush1.xpose.msra.mxu0 0.0
    %2110 = vmatprep.subr.mxu0 0.0
    %2111 = vmatpush1.xpose.msra.mxu0 0.0
    %2112 = vmatprep.subr.mxu0 0.0
    %2113 = vmatpush1.xpose.msra.mxu0 0.0
    %2114 = vmatprep.subr.mxu0 0.0
    %2115 = vmatpush1.xpose.msra.mxu0 0.0
    %2116 = vmatprep.subr.mxu0 0.0
    %2117 = vmatpush1.xpose.msra.mxu0 0.0
    %2118 = vmatprep.subr.mxu0 0.0
    %2119 = vmatpush1.xpose.msra.mxu0 0.0
    %2120 = vmatprep.subr.mxu0 0.0
    %2121 = vmatpush1.xpose.msra.mxu0 0.0
    %2122 = vmatprep.subr.mxu0 0.0
    %2123 = vmatpush1.xpose.msra.mxu0 0.0
    %2124 = vmatprep.mubr.f32.mxu0 0.0
    %2125 = vmatmul.mubr.f32.gmra.mrb[0].mxu0 %v2055
    %v2126 = vpop.f32.mrb[0].mxu0
    %v2127 = vadd.f32 0.0, %v2126
    %v2128 = vpop.f32.mrb[0].mxu0
    %2129 = vdwg.mxu0
    %v2131 = vsel %vm89, %v685, 0
    %v2134 = vsel %vm89, %v54, 0
    %2136 = vmatprep.subr.mxu0 0.0
    %2137 = vmatpush1.xpose.msra.mxu0 %v2134
    %2138 = vmatprep.subr.mxu0 0.0
    %2139 = vmatpush1.xpose.msra.mxu0 0.0
    %2140 = vmatprep.subr.mxu0 0.0
    %2141 = vmatpush1.xpose.msra.mxu0 0.0
    %2142 = vmatprep.subr.mxu0 0.0
    %2143 = vmatpush1.xpose.msra.mxu0 0.0
    %2144 = vmatprep.subr.mxu0 0.0
    %2145 = vmatpush1.xpose.msra.mxu0 0.0
    %2146 = vmatprep.subr.mxu0 0.0
    %2147 = vmatpush1.xpose.msra.mxu0 0.0
    %2148 = vmatprep.subr.mxu0 0.0
    %2149 = vmatpush1.xpose.msra.mxu0 0.0
    %2150 = vmatprep.subr.mxu0 0.0
    %2151 = vmatpush1.xpose.msra.mxu0 0.0
    %2152 = vmatprep.subr.mxu0 0.0
    %2153 = vmatpush1.xpose.msra.mxu0 0.0
    %2154 = vmatprep.subr.mxu0 0.0
    %2155 = vmatpush1.xpose.msra.mxu0 0.0
    %2156 = vmatprep.subr.mxu0 0.0
    %2157 = vmatpush1.xpose.msra.mxu0 0.0
    %2158 = vmatprep.subr.mxu0 0.0
    %2159 = vmatpush1.xpose.msra.mxu0 0.0
    %2160 = vmatprep.subr.mxu0 0.0
    %2161 = vmatpush1.xpose.msra.mxu0 0.0
    %2162 = vmatprep.subr.mxu0 0.0
    %2163 = vmatpush1.xpose.msra.mxu0 0.0
    %2164 = vmatprep.subr.mxu0 0.0
    %2165 = vmatpush1.xpose.msra.mxu0 0.0
    %2166 = vmatprep.subr.mxu0 0.0
    %2167 = vmatpush1.xpose.msra.mxu0 0.0
    %2168 = vmatprep.subr.mxu0 0.0
    %2169 = vmatpush1.xpose.msra.mxu0 0.0
    %2170 = vmatprep.subr.mxu0 0.0
    %2171 = vmatpush1.xpose.msra.mxu0 0.0
    %2172 = vmatprep.subr.mxu0 0.0
    %2173 = vmatpush1.xpose.msra.mxu0 0.0
    %2174 = vmatprep.subr.mxu0 0.0
    %2175 = vmatpush1.xpose.msra.mxu0 0.0
    %2176 = vmatprep.subr.mxu0 0.0
    %2177 = vmatpush1.xpose.msra.mxu0 0.0
    %2178 = vmatprep.subr.mxu0 0.0
    %2179 = vmatpush1.xpose.msra.mxu0 0.0
    %2180 = vmatprep.subr.mxu0 0.0
    %2181 = vmatpush1.xpose.msra.mxu0 0.0
    %2182 = vmatprep.subr.mxu0 0.0
    %2183 = vmatpush1.xpose.msra.mxu0 0.0
    %2184 = vmatprep.subr.mxu0 0.0
    %2185 = vmatpush1.xpose.msra.mxu0 0.0
    %2186 = vmatprep.subr.mxu0 0.0
    %2187 = vmatpush1.xpose.msra.mxu0 0.0
    %2188 = vmatprep.subr.mxu0 0.0
    %2189 = vmatpush1.xpose.msra.mxu0 0.0
    %2190 = vmatprep.subr.mxu0 0.0
    %2191 = vmatpush1.xpose.msra.mxu0 0.0
    %2192 = vmatprep.subr.mxu0 0.0
    %2193 = vmatpush1.xpose.msra.mxu0 0.0
    %2194 = vmatprep.subr.mxu0 0.0
    %2195 = vmatpush1.xpose.msra.mxu0 0.0
    %2196 = vmatprep.subr.mxu0 0.0
    %2197 = vmatpush1.xpose.msra.mxu0 0.0
    %2198 = vmatprep.subr.mxu0 0.0
    %2199 = vmatpush1.xpose.msra.mxu0 0.0
    %2200 = vmatprep.mubr.f32.mxu0 0.0
    %2201 = vmatmul.mubr.f32.gmra.mrb[0].mxu0 %v2131
    %v2202 = vpop.f32.mrb[0].mxu0
    %v2203 = vadd.f32 0.0, %v2202
    %v2204 = vpop.f32.mrb[0].mxu0
    %2205 = vdwg.mxu0
    %v2207 = vsel %vm89, %v759, 0
    %2209 = vmatprep.subr.mxu0 0.0
    %2210 = vmatpush1.msra.mxu0 %v835
    %2211 = vmatprep.subr.mxu0 0.0
    %2212 = vmatpush1.msra.mxu0 0.0
    %2213 = vmatprep.subr.mxu0 0.0
    %2214 = vmatpush1.msra.mxu0 0.0
    %2215 = vmatprep.subr.mxu0 0.0
    %2216 = vmatpush1.msra.mxu0 0.0
    %2217 = vmatprep.subr.mxu0 0.0
    %2218 = vmatpush1.msra.mxu0 0.0
    %2219 = vmatprep.subr.mxu0 0.0
    %2220 = vmatpush1.msra.mxu0 0.0
    %2221 = vmatprep.subr.mxu0 0.0
    %2222 = vmatpush1.msra.mxu0 0.0
    %2223 = vmatprep.subr.mxu0 0.0
    %2224 = vmatpush1.msra.mxu0 0.0
    %2225 = vmatprep.subr.mxu0 0.0
    %2226 = vmatpush1.msra.mxu0 0.0
    %2227 = vmatprep.subr.mxu0 0.0
    %2228 = vmatpush1.msra.mxu0 0.0
    %2229 = vmatprep.subr.mxu0 0.0
    %2230 = vmatpush1.msra.mxu0 0.0
    %2231 = vmatprep.subr.mxu0 0.0
    %2232 = vmatpush1.msra.mxu0 0.0
    %2233 = vmatprep.subr.mxu0 0.0
    %2234 = vmatpush1.msra.mxu0 0.0
    %2235 = vmatprep.subr.mxu0 0.0
    %2236 = vmatpush1.msra.mxu0 0.0
    %2237 = vmatprep.subr.mxu0 0.0
    %2238 = vmatpush1.msra.mxu0 0.0
    %2239 = vmatprep.subr.mxu0 0.0
    %2240 = vmatpush1.msra.mxu0 0.0
    %2241 = vmatprep.subr.mxu0 0.0
    %2242 = vmatpush1.msra.mxu0 0.0
    %2243 = vmatprep.subr.mxu0 0.0
    %2244 = vmatpush1.msra.mxu0 0.0
    %2245 = vmatprep.subr.mxu0 0.0
    %2246 = vmatpush1.msra.mxu0 0.0
    %2247 = vmatprep.subr.mxu0 0.0
    %2248 = vmatpush1.msra.mxu0 0.0
    %2249 = vmatprep.subr.mxu0 0.0
    %2250 = vmatpush1.msra.mxu0 0.0
    %2251 = vmatprep.subr.mxu0 0.0
    %2252 = vmatpush1.msra.mxu0 0.0
    %2253 = vmatprep.subr.mxu0 0.0
    %2254 = vmatpush1.msra.mxu0 0.0
    %2255 = vmatprep.subr.mxu0 0.0
    %2256 = vmatpush1.msra.mxu0 0.0
    %2257 = vmatprep.subr.mxu0 0.0
    %2258 = vmatpush1.msra.mxu0 0.0
    %2259 = vmatprep.subr.mxu0 0.0
    %2260 = vmatpush1.msra.mxu0 0.0
    %2261 = vmatprep.subr.mxu0 0.0
    %2262 = vmatpush1.msra.mxu0 0.0
    %2263 = vmatprep.subr.mxu0 0.0
    %2264 = vmatpush1.msra.mxu0 0.0
    %2265 = vmatprep.subr.mxu0 0.0
    %2266 = vmatpush1.msra.mxu0 0.0
    %2267 = vmatprep.subr.mxu0 0.0
    %2268 = vmatpush1.msra.mxu0 0.0
    %2269 = vmatprep.subr.mxu0 0.0
    %2270 = vmatpush1.msra.mxu0 0.0
    %2271 = vmatprep.subr.mxu0 0.0
    %2272 = vmatpush1.msra.mxu0 0.0
    %2273 = vmatprep.mubr.f32.mxu0 0.0
    %2274 = vmatmul.mubr.f32.gmra.mrb[0].mxu0 %v2207
    %v2275 = vpop.f32.mrb[0].mxu0
    %v2276 = vadd.f32 0.0, %v2275
    %v2277 = vpop.f32.mrb[0].mxu0
    %2278 = vdwg.mxu0
    %v2280 = vsel %vm89, %v911, 0
    %2282 = vmatprep.subr.mxu0 0.0
    %2283 = vmatpush1.msra.mxu0 %v987
    %2284 = vmatprep.subr.mxu0 0.0
    %2285 = vmatpush1.msra.mxu0 0.0
    %2286 = vmatprep.subr.mxu0 0.0
    %2287 = vmatpush1.msra.mxu0 0.0
    %2288 = vmatprep.subr.mxu0 0.0
    %2289 = vmatpush1.msra.mxu0 0.0
    %2290 = vmatprep.subr.mxu0 0.0
    %2291 = vmatpush1.msra.mxu0 0.0
    %2292 = vmatprep.subr.mxu0 0.0
    %2293 = vmatpush1.msra.mxu0 0.0
    %2294 = vmatprep.subr.mxu0 0.0
    %2295 = vmatpush1.msra.mxu0 0.0
    %2296 = vmatprep.subr.mxu0 0.0
    %2297 = vmatpush1.msra.mxu0 0.0
    %2298 = vmatprep.subr.mxu0 0.0
    %2299 = vmatpush1.msra.mxu0 0.0
    %2300 = vmatprep.subr.mxu0 0.0
    %2301 = vmatpush1.msra.mxu0 0.0
    %2302 = vmatprep.subr.mxu0 0.0
    %2303 = vmatpush1.msra.mxu0 0.0
    %2304 = vmatprep.subr.mxu0 0.0
    %2305 = vmatpush1.msra.mxu0 0.0
    %2306 = vmatprep.subr.mxu0 0.0
    %2307 = vmatpush1.msra.mxu0 0.0
    %2308 = vmatprep.subr.mxu0 0.0
    %2309 = vmatpush1.msra.mxu0 0.0
    %2310 = vmatprep.subr.mxu0 0.0
    %2311 = vmatpush1.msra.mxu0 0.0
    %2312 = vmatprep.subr.mxu0 0.0
    %2313 = vmatpush1.msra.mxu0 0.0
    %2314 = vmatprep.subr.mxu0 0.0
    %2315 = vmatpush1.msra.mxu0 0.0
    %2316 = vmatprep.subr.mxu0 0.0
    %2317 = vmatpush1.msra.mxu0 0.0
    %2318 = vmatprep.subr.mxu0 0.0
    %2319 = vmatpush1.msra.mxu0 0.0
    %2320 = vmatprep.subr.mxu0 0.0
    %2321 = vmatpush1.msra.mxu0 0.0
    %2322 = vmatprep.subr.mxu0 0.0
    %2323 = vmatpush1.msra.mxu0 0.0
    %2324 = vmatprep.subr.mxu0 0.0
    %2325 = vmatpush1.msra.mxu0 0.0
    %2326 = vmatprep.subr.mxu0 0.0
    %2327 = vmatpush1.msra.mxu0 0.0
    %2328 = vmatprep.subr.mxu0 0.0
    %2329 = vmatpush1.msra.mxu0 0.0
    %2330 = vmatprep.subr.mxu0 0.0
    %2331 = vmatpush1.msra.mxu0 0.0
    %2332 = vmatprep.subr.mxu0 0.0
    %2333 = vmatpush1.msra.mxu0 0.0
    %2334 = vmatprep.subr.mxu0 0.0
    %2335 = vmatpush1.msra.mxu0 0.0
    %2336 = vmatprep.subr.mxu0 0.0
    %2337 = vmatpush1.msra.mxu0 0.0
    %2338 = vmatprep.subr.mxu0 0.0
    %2339 = vmatpush1.msra.mxu0 0.0
    %2340 = vmatprep.subr.mxu0 0.0
    %2341 = vmatpush1.msra.mxu0 0.0
    %2342 = vmatprep.subr.mxu0 0.0
    %2343 = vmatpush1.msra.mxu0 0.0
    %2344 = vmatprep.subr.mxu0 0.0
    %2345 = vmatpush1.msra.mxu0 0.0
    %2346 = vmatprep.mubr.f32.mxu0 0.0
    %2347 = vmatmul.mubr.f32.gmra.mrb[0].mxu0 %v2280
    %v2348 = vpop.f32.mrb[0].mxu0
    %v2349 = vadd.f32 0.0, %v2348
    %v2350 = vpop.f32.mrb[0].mxu0
    %2351 = vdwg.mxu0
    %v2353 = vsel %vm89, %v1139, 0
    %2355 = vmatprep.subr.mxu0 0.0
    %2356 = vmatpush1.msra.mxu0 %v1215
    %2357 = vmatprep.subr.mxu0 0.0
    %2358 = vmatpush1.msra.mxu0 0.0
    %2359 = vmatprep.subr.mxu0 0.0
    %2360 = vmatpush1.msra.mxu0 0.0
    %2361 = vmatprep.subr.mxu0 0.0
    %2362 = vmatpush1.msra.mxu0 0.0
    %2363 = vmatprep.subr.mxu0 0.0
    %2364 = vmatpush1.msra.mxu0 0.0
    %2365 = vmatprep.subr.mxu0 0.0
    %2366 = vmatpush1.msra.mxu0 0.0
    %2367 = vmatprep.subr.mxu0 0.0
    %2368 = vmatpush1.msra.mxu0 0.0
    %2369 = vmatprep.subr.mxu0 0.0
    %2370 = vmatpush1.msra.mxu0 0.0
    %2371 = vmatprep.subr.mxu0 0.0
    %2372 = vmatpush1.msra.mxu0 0.0
    %2373 = vmatprep.subr.mxu0 0.0
    %2374 = vmatpush1.msra.mxu0 0.0
    %2375 = vmatprep.subr.mxu0 0.0
    %2376 = vmatpush1.msra.mxu0 0.0
    %2377 = vmatprep.subr.mxu0 0.0
    %2378 = vmatpush1.msra.mxu0 0.0
    %2379 = vmatprep.subr.mxu0 0.0
    %2380 = vmatpush1.msra.mxu0 0.0
    %2381 = vmatprep.subr.mxu0 0.0
    %2382 = vmatpush1.msra.mxu0 0.0
    %2383 = vmatprep.subr.mxu0 0.0
    %2384 = vmatpush1.msra.mxu0 0.0
    %2385 = vmatprep.subr.mxu0 0.0
    %2386 = vmatpush1.msra.mxu0 0.0
    %2387 = vmatprep.subr.mxu0 0.0
    %2388 = vmatpush1.msra.mxu0 0.0
    %2389 = vmatprep.subr.mxu0 0.0
    %2390 = vmatpush1.msra.mxu0 0.0
    %2391 = vmatprep.subr.mxu0 0.0
    %2392 = vmatpush1.msra.mxu0 0.0
    %2393 = vmatprep.subr.mxu0 0.0
    %2394 = vmatpush1.msra.mxu0 0.0
    %2395 = vmatprep.subr.mxu0 0.0
    %2396 = vmatpush1.msra.mxu0 0.0
    %2397 = vmatprep.subr.mxu0 0.0
    %2398 = vmatpush1.msra.mxu0 0.0
    %2399 = vmatprep.subr.mxu0 0.0
    %2400 = vmatpush1.msra.mxu0 0.0
    %2401 = vmatprep.subr.mxu0 0.0
    %2402 = vmatpush1.msra.mxu0 0.0
    %2403 = vmatprep.subr.mxu0 0.0
    %2404 = vmatpush1.msra.mxu0 0.0
    %2405 = vmatprep.subr.mxu0 0.0
    %2406 = vmatpush1.msra.mxu0 0.0
    %2407 = vmatprep.subr.mxu0 0.0
    %2408 = vmatpush1.msra.mxu0 0.0
    %2409 = vmatprep.subr.mxu0 0.0
    %2410 = vmatpush1.msra.mxu0 0.0
    %2411 = vmatprep.subr.mxu0 0.0
    %2412 = vmatpush1.msra.mxu0 0.0
    %2413 = vmatprep.subr.mxu0 0.0
    %2414 = vmatpush1.msra.mxu0 0.0
    %2415 = vmatprep.subr.mxu0 0.0
    %2416 = vmatpush1.msra.mxu0 0.0
    %2417 = vmatprep.subr.mxu0 0.0
    %2418 = vmatpush1.msra.mxu0 0.0
    %2419 = vmatprep.mubr.f32.mxu0 0.0
    %2420 = vmatmul.mubr.f32.gmra.mrb[0].mxu0 %v2353
    %v2421 = vpop.f32.mrb[0].mxu0
    %v2422 = vadd.f32 0.0, %v2421
    %v2423 = vpop.f32.mrb[0].mxu0
    %2424 = vdwg.mxu0
    %v2426 = vsel %vm89, %v1291, 0
    %2428 = vmatprep.subr.mxu0 0.0
    %2429 = vmatpush1.msra.mxu0 %v1367
    %2430 = vmatprep.subr.mxu0 0.0
    %2431 = vmatpush1.msra.mxu0 0.0
    %2432 = vmatprep.subr.mxu0 0.0
    %2433 = vmatpush1.msra.mxu0 0.0
    %2434 = vmatprep.subr.mxu0 0.0
    %2435 = vmatpush1.msra.mxu0 0.0
    %2436 = vmatprep.subr.mxu0 0.0
    %2437 = vmatpush1.msra.mxu0 0.0
    %2438 = vmatprep.subr.mxu0 0.0
    %2439 = vmatpush1.msra.mxu0 0.0
    %2440 = vmatprep.subr.mxu0 0.0
    %2441 = vmatpush1.msra.mxu0 0.0
    %2442 = vmatprep.subr.mxu0 0.0
    %2443 = vmatpush1.msra.mxu0 0.0
    %2444 = vmatprep.subr.mxu0 0.0
    %2445 = vmatpush1.msra.mxu0 0.0
    %2446 = vmatprep.subr.mxu0 0.0
    %2447 = vmatpush1.msra.mxu0 0.0
    %2448 = vmatprep.subr.mxu0 0.0
    %2449 = vmatpush1.msra.mxu0 0.0
    %2450 = vmatprep.subr.mxu0 0.0
    %2451 = vmatpush1.msra.mxu0 0.0
    %2452 = vmatprep.subr.mxu0 0.0
    %2453 = vmatpush1.msra.mxu0 0.0
    %2454 = vmatprep.subr.mxu0 0.0
    %2455 = vmatpush1.msra.mxu0 0.0
    %2456 = vmatprep.subr.mxu0 0.0
    %2457 = vmatpush1.msra.mxu0 0.0
    %2458 = vmatprep.subr.mxu0 0.0
    %2459 = vmatpush1.msra.mxu0 0.0
    %2460 = vmatprep.subr.mxu0 0.0
    %2461 = vmatpush1.msra.mxu0 0.0
    %2462 = vmatprep.subr.mxu0 0.0
    %2463 = vmatpush1.msra.mxu0 0.0
    %2464 = vmatprep.subr.mxu0 0.0
    %2465 = vmatpush1.msra.mxu0 0.0
    %2466 = vmatprep.subr.mxu0 0.0
    %2467 = vmatpush1.msra.mxu0 0.0
    %2468 = vmatprep.subr.mxu0 0.0
    %2469 = vmatpush1.msra.mxu0 0.0
    %2470 = vmatprep.subr.mxu0 0.0
    %2471 = vmatpush1.msra.mxu0 0.0
    %2472 = vmatprep.subr.mxu0 0.0
    %2473 = vmatpush1.msra.mxu0 0.0
    %2474 = vmatprep.subr.mxu0 0.0
    %2475 = vmatpush1.msra.mxu0 0.0
    %2476 = vmatprep.subr.mxu0 0.0
    %2477 = vmatpush1.msra.mxu0 0.0
    %2478 = vmatprep.subr.mxu0 0.0
    %2479 = vmatpush1.msra.mxu0 0.0
    %2480 = vmatprep.subr.mxu0 0.0
    %2481 = vmatpush1.msra.mxu0 0.0
    %2482 = vmatprep.subr.mxu0 0.0
    %2483 = vmatpush1.msra.mxu0 0.0
    %2484 = vmatprep.subr.mxu0 0.0
    %2485 = vmatpush1.msra.mxu0 0.0
    %2486 = vmatprep.subr.mxu0 0.0
    %2487 = vmatpush1.msra.mxu0 0.0
    %2488 = vmatprep.subr.mxu0 0.0
    %2489 = vmatpush1.msra.mxu0 0.0
    %2490 = vmatprep.subr.mxu0 0.0
    %2491 = vmatpush1.msra.mxu0 0.0
    %2492 = vmatprep.mubr.f32.mxu0 0.0
    %2493 = vmatmul.mubr.f32.gmra.mrb[0].mxu0 %v2426
    %v2494 = vpop.f32.mrb[0].mxu0
    %v2495 = vadd.f32 0.0, %v2494
    %v2496 = vpop.f32.mrb[0].mxu0
    %2497 = vdwg.mxu0
    %v2499 = vsel %vm89, %v1519, 0
    %2501 = vmatprep.subr.mxu0 0.0
    %2502 = vmatpush1.msra.mxu0 %v1595
    %2503 = vmatprep.subr.mxu0 0.0
    %2504 = vmatpush1.msra.mxu0 0.0
    %2505 = vmatprep.subr.mxu0 0.0
    %2506 = vmatpush1.msra.mxu0 0.0
    %2507 = vmatprep.subr.mxu0 0.0
    %2508 = vmatpush1.msra.mxu0 0.0
    %2509 = vmatprep.subr.mxu0 0.0
    %2510 = vmatpush1.msra.mxu0 0.0
    %2511 = vmatprep.subr.mxu0 0.0
    %2512 = vmatpush1.msra.mxu0 0.0
    %2513 = vmatprep.subr.mxu0 0.0
    %2514 = vmatpush1.msra.mxu0 0.0
    %2515 = vmatprep.subr.mxu0 0.0
    %2516 = vmatpush1.msra.mxu0 0.0
    %2517 = vmatprep.subr.mxu0 0.0
    %2518 = vmatpush1.msra.mxu0 0.0
    %2519 = vmatprep.subr.mxu0 0.0
    %2520 = vmatpush1.msra.mxu0 0.0
    %2521 = vmatprep.subr.mxu0 0.0
    %2522 = vmatpush1.msra.mxu0 0.0
    %2523 = vmatprep.subr.mxu0 0.0
    %2524 = vmatpush1.msra.mxu0 0.0
    %2525 = vmatprep.subr.mxu0 0.0
    %2526 = vmatpush1.msra.mxu0 0.0
    %2527 = vmatprep.subr.mxu0 0.0
    %2528 = vmatpush1.msra.mxu0 0.0
    %2529 = vmatprep.subr.mxu0 0.0
    %2530 = vmatpush1.msra.mxu0 0.0
    %2531 = vmatprep.subr.mxu0 0.0
    %2532 = vmatpush1.msra.mxu0 0.0
    %2533 = vmatprep.subr.mxu0 0.0
    %2534 = vmatpush1.msra.mxu0 0.0
    %2535 = vmatprep.subr.mxu0 0.0
    %2536 = vmatpush1.msra.mxu0 0.0
    %2537 = vmatprep.subr.mxu0 0.0
    %2538 = vmatpush1.msra.mxu0 0.0
    %2539 = vmatprep.subr.mxu0 0.0
    %2540 = vmatpush1.msra.mxu0 0.0
    %2541 = vmatprep.subr.mxu0 0.0
    %2542 = vmatpush1.msra.mxu0 0.0
    %2543 = vmatprep.subr.mxu0 0.0
    %2544 = vmatpush1.msra.mxu0 0.0
    %2545 = vmatprep.subr.mxu0 0.0
    %2546 = vmatpush1.msra.mxu0 0.0
    %2547 = vmatprep.subr.mxu0 0.0
    %2548 = vmatpush1.msra.mxu0 0.0
    %2549 = vmatprep.subr.mxu0 0.0
    %2550 = vmatpush1.msra.mxu0 0.0
    %2551 = vmatprep.subr.mxu0 0.0
    %2552 = vmatpush1.msra.mxu0 0.0
    %2553 = vmatprep.subr.mxu0 0.0
    %2554 = vmatpush1.msra.mxu0 0.0
    %2555 = vmatprep.subr.mxu0 0.0
    %2556 = vmatpush1.msra.mxu0 0.0
    %2557 = vmatprep.subr.mxu0 0.0
    %2558 = vmatpush1.msra.mxu0 0.0
    %2559 = vmatprep.subr.mxu0 0.0
    %2560 = vmatpush1.msra.mxu0 0.0
    %2561 = vmatprep.subr.mxu0 0.0
    %2562 = vmatpush1.msra.mxu0 0.0
    %2563 = vmatprep.subr.mxu0 0.0
    %2564 = vmatpush1.msra.mxu0 0.0
    %2565 = vmatprep.mubr.f32.mxu0 0.0
    %2566 = vmatmul.mubr.f32.gmra.mrb[0].mxu0 %v2499
    %v2567 = vpop.f32.mrb[0].mxu0
    %v2568 = vadd.f32 0.0, %v2567
    %v2569 = vpop.f32.mrb[0].mxu0
    %2570 = vdwg.mxu0
    %v2572 = vsel %vm89, %v1671, 0
    %2574 = vmatprep.subr.mxu0 0.0
    %2575 = vmatpush1.msra.mxu0 %v1747
    %2576 = vmatprep.subr.mxu0 0.0
    %2577 = vmatpush1.msra.mxu0 0.0
    %2578 = vmatprep.subr.mxu0 0.0
    %2579 = vmatpush1.msra.mxu0 0.0
    %2580 = vmatprep.subr.mxu0 0.0
    %2581 = vmatpush1.msra.mxu0 0.0
    %2582 = vmatprep.subr.mxu0 0.0
    %2583 = vmatpush1.msra.mxu0 0.0
    %2584 = vmatprep.subr.mxu0 0.0
    %2585 = vmatpush1.msra.mxu0 0.0
    %2586 = vmatprep.subr.mxu0 0.0
    %2587 = vmatpush1.msra.mxu0 0.0
    %2588 = vmatprep.subr.mxu0 0.0
    %2589 = vmatpush1.msra.mxu0 0.0
    %2590 = vmatprep.subr.mxu0 0.0
    %2591 = vmatpush1.msra.mxu0 0.0
    %2592 = vmatprep.subr.mxu0 0.0
    %2593 = vmatpush1.msra.mxu0 0.0
    %2594 = vmatprep.subr.mxu0 0.0
    %2595 = vmatpush1.msra.mxu0 0.0
    %2596 = vmatprep.subr.mxu0 0.0
    %2597 = vmatpush1.msra.mxu0 0.0
    %2598 = vmatprep.subr.mxu0 0.0
    %2599 = vmatpush1.msra.mxu0 0.0
    %2600 = vmatprep.subr.mxu0 0.0
    %2601 = vmatpush1.msra.mxu0 0.0
    %2602 = vmatprep.subr.mxu0 0.0
    %2603 = vmatpush1.msra.mxu0 0.0
    %2604 = vmatprep.subr.mxu0 0.0
    %2605 = vmatpush1.msra.mxu0 0.0
    %2606 = vmatprep.subr.mxu0 0.0
    %2607 = vmatpush1.msra.mxu0 0.0
    %2608 = vmatprep.subr.mxu0 0.0
    %2609 = vmatpush1.msra.mxu0 0.0
    %2610 = vmatprep.subr.mxu0 0.0
    %2611 = vmatpush1.msra.mxu0 0.0
    %2612 = vmatprep.subr.mxu0 0.0
    %2613 = vmatpush1.msra.mxu0 0.0
    %2614 = vmatprep.subr.mxu0 0.0
    %2615 = vmatpush1.msra.mxu0 0.0
    %2616 = vmatprep.subr.mxu0 0.0
    %2617 = vmatpush1.msra.mxu0 0.0
    %2618 = vmatprep.subr.mxu0 0.0
    %2619 = vmatpush1.msra.mxu0 0.0
    %2620 = vmatprep.subr.mxu0 0.0
    %2621 = vmatpush1.msra.mxu0 0.0
    %2622 = vmatprep.subr.mxu0 0.0
    %2623 = vmatpush1.msra.mxu0 0.0
    %2624 = vmatprep.subr.mxu0 0.0
    %2625 = vmatpush1.msra.mxu0 0.0
    %2626 = vmatprep.subr.mxu0 0.0
    %2627 = vmatpush1.msra.mxu0 0.0
    %2628 = vmatprep.subr.mxu0 0.0
    %2629 = vmatpush1.msra.mxu0 0.0
    %2630 = vmatprep.subr.mxu0 0.0
    %2631 = vmatpush1.msra.mxu0 0.0
    %2632 = vmatprep.subr.mxu0 0.0
    %2633 = vmatpush1.msra.mxu0 0.0
    %2634 = vmatprep.subr.mxu0 0.0
    %2635 = vmatpush1.msra.mxu0 0.0
    %2636 = vmatprep.subr.mxu0 0.0
    %2637 = vmatpush1.msra.mxu0 0.0
    %2638 = vmatprep.mubr.f32.mxu0 0.0
    %2639 = vmatmul.mubr.f32.gmra.mrb[0].mxu0 %v2572
    %v2640 = vpop.f32.mrb[0].mxu0
    %v2641 = vadd.f32 0.0, %v2640
    %v2642 = vpop.f32.mrb[0].mxu0
    %2643 = vdwg.mxu0
    %v2645 = vsel %vm89, %v1899, 0
    %2647 = vmatprep.subr.mxu0 0.0
    %2648 = vmatpush1.msra.mxu0 %v1975
    %2649 = vmatprep.subr.mxu0 0.0
    %2650 = vmatpush1.msra.mxu0 0.0
    %2651 = vmatprep.subr.mxu0 0.0
    %2652 = vmatpush1.msra.mxu0 0.0
    %2653 = vmatprep.subr.mxu0 0.0
    %2654 = vmatpush1.msra.mxu0 0.0
    %2655 = vmatprep.subr.mxu0 0.0
    %2656 = vmatpush1.msra.mxu0 0.0
    %2657 = vmatprep.subr.mxu0 0.0
    %2658 = vmatpush1.msra.mxu0 0.0
    %2659 = vmatprep.subr.mxu0 0.0
    %2660 = vmatpush1.msra.mxu0 0.0
    %2661 = vmatprep.subr.mxu0 0.0
    %2662 = vmatpush1.msra.mxu0 0.0
    %2663 = vmatprep.subr.mxu0 0.0
    %2664 = vmatpush1.msra.mxu0 0.0
    %2665 = vmatprep.subr.mxu0 0.0
    %2666 = vmatpush1.msra.mxu0 0.0
    %2667 = vmatprep.subr.mxu0 0.0
    %2668 = vmatpush1.msra.mxu0 0.0
    %2669 = vmatprep.subr.mxu0 0.0
    %2670 = vmatpush1.msra.mxu0 0.0
    %2671 = vmatprep.subr.mxu0 0.0
    %2672 = vmatpush1.msra.mxu0 0.0
    %2673 = vmatprep.subr.mxu0 0.0
    %2674 = vmatpush1.msra.mxu0 0.0
    %2675 = vmatprep.subr.mxu0 0.0
    %2676 = vmatpush1.msra.mxu0 0.0
    %2677 = vmatprep.subr.mxu0 0.0
    %2678 = vmatpush1.msra.mxu0 0.0
    %2679 = vmatprep.subr.mxu0 0.0
    %2680 = vmatpush1.msra.mxu0 0.0
    %2681 = vmatprep.subr.mxu0 0.0
    %2682 = vmatpush1.msra.mxu0 0.0
    %2683 = vmatprep.subr.mxu0 0.0
    %2684 = vmatpush1.msra.mxu0 0.0
    %2685 = vmatprep.subr.mxu0 0.0
    %2686 = vmatpush1.msra.mxu0 0.0
    %2687 = vmatprep.subr.mxu0 0.0
    %2688 = vmatpush1.msra.mxu0 0.0
    %2689 = vmatprep.subr.mxu0 0.0
    %2690 = vmatpush1.msra.mxu0 0.0
    %2691 = vmatprep.subr.mxu0 0.0
    %2692 = vmatpush1.msra.mxu0 0.0
    %2693 = vmatprep.subr.mxu0 0.0
    %2694 = vmatpush1.msra.mxu0 0.0
    %2695 = vmatprep.subr.mxu0 0.0
    %2696 = vmatpush1.msra.mxu0 0.0
    %2697 = vmatprep.subr.mxu0 0.0
    %2698 = vmatpush1.msra.mxu0 0.0
    %2699 = vmatprep.subr.mxu0 0.0
    %2700 = vmatpush1.msra.mxu0 0.0
    %2701 = vmatprep.subr.mxu0 0.0
    %2702 = vmatpush1.msra.mxu0 0.0
    %2703 = vmatprep.subr.mxu0 0.0
    %2704 = vmatpush1.msra.mxu0 0.0
    %2705 = vmatprep.subr.mxu0 0.0
    %2706 = vmatpush1.msra.mxu0 0.0
    %2707 = vmatprep.subr.mxu0 0.0
    %2708 = vmatpush1.msra.mxu0 0.0
    %2709 = vmatprep.subr.mxu0 0.0
    %2710 = vmatpush1.msra.mxu0 0.0
    %2711 = vmatprep.mubr.f32.mxu0 0.0
    %2712 = vmatmul.mubr.f32.gmra.mrb[0].mxu0 %v2645
    %v2713 = vpop.f32.mrb[0].mxu0
    %v2714 = vadd.f32 0.0, %v2713
    %v2715 = vpop.f32.mrb[0].mxu0
    %2716 = vdwg.mxu0
    %v2718 = vsel %vm89, %v2051, 0
    %2720 = vmatprep.subr.mxu0 0.0
    %2721 = vmatpush1.msra.mxu0 %v2127
    %2722 = vmatprep.subr.mxu0 0.0
    %2723 = vmatpush1.msra.mxu0 0.0
    %2724 = vmatprep.subr.mxu0 0.0
    %2725 = vmatpush1.msra.mxu0 0.0
    %2726 = vmatprep.subr.mxu0 0.0
    %2727 = vmatpush1.msra.mxu0 0.0
    %2728 = vmatprep.subr.mxu0 0.0
    %2729 = vmatpush1.msra.mxu0 0.0
    %2730 = vmatprep.subr.mxu0 0.0
    %2731 = vmatpush1.msra.mxu0 0.0
    %2732 = vmatprep.subr.mxu0 0.0
    %2733 = vmatpush1.msra.mxu0 0.0
    %2734 = vmatprep.subr.mxu0 0.0
    %2735 = vmatpush1.msra.mxu0 0.0
    %2736 = vmatprep.subr.mxu0 0.0
    %2737 = vmatpush1.msra.mxu0 0.0
    %2738 = vmatprep.subr.mxu0 0.0
    %2739 = vmatpush1.msra.mxu0 0.0
    %2740 = vmatprep.subr.mxu0 0.0
    %2741 = vmatpush1.msra.mxu0 0.0
    %2742 = vmatprep.subr.mxu0 0.0
    %2743 = vmatpush1.msra.mxu0 0.0
    %2744 = vmatprep.subr.mxu0 0.0
    %2745 = vmatpush1.msra.mxu0 0.0
    %2746 = vmatprep.subr.mxu0 0.0
    %2747 = vmatpush1.msra.mxu0 0.0
    %2748 = vmatprep.subr.mxu0 0.0
    %2749 = vmatpush1.msra.mxu0 0.0
    %2750 = vmatprep.subr.mxu0 0.0
    %2751 = vmatpush1.msra.mxu0 0.0
    %2752 = vmatprep.subr.mxu0 0.0
    %2753 = vmatpush1.msra.mxu0 0.0
    %2754 = vmatprep.subr.mxu0 0.0
    %2755 = vmatpush1.msra.mxu0 0.0
    %2756 = vmatprep.subr.mxu0 0.0
    %2757 = vmatpush1.msra.mxu0 0.0
    %2758 = vmatprep.subr.mxu0 0.0
    %2759 = vmatpush1.msra.mxu0 0.0
    %2760 = vmatprep.subr.mxu0 0.0
    %2761 = vmatpush1.msra.mxu0 0.0
    %2762 = vmatprep.subr.mxu0 0.0
    %2763 = vmatpush1.msra.mxu0 0.0
    %2764 = vmatprep.subr.mxu0 0.0
    %2765 = vmatpush1.msra.mxu0 0.0
    %2766 = vmatprep.subr.mxu0 0.0
    %2767 = vmatpush1.msra.mxu0 0.0
    %2768 = vmatprep.subr.mxu0 0.0
    %2769 = vmatpush1.msra.mxu0 0.0
    %2770 = vmatprep.subr.mxu0 0.0
    %2771 = vmatpush1.msra.mxu0 0.0
    %2772 = vmatprep.subr.mxu0 0.0
    %2773 = vmatpush1.msra.mxu0 0.0
    %2774 = vmatprep.subr.mxu0 0.0
    %2775 = vmatpush1.msra.mxu0 0.0
    %2776 = vmatprep.subr.mxu0 0.0
    %2777 = vmatpush1.msra.mxu0 0.0
    %2778 = vmatprep.subr.mxu0 0.0
    %2779 = vmatpush1.msra.mxu0 0.0
    %2780 = vmatprep.subr.mxu0 0.0
    %2781 = vmatpush1.msra.mxu0 0.0
    %2782 = vmatprep.subr.mxu0 0.0
    %2783 = vmatpush1.msra.mxu0 0.0
    %2784 = vmatprep.mubr.f32.mxu0 0.0
    %2785 = vmatmul.mubr.f32.gmra.mrb[0].mxu0 %v2718
    %v2786 = vpop.f32.mrb[0].mxu0
    %v2787 = vadd.f32 0.0, %v2786
    %v2788 = vpop.f32.mrb[0].mxu0
    %2789 = vdwg.mxu0
    %v2791 = vsel %vm89, %v2276, 0
    %2793 = vmatprep.subr.mxu0 0.0
    %2794 = vmatpush1.msra.mxu0 %v2349
    %2795 = vmatprep.subr.mxu0 0.0
    %2796 = vmatpush1.msra.mxu0 0.0
    %2797 = vmatprep.subr.mxu0 0.0
    %2798 = vmatpush1.msra.mxu0 0.0
    %2799 = vmatprep.subr.mxu0 0.0
    %2800 = vmatpush1.msra.mxu0 0.0
    %2801 = vmatprep.subr.mxu0 0.0
    %2802 = vmatpush1.msra.mxu0 0.0
    %2803 = vmatprep.subr.mxu0 0.0
    %2804 = vmatpush1.msra.mxu0 0.0
    %2805 = vmatprep.subr.mxu0 0.0
    %2806 = vmatpush1.msra.mxu0 0.0
    %2807 = vmatprep.subr.mxu0 0.0
    %2808 = vmatpush1.msra.mxu0 0.0
    %2809 = vmatprep.subr.mxu0 0.0
    %2810 = vmatpush1.msra.mxu0 0.0
    %2811 = vmatprep.subr.mxu0 0.0
    %2812 = vmatpush1.msra.mxu0 0.0
    %2813 = vmatprep.subr.mxu0 0.0
    %2814 = vmatpush1.msra.mxu0 0.0
    %2815 = vmatprep.subr.mxu0 0.0
    %2816 = vmatpush1.msra.mxu0 0.0
    %2817 = vmatprep.subr.mxu0 0.0
    %2818 = vmatpush1.msra.mxu0 0.0
    %2819 = vmatprep.subr.mxu0 0.0
    %2820 = vmatpush1.msra.mxu0 0.0
    %2821 = vmatprep.subr.mxu0 0.0
    %2822 = vmatpush1.msra.mxu0 0.0
    %2823 = vmatprep.subr.mxu0 0.0
    %2824 = vmatpush1.msra.mxu0 0.0
    %2825 = vmatprep.subr.mxu0 0.0
    %2826 = vmatpush1.msra.mxu0 0.0
    %2827 = vmatprep.subr.mxu0 0.0
    %2828 = vmatpush1.msra.mxu0 0.0
    %2829 = vmatprep.subr.mxu0 0.0
    %2830 = vmatpush1.msra.mxu0 0.0
    %2831 = vmatprep.subr.mxu0 0.0
    %2832 = vmatpush1.msra.mxu0 0.0
    %2833 = vmatprep.subr.mxu0 0.0
    %2834 = vmatpush1.msra.mxu0 0.0
    %2835 = vmatprep.subr.mxu0 0.0
    %2836 = vmatpush1.msra.mxu0 0.0
    %2837 = vmatprep.subr.mxu0 0.0
    %2838 = vmatpush1.msra.mxu0 0.0
    %2839 = vmatprep.subr.mxu0 0.0
    %2840 = vmatpush1.msra.mxu0 0.0
    %2841 = vmatprep.subr.mxu0 0.0
    %2842 = vmatpush1.msra.mxu0 0.0
    %2843 = vmatprep.subr.mxu0 0.0
    %2844 = vmatpush1.msra.mxu0 0.0
    %2845 = vmatprep.subr.mxu0 0.0
    %2846 = vmatpush1.msra.mxu0 0.0
    %2847 = vmatprep.subr.mxu0 0.0
    %2848 = vmatpush1.msra.mxu0 0.0
    %2849 = vmatprep.subr.mxu0 0.0
    %2850 = vmatpush1.msra.mxu0 0.0
    %2851 = vmatprep.subr.mxu0 0.0
    %2852 = vmatpush1.msra.mxu0 0.0
    %2853 = vmatprep.subr.mxu0 0.0
    %2854 = vmatpush1.msra.mxu0 0.0
    %2855 = vmatprep.subr.mxu0 0.0
    %2856 = vmatpush1.msra.mxu0 0.0
    %2857 = vmatprep.mubr.f32.mxu0 0.0
    %2858 = vmatmul.mubr.f32.gmra.mrb[0].mxu0 %v2791
    %v2859 = vpop.f32.mrb[0].mxu0
    %v2860 = vadd.f32 0.0, %v2859
    %v2861 = vpop.f32.mrb[0].mxu0
    %2862 = vdwg.mxu0
    %v2864 = vsel %vm89, %v2422, 0
    %2866 = vmatprep.subr.mxu0 0.0
    %2867 = vmatpush1.msra.mxu0 %v2495
    %2868 = vmatprep.subr.mxu0 0.0
    %2869 = vmatpush1.msra.mxu0 0.0
    %2870 = vmatprep.subr.mxu0 0.0
    %2871 = vmatpush1.msra.mxu0 0.0
    %2872 = vmatprep.subr.mxu0 0.0
    %2873 = vmatpush1.msra.mxu0 0.0
    %2874 = vmatprep.subr.mxu0 0.0
    %2875 = vmatpush1.msra.mxu0 0.0
    %2876 = vmatprep.subr.mxu0 0.0
    %2877 = vmatpush1.msra.mxu0 0.0
    %2878 = vmatprep.subr.mxu0 0.0
    %2879 = vmatpush1.msra.mxu0 0.0
    %2880 = vmatprep.subr.mxu0 0.0
    %2881 = vmatpush1.msra.mxu0 0.0
    %2882 = vmatprep.subr.mxu0 0.0
    %2883 = vmatpush1.msra.mxu0 0.0
    %2884 = vmatprep.subr.mxu0 0.0
    %2885 = vmatpush1.msra.mxu0 0.0
    %2886 = vmatprep.subr.mxu0 0.0
    %2887 = vmatpush1.msra.mxu0 0.0
    %2888 = vmatprep.subr.mxu0 0.0
    %2889 = vmatpush1.msra.mxu0 0.0
    %2890 = vmatprep.subr.mxu0 0.0
    %2891 = vmatpush1.msra.mxu0 0.0
    %2892 = vmatprep.subr.mxu0 0.0
    %2893 = vmatpush1.msra.mxu0 0.0
    %2894 = vmatprep.subr.mxu0 0.0
    %2895 = vmatpush1.msra.mxu0 0.0
    %2896 = vmatprep.subr.mxu0 0.0
    %2897 = vmatpush1.msra.mxu0 0.0
    %2898 = vmatprep.subr.mxu0 0.0
    %2899 = vmatpush1.msra.mxu0 0.0
    %2900 = vmatprep.subr.mxu0 0.0
    %2901 = vmatpush1.msra.mxu0 0.0
    %2902 = vmatprep.subr.mxu0 0.0
    %2903 = vmatpush1.msra.mxu0 0.0
    %2904 = vmatprep.subr.mxu0 0.0
    %2905 = vmatpush1.msra.mxu0 0.0
    %2906 = vmatprep.subr.mxu0 0.0
    %2907 = vmatpush1.msra.mxu0 0.0
    %2908 = vmatprep.subr.mxu0 0.0
    %2909 = vmatpush1.msra.mxu0 0.0
    %2910 = vmatprep.subr.mxu0 0.0
    %2911 = vmatpush1.msra.mxu0 0.0
    %2912 = vmatprep.subr.mxu0 0.0
    %2913 = vmatpush1.msra.mxu0 0.0
    %2914 = vmatprep.subr.mxu0 0.0
    %2915 = vmatpush1.msra.mxu0 0.0
    %2916 = vmatprep.subr.mxu0 0.0
    %2917 = vmatpush1.msra.mxu0 0.0
    %2918 = vmatprep.subr.mxu0 0.0
    %2919 = vmatpush1.msra.mxu0 0.0
    %2920 = vmatprep.subr.mxu0 0.0
    %2921 = vmatpush1.msra.mxu0 0.0
    %2922 = vmatprep.subr.mxu0 0.0
    %2923 = vmatpush1.msra.mxu0 0.0
    %2924 = vmatprep.subr.mxu0 0.0
    %2925 = vmatpush1.msra.mxu0 0.0
    %2926 = vmatprep.subr.mxu0 0.0
    %2927 = vmatpush1.msra.mxu0 0.0
    %2928 = vmatprep.subr.mxu0 0.0
    %2929 = vmatpush1.msra.mxu0 0.0
    %2930 = vmatprep.mubr.f32.mxu0 0.0
    %2931 = vmatmul.mubr.f32.gmra.mrb[0].mxu0 %v2864
    %v2932 = vpop.f32.mrb[0].mxu0
    %v2933 = vadd.f32 0.0, %v2932
    %v2934 = vpop.f32.mrb[0].mxu0
    %2935 = vdwg.mxu0
    %v2937 = vsel %vm89, %v2568, 0
    %2939 = vmatprep.subr.mxu0 0.0
    %2940 = vmatpush1.msra.mxu0 %v2641
    %2941 = vmatprep.subr.mxu0 0.0
    %2942 = vmatpush1.msra.mxu0 0.0
    %2943 = vmatprep.subr.mxu0 0.0
    %2944 = vmatpush1.msra.mxu0 0.0
    %2945 = vmatprep.subr.mxu0 0.0
    %2946 = vmatpush1.msra.mxu0 0.0
    %2947 = vmatprep.subr.mxu0 0.0
    %2948 = vmatpush1.msra.mxu0 0.0
    %2949 = vmatprep.subr.mxu0 0.0
    %2950 = vmatpush1.msra.mxu0 0.0
    %2951 = vmatprep.subr.mxu0 0.0
    %2952 = vmatpush1.msra.mxu0 0.0
    %2953 = vmatprep.subr.mxu0 0.0
    %2954 = vmatpush1.msra.mxu0 0.0
    %2955 = vmatprep.subr.mxu0 0.0
    %2956 = vmatpush1.msra.mxu0 0.0
    %2957 = vmatprep.subr.mxu0 0.0
    %2958 = vmatpush1.msra.mxu0 0.0
    %2959 = vmatprep.subr.mxu0 0.0
    %2960 = vmatpush1.msra.mxu0 0.0
    %2961 = vmatprep.subr.mxu0 0.0
    %2962 = vmatpush1.msra.mxu0 0.0
    %2963 = vmatprep.subr.mxu0 0.0
    %2964 = vmatpush1.msra.mxu0 0.0
    %2965 = vmatprep.subr.mxu0 0.0
    %2966 = vmatpush1.msra.mxu0 0.0
    %2967 = vmatprep.subr.mxu0 0.0
    %2968 = vmatpush1.msra.mxu0 0.0
    %2969 = vmatprep.subr.mxu0 0.0
    %2970 = vmatpush1.msra.mxu0 0.0
    %2971 = vmatprep.subr.mxu0 0.0
    %2972 = vmatpush1.msra.mxu0 0.0
    %2973 = vmatprep.subr.mxu0 0.0
    %2974 = vmatpush1.msra.mxu0 0.0
    %2975 = vmatprep.subr.mxu0 0.0
    %2976 = vmatpush1.msra.mxu0 0.0
    %2977 = vmatprep.subr.mxu0 0.0
    %2978 = vmatpush1.msra.mxu0 0.0
    %2979 = vmatprep.subr.mxu0 0.0
    %2980 = vmatpush1.msra.mxu0 0.0
    %2981 = vmatprep.subr.mxu0 0.0
    %2982 = vmatpush1.msra.mxu0 0.0
    %2983 = vmatprep.subr.mxu0 0.0
    %2984 = vmatpush1.msra.mxu0 0.0
    %2985 = vmatprep.subr.mxu0 0.0
    %2986 = vmatpush1.msra.mxu0 0.0
    %2987 = vmatprep.subr.mxu0 0.0
    %2988 = vmatpush1.msra.mxu0 0.0
    %2989 = vmatprep.subr.mxu0 0.0
    %2990 = vmatpush1.msra.mxu0 0.0
    %2991 = vmatprep.subr.mxu0 0.0
    %2992 = vmatpush1.msra.mxu0 0.0
    %2993 = vmatprep.subr.mxu0 0.0
    %2994 = vmatpush1.msra.mxu0 0.0
    %2995 = vmatprep.subr.mxu0 0.0
    %2996 = vmatpush1.msra.mxu0 0.0
    %2997 = vmatprep.subr.mxu0 0.0
    %2998 = vmatpush1.msra.mxu0 0.0
    %2999 = vmatprep.subr.mxu0 0.0
    %3000 = vmatpush1.msra.mxu0 0.0
    %3001 = vmatprep.subr.mxu0 0.0
    %3002 = vmatpush1.msra.mxu0 0.0
    %3003 = vmatprep.mubr.f32.mxu0 0.0
    %3004 = vmatmul.mubr.f32.gmra.mrb[0].mxu0 %v2937
    %v3005 = vpop.f32.mrb[0].mxu0
    %v3006 = vadd.f32 0.0, %v3005
    %v3007 = vpop.f32.mrb[0].mxu0
    %3008 = vdwg.mxu0
    %v3010 = vsel %vm89, %v2714, 0
    %3012 = vmatprep.subr.mxu0 0.0
    %3013 = vmatpush1.msra.mxu0 %v2787
    %3014 = vmatprep.subr.mxu0 0.0
    %3015 = vmatpush1.msra.mxu0 0.0
    %3016 = vmatprep.subr.mxu0 0.0
    %3017 = vmatpush1.msra.mxu0 0.0
    %3018 = vmatprep.subr.mxu0 0.0
    %3019 = vmatpush1.msra.mxu0 0.0
    %3020 = vmatprep.subr.mxu0 0.0
    %3021 = vmatpush1.msra.mxu0 0.0
    %3022 = vmatprep.subr.mxu0 0.0
    %3023 = vmatpush1.msra.mxu0 0.0
    %3024 = vmatprep.subr.mxu0 0.0
    %3025 = vmatpush1.msra.mxu0 0.0
    %3026 = vmatprep.subr.mxu0 0.0
    %3027 = vmatpush1.msra.mxu0 0.0
    %3028 = vmatprep.subr.mxu0 0.0
    %3029 = vmatpush1.msra.mxu0 0.0
    %3030 = vmatprep.subr.mxu0 0.0
    %3031 = vmatpush1.msra.mxu0 0.0
    %3032 = vmatprep.subr.mxu0 0.0
    %3033 = vmatpush1.msra.mxu0 0.0
    %3034 = vmatprep.subr.mxu0 0.0
    %3035 = vmatpush1.msra.mxu0 0.0
    %3036 = vmatprep.subr.mxu0 0.0
    %3037 = vmatpush1.msra.mxu0 0.0
    %3038 = vmatprep.subr.mxu0 0.0
    %3039 = vmatpush1.msra.mxu0 0.0
    %3040 = vmatprep.subr.mxu0 0.0
    %3041 = vmatpush1.msra.mxu0 0.0
    %3042 = vmatprep.subr.mxu0 0.0
    %3043 = vmatpush1.msra.mxu0 0.0
    %3044 = vmatprep.subr.mxu0 0.0
    %3045 = vmatpush1.msra.mxu0 0.0
    %3046 = vmatprep.subr.mxu0 0.0
    %3047 = vmatpush1.msra.mxu0 0.0
    %3048 = vmatprep.subr.mxu0 0.0
    %3049 = vmatpush1.msra.mxu0 0.0
    %3050 = vmatprep.subr.mxu0 0.0
    %3051 = vmatpush1.msra.mxu0 0.0
    %3052 = vmatprep.subr.mxu0 0.0
    %3053 = vmatpush1.msra.mxu0 0.0
    %3054 = vmatprep.subr.mxu0 0.0
    %3055 = vmatpush1.msra.mxu0 0.0
    %3056 = vmatprep.subr.mxu0 0.0
    %3057 = vmatpush1.msra.mxu0 0.0
    %3058 = vmatprep.subr.mxu0 0.0
    %3059 = vmatpush1.msra.mxu0 0.0
    %3060 = vmatprep.subr.mxu0 0.0
    %3061 = vmatpush1.msra.mxu0 0.0
    %3062 = vmatprep.subr.mxu0 0.0
    %3063 = vmatpush1.msra.mxu0 0.0
    %3064 = vmatprep.subr.mxu0 0.0
    %3065 = vmatpush1.msra.mxu0 0.0
    %3066 = vmatprep.subr.mxu0 0.0
    %3067 = vmatpush1.msra.mxu0 0.0
    %3068 = vmatprep.subr.mxu0 0.0
    %3069 = vmatpush1.msra.mxu0 0.0
    %3070 = vmatprep.subr.mxu0 0.0
    %3071 = vmatpush1.msra.mxu0 0.0
    %3072 = vmatprep.subr.mxu0 0.0
    %3073 = vmatpush1.msra.mxu0 0.0
    %3074 = vmatprep.subr.mxu0 0.0
    %3075 = vmatpush1.msra.mxu0 0.0
    %3076 = vmatprep.mubr.f32.mxu0 0.0
    %3077 = vmatmul.mubr.f32.gmra.mrb[0].mxu0 %v3010
    %v3078 = vpop.f32.mrb[0].mxu0
    %v3079 = vadd.f32 0.0, %v3078
    %v3080 = vpop.f32.mrb[0].mxu0
    %3081 = vdwg.mxu0
    %v3083 = vsel %vm89, %v2860, 0
    %3085 = vmatprep.subr.mxu0 0.0
    %3086 = vmatpush1.msra.mxu0 %v1063
    %3087 = vmatprep.subr.mxu0 0.0
    %3088 = vmatpush1.msra.mxu0 0.0
    %3089 = vmatprep.subr.mxu0 0.0
    %3090 = vmatpush1.msra.mxu0 0.0
    %3091 = vmatprep.subr.mxu0 0.0
    %3092 = vmatpush1.msra.mxu0 0.0
    %3093 = vmatprep.subr.mxu0 0.0
    %3094 = vmatpush1.msra.mxu0 0.0
    %3095 = vmatprep.subr.mxu0 0.0
    %3096 = vmatpush1.msra.mxu0 0.0
    %3097 = vmatprep.subr.mxu0 0.0
    %3098 = vmatpush1.msra.mxu0 0.0
    %3099 = vmatprep.subr.mxu0 0.0
    %3100 = vmatpush1.msra.mxu0 0.0
    %3101 = vmatprep.subr.mxu0 0.0
    %3102 = vmatpush1.msra.mxu0 0.0
    %3103 = vmatprep.subr.mxu0 0.0
    %3104 = vmatpush1.msra.mxu0 0.0
    %3105 = vmatprep.subr.mxu0 0.0
    %3106 = vmatpush1.msra.mxu0 0.0
    %3107 = vmatprep.subr.mxu0 0.0
    %3108 = vmatpush1.msra.mxu0 0.0
    %3109 = vmatprep.subr.mxu0 0.0
    %3110 = vmatpush1.msra.mxu0 0.0
    %3111 = vmatprep.subr.mxu0 0.0
    %3112 = vmatpush1.msra.mxu0 0.0
    %3113 = vmatprep.subr.mxu0 0.0
    %3114 = vmatpush1.msra.mxu0 0.0
    %3115 = vmatprep.subr.mxu0 0.0
    %3116 = vmatpush1.msra.mxu0 0.0
    %3117 = vmatprep.subr.mxu0 0.0
    %3118 = vmatpush1.msra.mxu0 0.0
    %3119 = vmatprep.subr.mxu0 0.0
    %3120 = vmatpush1.msra.mxu0 0.0
    %3121 = vmatprep.subr.mxu0 0.0
    %3122 = vmatpush1.msra.mxu0 0.0
    %3123 = vmatprep.subr.mxu0 0.0
    %3124 = vmatpush1.msra.mxu0 0.0
    %3125 = vmatprep.subr.mxu0 0.0
    %3126 = vmatpush1.msra.mxu0 0.0
    %3127 = vmatprep.subr.mxu0 0.0
    %3128 = vmatpush1.msra.mxu0 0.0
    %3129 = vmatprep.subr.mxu0 0.0
    %3130 = vmatpush1.msra.mxu0 0.0
    %3131 = vmatprep.subr.mxu0 0.0
    %3132 = vmatpush1.msra.mxu0 0.0
    %3133 = vmatprep.subr.mxu0 0.0
    %3134 = vmatpush1.msra.mxu0 0.0
    %3135 = vmatprep.subr.mxu0 0.0
    %3136 = vmatpush1.msra.mxu0 0.0
    %3137 = vmatprep.subr.mxu0 0.0
    %3138 = vmatpush1.msra.mxu0 0.0
    %3139 = vmatprep.subr.mxu0 0.0
    %3140 = vmatpush1.msra.mxu0 0.0
    %3141 = vmatprep.subr.mxu0 0.0
    %3142 = vmatpush1.msra.mxu0 0.0
    %3143 = vmatprep.subr.mxu0 0.0
    %3144 = vmatpush1.msra.mxu0 0.0
    %3145 = vmatprep.subr.mxu0 0.0
    %3146 = vmatpush1.msra.mxu0 0.0
    %3147 = vmatprep.subr.mxu0 0.0
    %3148 = vmatpush1.msra.mxu0 0.0
    %3149 = vmatprep.mubr.f32.mxu0 0.0
    %3150 = vmatmul.mubr.f32.gmra.mrb[0].mxu0 %v3083
    %v3151 = vpop.f32.mrb[0].mxu0
    %v3152 = vadd.f32 0.0, %v3151
    %v3153 = vpop.f32.mrb[0].mxu0
    %3154 = vdwg.mxu0
    %v3156 = vsel %vm89, %v2933, 0
    %3158 = vmatprep.subr.mxu0 0.0
    %3159 = vmatpush1.msra.mxu0 %v1443
    %3160 = vmatprep.subr.mxu0 0.0
    %3161 = vmatpush1.msra.mxu0 0.0
    %3162 = vmatprep.subr.mxu0 0.0
    %3163 = vmatpush1.msra.mxu0 0.0
    %3164 = vmatprep.subr.mxu0 0.0
    %3165 = vmatpush1.msra.mxu0 0.0
    %3166 = vmatprep.subr.mxu0 0.0
    %3167 = vmatpush1.msra.mxu0 0.0
    %3168 = vmatprep.subr.mxu0 0.0
    %3169 = vmatpush1.msra.mxu0 0.0
    %3170 = vmatprep.subr.mxu0 0.0
    %3171 = vmatpush1.msra.mxu0 0.0
    %3172 = vmatprep.subr.mxu0 0.0
    %3173 = vmatpush1.msra.mxu0 0.0
    %3174 = vmatprep.subr.mxu0 0.0
    %3175 = vmatpush1.msra.mxu0 0.0
    %3176 = vmatprep.subr.mxu0 0.0
    %3177 = vmatpush1.msra.mxu0 0.0
    %3178 = vmatprep.subr.mxu0 0.0
    %3179 = vmatpush1.msra.mxu0 0.0
    %3180 = vmatprep.subr.mxu0 0.0
    %3181 = vmatpush1.msra.mxu0 0.0
    %3182 = vmatprep.subr.mxu0 0.0
    %3183 = vmatpush1.msra.mxu0 0.0
    %3184 = vmatprep.subr.mxu0 0.0
    %3185 = vmatpush1.msra.mxu0 0.0
    %3186 = vmatprep.subr.mxu0 0.0
    %3187 = vmatpush1.msra.mxu0 0.0
    %3188 = vmatprep.subr.mxu0 0.0
    %3189 = vmatpush1.msra.mxu0 0.0
    %3190 = vmatprep.subr.mxu0 0.0
    %3191 = vmatpush1.msra.mxu0 0.0
    %3192 = vmatprep.subr.mxu0 0.0
    %3193 = vmatpush1.msra.mxu0 0.0
    %3194 = vmatprep.subr.mxu0 0.0
    %3195 = vmatpush1.msra.mxu0 0.0
    %3196 = vmatprep.subr.mxu0 0.0
    %3197 = vmatpush1.msra.mxu0 0.0
    %3198 = vmatprep.subr.mxu0 0.0
    %3199 = vmatpush1.msra.mxu0 0.0
    %3200 = vmatprep.subr.mxu0 0.0
    %3201 = vmatpush1.msra.mxu0 0.0
    %3202 = vmatprep.subr.mxu0 0.0
    %3203 = vmatpush1.msra.mxu0 0.0
    %3204 = vmatprep.subr.mxu0 0.0
    %3205 = vmatpush1.msra.mxu0 0.0
    %3206 = vmatprep.subr.mxu0 0.0
    %3207 = vmatpush1.msra.mxu0 0.0
    %3208 = vmatprep.subr.mxu0 0.0
    %3209 = vmatpush1.msra.mxu0 0.0
    %3210 = vmatprep.subr.mxu0 0.0
    %3211 = vmatpush1.msra.mxu0 0.0
    %3212 = vmatprep.subr.mxu0 0.0
    %3213 = vmatpush1.msra.mxu0 0.0
    %3214 = vmatprep.subr.mxu0 0.0
    %3215 = vmatpush1.msra.mxu0 0.0
    %3216 = vmatprep.subr.mxu0 0.0
    %3217 = vmatpush1.msra.mxu0 0.0
    %3218 = vmatprep.subr.mxu0 0.0
    %3219 = vmatpush1.msra.mxu0 0.0
    %3220 = vmatprep.subr.mxu0 0.0
    %3221 = vmatpush1.msra.mxu0 0.0
    %3222 = vmatprep.mubr.f32.mxu0 0.0
    %3223 = vmatmul.mubr.f32.gmra.mrb[0].mxu0 %v3156
    %v3224 = vpop.f32.mrb[0].mxu0
    %v3225 = vadd.f32 0.0, %v3224
    %v3226 = vpop.f32.mrb[0].mxu0
    %3227 = vdwg.mxu0
    %v3229 = vsel %vm89, %v3006, 0
    %3231 = vmatprep.subr.mxu0 0.0
    %3232 = vmatpush1.msra.mxu0 %v1823
    %3233 = vmatprep.subr.mxu0 0.0
    %3234 = vmatpush1.msra.mxu0 0.0
    %3235 = vmatprep.subr.mxu0 0.0
    %3236 = vmatpush1.msra.mxu0 0.0
    %3237 = vmatprep.subr.mxu0 0.0
    %3238 = vmatpush1.msra.mxu0 0.0
    %3239 = vmatprep.subr.mxu0 0.0
    %3240 = vmatpush1.msra.mxu0 0.0
    %3241 = vmatprep.subr.mxu0 0.0
    %3242 = vmatpush1.msra.mxu0 0.0
    %3243 = vmatprep.subr.mxu0 0.0
    %3244 = vmatpush1.msra.mxu0 0.0
    %3245 = vmatprep.subr.mxu0 0.0
    %3246 = vmatpush1.msra.mxu0 0.0
    %3247 = vmatprep.subr.mxu0 0.0
    %3248 = vmatpush1.msra.mxu0 0.0
    %3249 = vmatprep.subr.mxu0 0.0
    %3250 = vmatpush1.msra.mxu0 0.0
    %3251 = vmatprep.subr.mxu0 0.0
    %3252 = vmatpush1.msra.mxu0 0.0
    %3253 = vmatprep.subr.mxu0 0.0
    %3254 = vmatpush1.msra.mxu0 0.0
    %3255 = vmatprep.subr.mxu0 0.0
    %3256 = vmatpush1.msra.mxu0 0.0
    %3257 = vmatprep.subr.mxu0 0.0
    %3258 = vmatpush1.msra.mxu0 0.0
    %3259 = vmatprep.subr.mxu0 0.0
    %3260 = vmatpush1.msra.mxu0 0.0
    %3261 = vmatprep.subr.mxu0 0.0
    %3262 = vmatpush1.msra.mxu0 0.0
    %3263 = vmatprep.subr.mxu0 0.0
    %3264 = vmatpush1.msra.mxu0 0.0
    %3265 = vmatprep.subr.mxu0 0.0
    %3266 = vmatpush1.msra.mxu0 0.0
    %3267 = vmatprep.subr.mxu0 0.0
    %3268 = vmatpush1.msra.mxu0 0.0
    %3269 = vmatprep.subr.mxu0 0.0
    %3270 = vmatpush1.msra.mxu0 0.0
    %3271 = vmatprep.subr.mxu0 0.0
    %3272 = vmatpush1.msra.mxu0 0.0
    %3273 = vmatprep.subr.mxu0 0.0
    %3274 = vmatpush1.msra.mxu0 0.0
    %3275 = vmatprep.subr.mxu0 0.0
    %3276 = vmatpush1.msra.mxu0 0.0
    %3277 = vmatprep.subr.mxu0 0.0
    %3278 = vmatpush1.msra.mxu0 0.0
    %3279 = vmatprep.subr.mxu0 0.0
    %3280 = vmatpush1.msra.mxu0 0.0
    %3281 = vmatprep.subr.mxu0 0.0
    %3282 = vmatpush1.msra.mxu0 0.0
    %3283 = vmatprep.subr.mxu0 0.0
    %3284 = vmatpush1.msra.mxu0 0.0
    %3285 = vmatprep.subr.mxu0 0.0
    %3286 = vmatpush1.msra.mxu0 0.0
    %3287 = vmatprep.subr.mxu0 0.0
    %3288 = vmatpush1.msra.mxu0 0.0
    %3289 = vmatprep.subr.mxu0 0.0
    %3290 = vmatpush1.msra.mxu0 0.0
    %3291 = vmatprep.subr.mxu0 0.0
    %3292 = vmatpush1.msra.mxu0 0.0
    %3293 = vmatprep.subr.mxu0 0.0
    %3294 = vmatpush1.msra.mxu0 0.0
    %3295 = vmatprep.mubr.f32.mxu0 0.0
    %3296 = vmatmul.mubr.f32.gmra.mrb[0].mxu0 %v3229
    %v3297 = vpop.f32.mrb[0].mxu0
    %v3298 = vadd.f32 0.0, %v3297
    %v3299 = vpop.f32.mrb[0].mxu0
    %3300 = vdwg.mxu0
    %v3302 = vsel %vm89, %v3079, 0
    %3304 = vmatprep.subr.mxu0 0.0
    %3305 = vmatpush1.msra.mxu0 %v2203
    %3306 = vmatprep.subr.mxu0 0.0
    %3307 = vmatpush1.msra.mxu0 0.0
    %3308 = vmatprep.subr.mxu0 0.0
    %3309 = vmatpush1.msra.mxu0 0.0
    %3310 = vmatprep.subr.mxu0 0.0
    %3311 = vmatpush1.msra.mxu0 0.0
    %3312 = vmatprep.subr.mxu0 0.0
    %3313 = vmatpush1.msra.mxu0 0.0
    %3314 = vmatprep.subr.mxu0 0.0
    %3315 = vmatpush1.msra.mxu0 0.0
    %3316 = vmatprep.subr.mxu0 0.0
    %3317 = vmatpush1.msra.mxu0 0.0
    %3318 = vmatprep.subr.mxu0 0.0
    %3319 = vmatpush1.msra.mxu0 0.0
    %3320 = vmatprep.subr.mxu0 0.0
    %3321 = vmatpush1.msra.mxu0 0.0
    %3322 = vmatprep.subr.mxu0 0.0
    %3323 = vmatpush1.msra.mxu0 0.0
    %3324 = vmatprep.subr.mxu0 0.0
    %3325 = vmatpush1.msra.mxu0 0.0
    %3326 = vmatprep.subr.mxu0 0.0
    %3327 = vmatpush1.msra.mxu0 0.0
    %3328 = vmatprep.subr.mxu0 0.0
    %3329 = vmatpush1.msra.mxu0 0.0
    %3330 = vmatprep.subr.mxu0 0.0
    %3331 = vmatpush1.msra.mxu0 0.0
    %3332 = vmatprep.subr.mxu0 0.0
    %3333 = vmatpush1.msra.mxu0 0.0
    %3334 = vmatprep.subr.mxu0 0.0
    %3335 = vmatpush1.msra.mxu0 0.0
    %3336 = vmatprep.subr.mxu0 0.0
    %3337 = vmatpush1.msra.mxu0 0.0
    %3338 = vmatprep.subr.mxu0 0.0
    %3339 = vmatpush1.msra.mxu0 0.0
    %3340 = vmatprep.subr.mxu0 0.0
    %3341 = vmatpush1.msra.mxu0 0.0
    %3342 = vmatprep.subr.mxu0 0.0
    %3343 = vmatpush1.msra.mxu0 0.0
    %3344 = vmatprep.subr.mxu0 0.0
    %3345 = vmatpush1.msra.mxu0 0.0
    %3346 = vmatprep.subr.mxu0 0.0
    %3347 = vmatpush1.msra.mxu0 0.0
    %3348 = vmatprep.subr.mxu0 0.0
    %3349 = vmatpush1.msra.mxu0 0.0
    %3350 = vmatprep.subr.mxu0 0.0
    %3351 = vmatpush1.msra.mxu0 0.0
    %3352 = vmatprep.subr.mxu0 0.0
    %3353 = vmatpush1.msra.mxu0 0.0
    %3354 = vmatprep.subr.mxu0 0.0
    %3355 = vmatpush1.msra.mxu0 0.0
    %3356 = vmatprep.subr.mxu0 0.0
    %3357 = vmatpush1.msra.mxu0 0.0
    %3358 = vmatprep.subr.mxu0 0.0
    %3359 = vmatpush1.msra.mxu0 0.0
    %3360 = vmatprep.subr.mxu0 0.0
    %3361 = vmatpush1.msra.mxu0 0.0
    %3362 = vmatprep.subr.mxu0 0.0
    %3363 = vmatpush1.msra.mxu0 0.0
    %3364 = vmatprep.subr.mxu0 0.0
    %3365 = vmatpush1.msra.mxu0 0.0
    %3366 = vmatprep.subr.mxu0 0.0
    %3367 = vmatpush1.msra.mxu0 0.0
    %3368 = vmatprep.mubr.f32.mxu0 0.0
    %3369 = vmatmul.mubr.f32.gmra.mrb[0].mxu0 %v3302
    %v3370 = vpop.f32.mrb[0].mxu0
    %v3371 = vadd.f32 0.0, %v3370
    %v3372 = vpop.f32.mrb[0].mxu0
    %3373 = vdwg.mxu0
    %v3375 = vsel %vm89, %v3152, 0
    %3377 = vmatprep.subr.mxu0 0.0
    %3378 = vmatpush1.msra.mxu0 %v163
    %3379 = vmatprep.subr.mxu0 0.0
    %3380 = vmatpush1.msra.mxu0 0.0
    %3381 = vmatprep.subr.mxu0 0.0
    %3382 = vmatpush1.msra.mxu0 0.0
    %3383 = vmatprep.subr.mxu0 0.0
    %3384 = vmatpush1.msra.mxu0 0.0
    %3385 = vmatprep.subr.mxu0 0.0
    %3386 = vmatpush1.msra.mxu0 0.0
    %3387 = vmatprep.subr.mxu0 0.0
    %3388 = vmatpush1.msra.mxu0 0.0
    %3389 = vmatprep.subr.mxu0 0.0
    %3390 = vmatpush1.msra.mxu0 0.0
    %3391 = vmatprep.subr.mxu0 0.0
    %3392 = vmatpush1.msra.mxu0 0.0
    %3393 = vmatprep.subr.mxu0 0.0
    %3394 = vmatpush1.msra.mxu0 0.0
    %3395 = vmatprep.subr.mxu0 0.0
    %3396 = vmatpush1.msra.mxu0 0.0
    %3397 = vmatprep.subr.mxu0 0.0
    %3398 = vmatpush1.msra.mxu0 0.0
    %3399 = vmatprep.subr.mxu0 0.0
    %3400 = vmatpush1.msra.mxu0 0.0
    %3401 = vmatprep.subr.mxu0 0.0
    %3402 = vmatpush1.msra.mxu0 0.0
    %3403 = vmatprep.subr.mxu0 0.0
    %3404 = vmatpush1.msra.mxu0 0.0
    %3405 = vmatprep.subr.mxu0 0.0
    %3406 = vmatpush1.msra.mxu0 0.0
    %3407 = vmatprep.subr.mxu0 0.0
    %3408 = vmatpush1.msra.mxu0 0.0
    %3409 = vmatprep.subr.mxu0 0.0
    %3410 = vmatpush1.msra.mxu0 0.0
    %3411 = vmatprep.subr.mxu0 0.0
    %3412 = vmatpush1.msra.mxu0 0.0
    %3413 = vmatprep.subr.mxu0 0.0
    %3414 = vmatpush1.msra.mxu0 0.0
    %3415 = vmatprep.subr.mxu0 0.0
    %3416 = vmatpush1.msra.mxu0 0.0
    %3417 = vmatprep.subr.mxu0 0.0
    %3418 = vmatpush1.msra.mxu0 0.0
    %3419 = vmatprep.subr.mxu0 0.0
    %3420 = vmatpush1.msra.mxu0 0.0
    %3421 = vmatprep.subr.mxu0 0.0
    %3422 = vmatpush1.msra.mxu0 0.0
    %3423 = vmatprep.subr.mxu0 0.0
    %3424 = vmatpush1.msra.mxu0 0.0
    %3425 = vmatprep.subr.mxu0 0.0
    %3426 = vmatpush1.msra.mxu0 0.0
    %3427 = vmatprep.subr.mxu0 0.0
    %3428 = vmatpush1.msra.mxu0 0.0
    %3429 = vmatprep.subr.mxu0 0.0
    %3430 = vmatpush1.msra.mxu0 0.0
    %3431 = vmatprep.subr.mxu0 0.0
    %3432 = vmatpush1.msra.mxu0 0.0
    %3433 = vmatprep.subr.mxu0 0.0
    %3434 = vmatpush1.msra.mxu0 0.0
    %3435 = vmatprep.subr.mxu0 0.0
    %3436 = vmatpush1.msra.mxu0 0.0
    %3437 = vmatprep.subr.mxu0 0.0
    %3438 = vmatpush1.msra.mxu0 0.0
    %3439 = vmatprep.subr.mxu0 0.0
    %3440 = vmatpush1.msra.mxu0 0.0
    %3441 = vmatprep.mubr.f32.mxu0 0.0
    %3442 = vmatmul.mubr.f32.gmra.mrb[0].mxu0 %v3375
    %v3443 = vpop.f32.mrb[0].mxu0
    %v3444 = vadd.f32 0.0, %v3443
    %v3445 = vpop.f32.mrb[0].mxu0
    %3446 = vdwg.mxu0
    %v3448 = vsel %vm89, %v3225, 0
    %3450 = vmatprep.subr.mxu0 0.0
    %3451 = vmatpush1.msra.mxu0 %v239
    %3452 = vmatprep.subr.mxu0 0.0
    %3453 = vmatpush1.msra.mxu0 0.0
    %3454 = vmatprep.subr.mxu0 0.0
    %3455 = vmatpush1.msra.mxu0 0.0
    %3456 = vmatprep.subr.mxu0 0.0
    %3457 = vmatpush1.msra.mxu0 0.0
    %3458 = vmatprep.subr.mxu0 0.0
    %3459 = vmatpush1.msra.mxu0 0.0
    %3460 = vmatprep.subr.mxu0 0.0
    %3461 = vmatpush1.msra.mxu0 0.0
    %3462 = vmatprep.subr.mxu0 0.0
    %3463 = vmatpush1.msra.mxu0 0.0
    %3464 = vmatprep.subr.mxu0 0.0
    %3465 = vmatpush1.msra.mxu0 0.0
    %3466 = vmatprep.subr.mxu0 0.0
    %3467 = vmatpush1.msra.mxu0 0.0
    %3468 = vmatprep.subr.mxu0 0.0
    %3469 = vmatpush1.msra.mxu0 0.0
    %3470 = vmatprep.subr.mxu0 0.0
    %3471 = vmatpush1.msra.mxu0 0.0
    %3472 = vmatprep.subr.mxu0 0.0
    %3473 = vmatpush1.msra.mxu0 0.0
    %3474 = vmatprep.subr.mxu0 0.0
    %3475 = vmatpush1.msra.mxu0 0.0
    %3476 = vmatprep.subr.mxu0 0.0
    %3477 = vmatpush1.msra.mxu0 0.0
    %3478 = vmatprep.subr.mxu0 0.0
    %3479 = vmatpush1.msra.mxu0 0.0
    %3480 = vmatprep.subr.mxu0 0.0
    %3481 = vmatpush1.msra.mxu0 0.0
    %3482 = vmatprep.subr.mxu0 0.0
    %3483 = vmatpush1.msra.mxu0 0.0
    %3484 = vmatprep.subr.mxu0 0.0
    %3485 = vmatpush1.msra.mxu0 0.0
    %3486 = vmatprep.subr.mxu0 0.0
    %3487 = vmatpush1.msra.mxu0 0.0
    %3488 = vmatprep.subr.mxu0 0.0
    %3489 = vmatpush1.msra.mxu0 0.0
    %3490 = vmatprep.subr.mxu0 0.0
    %3491 = vmatpush1.msra.mxu0 0.0
    %3492 = vmatprep.subr.mxu0 0.0
    %3493 = vmatpush1.msra.mxu0 0.0
    %3494 = vmatprep.subr.mxu0 0.0
    %3495 = vmatpush1.msra.mxu0 0.0
    %3496 = vmatprep.subr.mxu0 0.0
    %3497 = vmatpush1.msra.mxu0 0.0
    %3498 = vmatprep.subr.mxu0 0.0
    %3499 = vmatpush1.msra.mxu0 0.0
    %3500 = vmatprep.subr.mxu0 0.0
    %3501 = vmatpush1.msra.mxu0 0.0
    %3502 = vmatprep.subr.mxu0 0.0
    %3503 = vmatpush1.msra.mxu0 0.0
    %3504 = vmatprep.subr.mxu0 0.0
    %3505 = vmatpush1.msra.mxu0 0.0
    %3506 = vmatprep.subr.mxu0 0.0
    %3507 = vmatpush1.msra.mxu0 0.0
    %3508 = vmatprep.subr.mxu0 0.0
    %3509 = vmatpush1.msra.mxu0 0.0
    %3510 = vmatprep.subr.mxu0 0.0
    %3511 = vmatpush1.msra.mxu0 0.0
    %3512 = vmatprep.subr.mxu0 0.0
    %3513 = vmatpush1.msra.mxu0 0.0
    %3514 = vmatprep.mubr.f32.mxu0 0.0
    %3515 = vmatmul.mubr.f32.gmra.mrb[0].mxu0 %v3448
    %v3516 = vpop.f32.mrb[0].mxu0
    %v3517 = vadd.f32 0.0, %v3516
    %v3518 = vpop.f32.mrb[0].mxu0
    %3519 = vdwg.mxu0
    %v3521 = vsel %vm89, %v3298, 0
    %3523 = vmatprep.subr.mxu0 0.0
    %3524 = vmatpush1.msra.mxu0 %v315
    %3525 = vmatprep.subr.mxu0 0.0
    %3526 = vmatpush1.msra.mxu0 0.0
    %3527 = vmatprep.subr.mxu0 0.0
    %3528 = vmatpush1.msra.mxu0 0.0
    %3529 = vmatprep.subr.mxu0 0.0
    %3530 = vmatpush1.msra.mxu0 0.0
    %3531 = vmatprep.subr.mxu0 0.0
    %3532 = vmatpush1.msra.mxu0 0.0
    %3533 = vmatprep.subr.mxu0 0.0
    %3534 = vmatpush1.msra.mxu0 0.0
    %3535 = vmatprep.subr.mxu0 0.0
    %3536 = vmatpush1.msra.mxu0 0.0
    %3537 = vmatprep.subr.mxu0 0.0
    %3538 = vmatpush1.msra.mxu0 0.0
    %3539 = vmatprep.subr.mxu0 0.0
    %3540 = vmatpush1.msra.mxu0 0.0
    %3541 = vmatprep.subr.mxu0 0.0
    %3542 = vmatpush1.msra.mxu0 0.0
    %3543 = vmatprep.subr.mxu0 0.0
    %3544 = vmatpush1.msra.mxu0 0.0
    %3545 = vmatprep.subr.mxu0 0.0
    %3546 = vmatpush1.msra.mxu0 0.0
    %3547 = vmatprep.subr.mxu0 0.0
    %3548 = vmatpush1.msra.mxu0 0.0
    %3549 = vmatprep.subr.mxu0 0.0
    %3550 = vmatpush1.msra.mxu0 0.0
    %3551 = vmatprep.subr.mxu0 0.0
    %3552 = vmatpush1.msra.mxu0 0.0
    %3553 = vmatprep.subr.mxu0 0.0
    %3554 = vmatpush1.msra.mxu0 0.0
    %3555 = vmatprep.subr.mxu0 0.0
    %3556 = vmatpush1.msra.mxu0 0.0
    %3557 = vmatprep.subr.mxu0 0.0
    %3558 = vmatpush1.msra.mxu0 0.0
    %3559 = vmatprep.subr.mxu0 0.0
    %3560 = vmatpush1.msra.mxu0 0.0
    %3561 = vmatprep.subr.mxu0 0.0
    %3562 = vmatpush1.msra.mxu0 0.0
    %3563 = vmatprep.subr.mxu0 0.0
    %3564 = vmatpush1.msra.mxu0 0.0
    %3565 = vmatprep.subr.mxu0 0.0
    %3566 = vmatpush1.msra.mxu0 0.0
    %3567 = vmatprep.subr.mxu0 0.0
    %3568 = vmatpush1.msra.mxu0 0.0
    %3569 = vmatprep.subr.mxu0 0.0
    %3570 = vmatpush1.msra.mxu0 0.0
    %3571 = vmatprep.subr.mxu0 0.0
    %3572 = vmatpush1.msra.mxu0 0.0
    %3573 = vmatprep.subr.mxu0 0.0
    %3574 = vmatpush1.msra.mxu0 0.0
    %3575 = vmatprep.subr.mxu0 0.0
    %3576 = vmatpush1.msra.mxu0 0.0
    %3577 = vmatprep.subr.mxu0 0.0
    %3578 = vmatpush1.msra.mxu0 0.0
    %3579 = vmatprep.subr.mxu0 0.0
    %3580 = vmatpush1.msra.mxu0 0.0
    %3581 = vmatprep.subr.mxu0 0.0
    %3582 = vmatpush1.msra.mxu0 0.0
    %3583 = vmatprep.subr.mxu0 0.0
    %3584 = vmatpush1.msra.mxu0 0.0
    %3585 = vmatprep.subr.mxu0 0.0
    %3586 = vmatpush1.msra.mxu0 0.0
    %3587 = vmatprep.mubr.f32.mxu0 0.0
    %3588 = vmatmul.mubr.f32.gmra.mrb[0].mxu0 %v3521
    %v3589 = vpop.f32.mrb[0].mxu0
    %v3590 = vadd.f32 0.0, %v3589
    %v3591 = vpop.f32.mrb[0].mxu0
    %3592 = vdwg.mxu0
    %v3594 = vsel %vm89, %v3371, 0
    %3596 = vmatprep.subr.mxu0 0.0
    %3597 = vmatpush1.msra.mxu0 %v391
    %3598 = vmatprep.subr.mxu0 0.0
    %3599 = vmatpush1.msra.mxu0 0.0
    %3600 = vmatprep.subr.mxu0 0.0
    %3601 = vmatpush1.msra.mxu0 0.0
    %3602 = vmatprep.subr.mxu0 0.0
    %3603 = vmatpush1.msra.mxu0 0.0
    %3604 = vmatprep.subr.mxu0 0.0
    %3605 = vmatpush1.msra.mxu0 0.0
    %3606 = vmatprep.subr.mxu0 0.0
    %3607 = vmatpush1.msra.mxu0 0.0
    %3608 = vmatprep.subr.mxu0 0.0
    %3609 = vmatpush1.msra.mxu0 0.0
    %3610 = vmatprep.subr.mxu0 0.0
    %3611 = vmatpush1.msra.mxu0 0.0
    %3612 = vmatprep.subr.mxu0 0.0
    %3613 = vmatpush1.msra.mxu0 0.0
    %3614 = vmatprep.subr.mxu0 0.0
    %3615 = vmatpush1.msra.mxu0 0.0
    %3616 = vmatprep.subr.mxu0 0.0
    %3617 = vmatpush1.msra.mxu0 0.0
    %3618 = vmatprep.subr.mxu0 0.0
    %3619 = vmatpush1.msra.mxu0 0.0
    %3620 = vmatprep.subr.mxu0 0.0
    %3621 = vmatpush1.msra.mxu0 0.0
    %3622 = vmatprep.subr.mxu0 0.0
    %3623 = vmatpush1.msra.mxu0 0.0
    %3624 = vmatprep.subr.mxu0 0.0
    %3625 = vmatpush1.msra.mxu0 0.0
    %3626 = vmatprep.subr.mxu0 0.0
    %3627 = vmatpush1.msra.mxu0 0.0
    %3628 = vmatprep.subr.mxu0 0.0
    %3629 = vmatpush1.msra.mxu0 0.0
    %3630 = vmatprep.subr.mxu0 0.0
    %3631 = vmatpush1.msra.mxu0 0.0
    %3632 = vmatprep.subr.mxu0 0.0
    %3633 = vmatpush1.msra.mxu0 0.0
    %3634 = vmatprep.subr.mxu0 0.0
    %3635 = vmatpush1.msra.mxu0 0.0
    %3636 = vmatprep.subr.mxu0 0.0
    %3637 = vmatpush1.msra.mxu0 0.0
    %3638 = vmatprep.subr.mxu0 0.0
    %3639 = vmatpush1.msra.mxu0 0.0
    %3640 = vmatprep.subr.mxu0 0.0
    %3641 = vmatpush1.msra.mxu0 0.0
    %3642 = vmatprep.subr.mxu0 0.0
    %3643 = vmatpush1.msra.mxu0 0.0
    %3644 = vmatprep.subr.mxu0 0.0
    %3645 = vmatpush1.msra.mxu0 0.0
    %3646 = vmatprep.subr.mxu0 0.0
    %3647 = vmatpush1.msra.mxu0 0.0
    %3648 = vmatprep.subr.mxu0 0.0
    %3649 = vmatpush1.msra.mxu0 0.0
    %3650 = vmatprep.subr.mxu0 0.0
    %3651 = vmatpush1.msra.mxu0 0.0
    %3652 = vmatprep.subr.mxu0 0.0
    %3653 = vmatpush1.msra.mxu0 0.0
    %3654 = vmatprep.subr.mxu0 0.0
    %3655 = vmatpush1.msra.mxu0 0.0
    %3656 = vmatprep.subr.mxu0 0.0
    %3657 = vmatpush1.msra.mxu0 0.0
    %3658 = vmatprep.subr.mxu0 0.0
    %3659 = vmatpush1.msra.mxu0 0.0
    %3660 = vmatprep.mubr.f32.mxu0 0.0
    %3661 = vmatmul.mubr.f32.gmra.mrb[0].mxu0 %v3594
    %v3662 = vpop.f32.mrb[0].mxu0
    %v3663 = vadd.f32 0.0, %v3662
    %v3664 = vpop.f32.mrb[0].mxu0
    %3665 = vdwg.mxu0
    %v3667 = vsel %vm89, %v3444, 0
    %3669 = vmatprep.subr.mxu0 0.0
    %3670 = vmatpush1.xpose.msra.mxu0 %v3375
    %3671 = vmatprep.subr.mxu0 0.0
    %3672 = vmatpush1.xpose.msra.mxu0 0.0
    %3673 = vmatprep.subr.mxu0 0.0
    %3674 = vmatpush1.xpose.msra.mxu0 0.0
    %3675 = vmatprep.subr.mxu0 0.0
    %3676 = vmatpush1.xpose.msra.mxu0 0.0
    %3677 = vmatprep.subr.mxu0 0.0
    %3678 = vmatpush1.xpose.msra.mxu0 0.0
    %3679 = vmatprep.subr.mxu0 0.0
    %3680 = vmatpush1.xpose.msra.mxu0 0.0
    %3681 = vmatprep.subr.mxu0 0.0
    %3682 = vmatpush1.xpose.msra.mxu0 0.0
    %3683 = vmatprep.subr.mxu0 0.0
    %3684 = vmatpush1.xpose.msra.mxu0 0.0
    %3685 = vmatprep.subr.mxu0 0.0
    %3686 = vmatpush1.xpose.msra.mxu0 0.0
    %3687 = vmatprep.subr.mxu0 0.0
    %3688 = vmatpush1.xpose.msra.mxu0 0.0
    %3689 = vmatprep.subr.mxu0 0.0
    %3690 = vmatpush1.xpose.msra.mxu0 0.0
    %3691 = vmatprep.subr.mxu0 0.0
    %3692 = vmatpush1.xpose.msra.mxu0 0.0
    %3693 = vmatprep.subr.mxu0 0.0
    %3694 = vmatpush1.xpose.msra.mxu0 0.0
    %3695 = vmatprep.subr.mxu0 0.0
    %3696 = vmatpush1.xpose.msra.mxu0 0.0
    %3697 = vmatprep.subr.mxu0 0.0
    %3698 = vmatpush1.xpose.msra.mxu0 0.0
    %3699 = vmatprep.subr.mxu0 0.0
    %3700 = vmatpush1.xpose.msra.mxu0 0.0
    %3701 = vmatprep.subr.mxu0 0.0
    %3702 = vmatpush1.xpose.msra.mxu0 0.0
    %3703 = vmatprep.subr.mxu0 0.0
    %3704 = vmatpush1.xpose.msra.mxu0 0.0
    %3705 = vmatprep.subr.mxu0 0.0
    %3706 = vmatpush1.xpose.msra.mxu0 0.0
    %3707 = vmatprep.subr.mxu0 0.0
    %3708 = vmatpush1.xpose.msra.mxu0 0.0
    %3709 = vmatprep.subr.mxu0 0.0
    %3710 = vmatpush1.xpose.msra.mxu0 0.0
    %3711 = vmatprep.subr.mxu0 0.0
    %3712 = vmatpush1.xpose.msra.mxu0 0.0
    %3713 = vmatprep.subr.mxu0 0.0
    %3714 = vmatpush1.xpose.msra.mxu0 0.0
    %3715 = vmatprep.subr.mxu0 0.0
    %3716 = vmatpush1.xpose.msra.mxu0 0.0
    %3717 = vmatprep.subr.mxu0 0.0
    %3718 = vmatpush1.xpose.msra.mxu0 0.0
    %3719 = vmatprep.subr.mxu0 0.0
    %3720 = vmatpush1.xpose.msra.mxu0 0.0
    %3721 = vmatprep.subr.mxu0 0.0
    %3722 = vmatpush1.xpose.msra.mxu0 0.0
    %3723 = vmatprep.subr.mxu0 0.0
    %3724 = vmatpush1.xpose.msra.mxu0 0.0
    %3725 = vmatprep.subr.mxu0 0.0
    %3726 = vmatpush1.xpose.msra.mxu0 0.0
    %3727 = vmatprep.subr.mxu0 0.0
    %3728 = vmatpush1.xpose.msra.mxu0 0.0
    %3729 = vmatprep.subr.mxu0 0.0
    %3730 = vmatpush1.xpose.msra.mxu0 0.0
    %3731 = vmatprep.subr.mxu0 0.0
    %3732 = vmatpush1.xpose.msra.mxu0 0.0
    %3733 = vmatprep.mubr.f32.mxu0 0.0
    %3734 = vmatmul.mubr.f32.gmra.mrb[0].mxu0 %v3667
    %v3735 = vpop.f32.mrb[0].mxu0
    %v3736 = vadd.f32 0.0, %v3735
    %v3737 = vpop.f32.mrb[0].mxu0
    %3738 = vdwg.mxu0
    %v3740 = vsel %vm89, %v3517, 0
    %3742 = vmatprep.subr.mxu0 0.0
    %3743 = vmatpush1.xpose.msra.mxu0 %v3448
    %3744 = vmatprep.subr.mxu0 0.0
    %3745 = vmatpush1.xpose.msra.mxu0 0.0
    %3746 = vmatprep.subr.mxu0 0.0
    %3747 = vmatpush1.xpose.msra.mxu0 0.0
    %3748 = vmatprep.subr.mxu0 0.0
    %3749 = vmatpush1.xpose.msra.mxu0 0.0
    %3750 = vmatprep.subr.mxu0 0.0
    %3751 = vmatpush1.xpose.msra.mxu0 0.0
    %3752 = vmatprep.subr.mxu0 0.0
    %3753 = vmatpush1.xpose.msra.mxu0 0.0
    %3754 = vmatprep.subr.mxu0 0.0
    %3755 = vmatpush1.xpose.msra.mxu0 0.0
    %3756 = vmatprep.subr.mxu0 0.0
    %3757 = vmatpush1.xpose.msra.mxu0 0.0
    %3758 = vmatprep.subr.mxu0 0.0
    %3759 = vmatpush1.xpose.msra.mxu0 0.0
    %3760 = vmatprep.subr.mxu0 0.0
    %3761 = vmatpush1.xpose.msra.mxu0 0.0
    %3762 = vmatprep.subr.mxu0 0.0
    %3763 = vmatpush1.xpose.msra.mxu0 0.0
    %3764 = vmatprep.subr.mxu0 0.0
    %3765 = vmatpush1.xpose.msra.mxu0 0.0
    %3766 = vmatprep.subr.mxu0 0.0
    %3767 = vmatpush1.xpose.msra.mxu0 0.0
    %3768 = vmatprep.subr.mxu0 0.0
    %3769 = vmatpush1.xpose.msra.mxu0 0.0
    %3770 = vmatprep.subr.mxu0 0.0
    %3771 = vmatpush1.xpose.msra.mxu0 0.0
    %3772 = vmatprep.subr.mxu0 0.0
    %3773 = vmatpush1.xpose.msra.mxu0 0.0
    %3774 = vmatprep.subr.mxu0 0.0
    %3775 = vmatpush1.xpose.msra.mxu0 0.0
    %3776 = vmatprep.subr.mxu0 0.0
    %3777 = vmatpush1.xpose.msra.mxu0 0.0
    %3778 = vmatprep.subr.mxu0 0.0
    %3779 = vmatpush1.xpose.msra.mxu0 0.0
    %3780 = vmatprep.subr.mxu0 0.0
    %3781 = vmatpush1.xpose.msra.mxu0 0.0
    %3782 = vmatprep.subr.mxu0 0.0
    %3783 = vmatpush1.xpose.msra.mxu0 0.0
    %3784 = vmatprep.subr.mxu0 0.0
    %3785 = vmatpush1.xpose.msra.mxu0 0.0
    %3786 = vmatprep.subr.mxu0 0.0
    %3787 = vmatpush1.xpose.msra.mxu0 0.0
    %3788 = vmatprep.subr.mxu0 0.0
    %3789 = vmatpush1.xpose.msra.mxu0 0.0
    %3790 = vmatprep.subr.mxu0 0.0
    %3791 = vmatpush1.xpose.msra.mxu0 0.0
    %3792 = vmatprep.subr.mxu0 0.0
    %3793 = vmatpush1.xpose.msra.mxu0 0.0
    %3794 = vmatprep.subr.mxu0 0.0
    %3795 = vmatpush1.xpose.msra.mxu0 0.0
    %3796 = vmatprep.subr.mxu0 0.0
    %3797 = vmatpush1.xpose.msra.mxu0 0.0
    %3798 = vmatprep.subr.mxu0 0.0
    %3799 = vmatpush1.xpose.msra.mxu0 0.0
    %3800 = vmatprep.subr.mxu0 0.0
    %3801 = vmatpush1.xpose.msra.mxu0 0.0
    %3802 = vmatprep.subr.mxu0 0.0
    %3803 = vmatpush1.xpose.msra.mxu0 0.0
    %3804 = vmatprep.subr.mxu0 0.0
    %3805 = vmatpush1.xpose.msra.mxu0 0.0
    %3806 = vmatprep.mubr.f32.mxu0 0.0
    %3807 = vmatmul.mubr.f32.gmra.mrb[0].mxu0 %v3740
    %v3808 = vpop.f32.mrb[0].mxu0
    %v3809 = vadd.f32 0.0, %v3808
    %v3810 = vpop.f32.mrb[0].mxu0
    %3811 = vdwg.mxu0
    %v3813 = vsel %vm89, %v3590, 0
    %3815 = vmatprep.subr.mxu0 0.0
    %3816 = vmatpush1.xpose.msra.mxu0 %v3521
    %3817 = vmatprep.subr.mxu0 0.0
    %3818 = vmatpush1.xpose.msra.mxu0 0.0
    %3819 = vmatprep.subr.mxu0 0.0
    %3820 = vmatpush1.xpose.msra.mxu0 0.0
    %3821 = vmatprep.subr.mxu0 0.0
    %3822 = vmatpush1.xpose.msra.mxu0 0.0
    %3823 = vmatprep.subr.mxu0 0.0
    %3824 = vmatpush1.xpose.msra.mxu0 0.0
    %3825 = vmatprep.subr.mxu0 0.0
    %3826 = vmatpush1.xpose.msra.mxu0 0.0
    %3827 = vmatprep.subr.mxu0 0.0
    %3828 = vmatpush1.xpose.msra.mxu0 0.0
    %3829 = vmatprep.subr.mxu0 0.0
    %3830 = vmatpush1.xpose.msra.mxu0 0.0
    %3831 = vmatprep.subr.mxu0 0.0
    %3832 = vmatpush1.xpose.msra.mxu0 0.0
    %3833 = vmatprep.subr.mxu0 0.0
    %3834 = vmatpush1.xpose.msra.mxu0 0.0
    %3835 = vmatprep.subr.mxu0 0.0
    %3836 = vmatpush1.xpose.msra.mxu0 0.0
    %3837 = vmatprep.subr.mxu0 0.0
    %3838 = vmatpush1.xpose.msra.mxu0 0.0
    %3839 = vmatprep.subr.mxu0 0.0
    %3840 = vmatpush1.xpose.msra.mxu0 0.0
    %3841 = vmatprep.subr.mxu0 0.0
    %3842 = vmatpush1.xpose.msra.mxu0 0.0
    %3843 = vmatprep.subr.mxu0 0.0
    %3844 = vmatpush1.xpose.msra.mxu0 0.0
    %3845 = vmatprep.subr.mxu0 0.0
    %3846 = vmatpush1.xpose.msra.mxu0 0.0
    %3847 = vmatprep.subr.mxu0 0.0
    %3848 = vmatpush1.xpose.msra.mxu0 0.0
    %3849 = vmatprep.subr.mxu0 0.0
    %3850 = vmatpush1.xpose.msra.mxu0 0.0
    %3851 = vmatprep.subr.mxu0 0.0
    %3852 = vmatpush1.xpose.msra.mxu0 0.0
    %3853 = vmatprep.subr.mxu0 0.0
    %3854 = vmatpush1.xpose.msra.mxu0 0.0
    %3855 = vmatprep.subr.mxu0 0.0
    %3856 = vmatpush1.xpose.msra.mxu0 0.0
    %3857 = vmatprep.subr.mxu0 0.0
    %3858 = vmatpush1.xpose.msra.mxu0 0.0
    %3859 = vmatprep.subr.mxu0 0.0
    %3860 = vmatpush1.xpose.msra.mxu0 0.0
    %3861 = vmatprep.subr.mxu0 0.0
    %3862 = vmatpush1.xpose.msra.mxu0 0.0
    %3863 = vmatprep.subr.mxu0 0.0
    %3864 = vmatpush1.xpose.msra.mxu0 0.0
    %3865 = vmatprep.subr.mxu0 0.0
    %3866 = vmatpush1.xpose.msra.mxu0 0.0
    %3867 = vmatprep.subr.mxu0 0.0
    %3868 = vmatpush1.xpose.msra.mxu0 0.0
    %3869 = vmatprep.subr.mxu0 0.0
    %3870 = vmatpush1.xpose.msra.mxu0 0.0
    %3871 = vmatprep.subr.mxu0 0.0
    %3872 = vmatpush1.xpose.msra.mxu0 0.0
    %3873 = vmatprep.subr.mxu0 0.0
    %3874 = vmatpush1.xpose.msra.mxu0 0.0
    %3875 = vmatprep.subr.mxu0 0.0
    %3876 = vmatpush1.xpose.msra.mxu0 0.0
    %3877 = vmatprep.subr.mxu0 0.0
    %3878 = vmatpush1.xpose.msra.mxu0 0.0
    %3879 = vmatprep.mubr.f32.mxu0 0.0
    %3880 = vmatmul.mubr.f32.gmra.mrb[0].mxu0 %v3813
    %v3881 = vpop.f32.mrb[0].mxu0
    %v3882 = vadd.f32 0.0, %v3881
    %v3883 = vpop.f32.mrb[0].mxu0
    %3884 = vdwg.mxu0
    %v3886 = vsel %vm89, %v3663, 0
    %3888 = vmatprep.subr.mxu0 0.0
    %3889 = vmatpush1.xpose.msra.mxu0 %v3594
    %3890 = vmatprep.subr.mxu0 0.0
    %3891 = vmatpush1.xpose.msra.mxu0 0.0
    %3892 = vmatprep.subr.mxu0 0.0
    %3893 = vmatpush1.xpose.msra.mxu0 0.0
    %3894 = vmatprep.subr.mxu0 0.0
    %3895 = vmatpush1.xpose.msra.mxu0 0.0
    %3896 = vmatprep.subr.mxu0 0.0
    %3897 = vmatpush1.xpose.msra.mxu0 0.0
    %3898 = vmatprep.subr.mxu0 0.0
    %3899 = vmatpush1.xpose.msra.mxu0 0.0
    %3900 = vmatprep.subr.mxu0 0.0
    %3901 = vmatpush1.xpose.msra.mxu0 0.0
    %3902 = vmatprep.subr.mxu0 0.0
    %3903 = vmatpush1.xpose.msra.mxu0 0.0
    %3904 = vmatprep.subr.mxu0 0.0
    %3905 = vmatpush1.xpose.msra.mxu0 0.0
    %3906 = vmatprep.subr.mxu0 0.0
    %3907 = vmatpush1.xpose.msra.mxu0 0.0
    %3908 = vmatprep.subr.mxu0 0.0
    %3909 = vmatpush1.xpose.msra.mxu0 0.0
    %3910 = vmatprep.subr.mxu0 0.0
    %3911 = vmatpush1.xpose.msra.mxu0 0.0
    %3912 = vmatprep.subr.mxu0 0.0
    %3913 = vmatpush1.xpose.msra.mxu0 0.0
    %3914 = vmatprep.subr.mxu0 0.0
    %3915 = vmatpush1.xpose.msra.mxu0 0.0
    %3916 = vmatprep.subr.mxu0 0.0
    %3917 = vmatpush1.xpose.msra.mxu0 0.0
    %3918 = vmatprep.subr.mxu0 0.0
    %3919 = vmatpush1.xpose.msra.mxu0 0.0
    %3920 = vmatprep.subr.mxu0 0.0
    %3921 = vmatpush1.xpose.msra.mxu0 0.0
    %3922 = vmatprep.subr.mxu0 0.0
    %3923 = vmatpush1.xpose.msra.mxu0 0.0
    %3924 = vmatprep.subr.mxu0 0.0
    %3925 = vmatpush1.xpose.msra.mxu0 0.0
    %3926 = vmatprep.subr.mxu0 0.0
    %3927 = vmatpush1.xpose.msra.mxu0 0.0
    %3928 = vmatprep.subr.mxu0 0.0
    %3929 = vmatpush1.xpose.msra.mxu0 0.0
    %3930 = vmatprep.subr.mxu0 0.0
    %3931 = vmatpush1.xpose.msra.mxu0 0.0
    %3932 = vmatprep.subr.mxu0 0.0
    %3933 = vmatpush1.xpose.msra.mxu0 0.0
    %3934 = vmatprep.subr.mxu0 0.0
    %3935 = vmatpush1.xpose.msra.mxu0 0.0
    %3936 = vmatprep.subr.mxu0 0.0
    %3937 = vmatpush1.xpose.msra.mxu0 0.0
    %3938 = vmatprep.subr.mxu0 0.0
    %3939 = vmatpush1.xpose.msra.mxu0 0.0
    %3940 = vmatprep.subr.mxu0 0.0
    %3941 = vmatpush1.xpose.msra.mxu0 0.0
    %3942 = vmatprep.subr.mxu0 0.0
    %3943 = vmatpush1.xpose.msra.mxu0 0.0
    %3944 = vmatprep.subr.mxu0 0.0
    %3945 = vmatpush1.xpose.msra.mxu0 0.0
    %3946 = vmatprep.subr.mxu0 0.0
    %3947 = vmatpush1.xpose.msra.mxu0 0.0
    %3948 = vmatprep.subr.mxu0 0.0
    %3949 = vmatpush1.xpose.msra.mxu0 0.0
    %3950 = vmatprep.subr.mxu0 0.0
    %3951 = vmatpush1.xpose.msra.mxu0 0.0
    %3952 = vmatprep.mubr.f32.mxu0 0.0
    %3953 = vmatmul.mubr.f32.gmra.mrb[0].mxu0 %v3886
    %v3954 = vpop.f32.mrb[0].mxu0
    %v3955 = vadd.f32 0.0, %v3954
    %v3956 = vpop.f32.mrb[0].mxu0
    %3957 = vdwg.mxu0
    %v3959 = vsel %vm89, %v3736, 0
    %v3962 = vsel %vm89, %v3809, 0
    %v3965 = vsel %vm89, %v60, 0
    %3967 = vmatprep.subr.mxu0 0.0
    %3968 = vmatpush1.xpose.msra.mxu0 %v3965
    %3969 = vmatprep.subr.mxu0 0.0
    %3970 = vmatpush1.xpose.msra.mxu0 0.0
    %3971 = vmatprep.subr.mxu0 0.0
    %3972 = vmatpush1.xpose.msra.mxu0 0.0
    %3973 = vmatprep.subr.mxu0 0.0
    %3974 = vmatpush1.xpose.msra.mxu0 0.0
    %3975 = vmatprep.subr.mxu0 0.0
    %3976 = vmatpush1.xpose.msra.mxu0 0.0
    %3977 = vmatprep.subr.mxu0 0.0
    %3978 = vmatpush1.xpose.msra.mxu0 0.0
    %3979 = vmatprep.subr.mxu0 0.0
    %3980 = vmatpush1.xpose.msra.mxu0 0.0
    %3981 = vmatprep.subr.mxu0 0.0
    %3982 = vmatpush1.xpose.msra.mxu0 0.0
    %3983 = vmatprep.subr.mxu0 0.0
    %3984 = vmatpush1.xpose.msra.mxu0 0.0
    %3985 = vmatprep.subr.mxu0 0.0
    %3986 = vmatpush1.xpose.msra.mxu0 0.0
    %3987 = vmatprep.subr.mxu0 0.0
    %3988 = vmatpush1.xpose.msra.mxu0 0.0
    %3989 = vmatprep.subr.mxu0 0.0
    %3990 = vmatpush1.xpose.msra.mxu0 0.0
    %3991 = vmatprep.subr.mxu0 0.0
    %3992 = vmatpush1.xpose.msra.mxu0 0.0
    %3993 = vmatprep.subr.mxu0 0.0
    %3994 = vmatpush1.xpose.msra.mxu0 0.0
    %3995 = vmatprep.subr.mxu0 0.0
    %3996 = vmatpush1.xpose.msra.mxu0 0.0
    %3997 = vmatprep.subr.mxu0 0.0
    %3998 = vmatpush1.xpose.msra.mxu0 0.0
    %3999 = vmatprep.subr.mxu0 0.0
    %4000 = vmatpush1.xpose.msra.mxu0 0.0
    %4001 = vmatprep.subr.mxu0 0.0
    %4002 = vmatpush1.xpose.msra.mxu0 0.0
    %4003 = vmatprep.subr.mxu0 0.0
    %4004 = vmatpush1.xpose.msra.mxu0 0.0
    %4005 = vmatprep.subr.mxu0 0.0
    %4006 = vmatpush1.xpose.msra.mxu0 0.0
    %4007 = vmatprep.subr.mxu0 0.0
    %4008 = vmatpush1.xpose.msra.mxu0 0.0
    %4009 = vmatprep.subr.mxu0 0.0
    %4010 = vmatpush1.xpose.msra.mxu0 0.0
    %4011 = vmatprep.subr.mxu0 0.0
    %4012 = vmatpush1.xpose.msra.mxu0 0.0
    %4013 = vmatprep.subr.mxu0 0.0
    %4014 = vmatpush1.xpose.msra.mxu0 0.0
    %4015 = vmatprep.subr.mxu0 0.0
    %4016 = vmatpush1.xpose.msra.mxu0 0.0
    %4017 = vmatprep.subr.mxu0 0.0
    %4018 = vmatpush1.xpose.msra.mxu0 0.0
    %4019 = vmatprep.subr.mxu0 0.0
    %4020 = vmatpush1.xpose.msra.mxu0 0.0
    %4021 = vmatprep.subr.mxu0 0.0
    %4022 = vmatpush1.xpose.msra.mxu0 0.0
    %4023 = vmatprep.subr.mxu0 0.0
    %4024 = vmatpush1.xpose.msra.mxu0 0.0
    %4025 = vmatprep.subr.mxu0 0.0
    %4026 = vmatpush1.xpose.msra.mxu0 0.0
    %4027 = vmatprep.subr.mxu0 0.0
    %4028 = vmatpush1.xpose.msra.mxu0 0.0
    %4029 = vmatprep.subr.mxu0 0.0
    %4030 = vmatpush1.xpose.msra.mxu0 0.0
    %4031 = vmatprep.mubr.f32.mxu0 0.0
    %4032 = vmatmul.mubr.f32.gmra.mrb[0].mxu0 %v3959
    %v4033 = vpop.f32.mrb[0].mxu0
    %v4034 = vadd.f32 0.0, %v4033
    %v4035 = vpop.f32.mrb[0].mxu0
    %4036 = vmatprep.mubr.f32.mxu0 0.0
    %4037 = vmatmul.mubr.f32.gmra.mrb[0].mxu0 %v3962
    %v4038 = vpop.f32.mrb[0].mxu0
    %v4039 = vadd.f32 0.0, %v4038
    %v4040 = vpop.f32.mrb[0].mxu0
    %4041 = vdwg.mxu0
    %4042 = vmatprep.subr.mxu0 0.0
    %4043 = vmatpush1.msra.mxu0 %v4034
    %4044 = vmatprep.subr.mxu0 0.0
    %4045 = vmatpush1.msra.mxu0 0.0
    %4046 = vmatprep.subr.mxu0 0.0
    %4047 = vmatpush1.msra.mxu0 0.0
    %4048 = vmatprep.subr.mxu0 0.0
    %4049 = vmatpush1.msra.mxu0 0.0
    %4050 = vmatprep.subr.mxu0 0.0
    %4051 = vmatpush1.msra.mxu0 0.0
    %4052 = vmatprep.subr.mxu0 0.0
    %4053 = vmatpush1.msra.mxu0 0.0
    %4054 = vmatprep.subr.mxu0 0.0
    %4055 = vmatpush1.msra.mxu0 0.0
    %4056 = vmatprep.subr.mxu0 0.0
    %4057 = vmatpush1.msra.mxu0 0.0
    %4058 = vmatprep.subr.mxu0 0.0
    %4059 = vmatpush1.msra.mxu0 0.0
    %4060 = vmatprep.subr.mxu0 0.0
    %4061 = vmatpush1.msra.mxu0 0.0
    %4062 = vmatprep.subr.mxu0 0.0
    %4063 = vmatpush1.msra.mxu0 0.0
    %4064 = vmatprep.subr.mxu0 0.0
    %4065 = vmatpush1.msra.mxu0 0.0
    %4066 = vmatprep.subr.mxu0 0.0
    %4067 = vmatpush1.msra.mxu0 0.0
    %4068 = vmatprep.subr.mxu0 0.0
    %4069 = vmatpush1.msra.mxu0 0.0
    %4070 = vmatprep.subr.mxu0 0.0
    %4071 = vmatpush1.msra.mxu0 0.0
    %4072 = vmatprep.subr.mxu0 0.0
    %4073 = vmatpush1.msra.mxu0 0.0
    %4074 = vmatprep.subr.mxu0 0.0
    %4075 = vmatpush1.msra.mxu0 0.0
    %4076 = vmatprep.subr.mxu0 0.0
    %4077 = vmatpush1.msra.mxu0 0.0
    %4078 = vmatprep.subr.mxu0 0.0
    %4079 = vmatpush1.msra.mxu0 0.0
    %4080 = vmatprep.subr.mxu0 0.0
    %4081 = vmatpush1.msra.mxu0 0.0
    %4082 = vmatprep.subr.mxu0 0.0
    %4083 = vmatpush1.msra.mxu0 0.0
    %4084 = vmatprep.subr.mxu0 0.0
    %4085 = vmatpush1.msra.mxu0 0.0
    %4086 = vmatprep.subr.mxu0 0.0
    %4087 = vmatpush1.msra.mxu0 0.0
    %4088 = vmatprep.subr.mxu0 0.0
    %4089 = vmatpush1.msra.mxu0 0.0
    %4090 = vmatprep.subr.mxu0 0.0
    %4091 = vmatpush1.msra.mxu0 0.0
    %4092 = vmatprep.subr.mxu0 0.0
    %4093 = vmatpush1.msra.mxu0 0.0
    %4094 = vmatprep.subr.mxu0 0.0
    %4095 = vmatpush1.msra.mxu0 0.0
    %4096 = vmatprep.subr.mxu0 0.0
    %4097 = vmatpush1.msra.mxu0 0.0
    %4098 = vmatprep.subr.mxu0 0.0
    %4099 = vmatpush1.msra.mxu0 0.0
    %4100 = vmatprep.subr.mxu0 0.0
    %4101 = vmatpush1.msra.mxu0 0.0
    %4102 = vmatprep.subr.mxu0 0.0
    %4103 = vmatpush1.msra.mxu0 0.0
    %4104 = vmatprep.subr.mxu0 0.0
    %4105 = vmatpush1.msra.mxu0 0.0
    %4106 = vmatprep.mubr.f32.mxu0 0.0
    %4107 = vmatmul.mubr.f32.gmra.mrb[0].mxu0 %v3965
    %v4108 = vpop.f32.mrb[0].mxu0
    %v4109 = vadd.f32 0.0, %v4108
    %v4110 = vpop.f32.mrb[0].mxu0
    %4111 = vdwg.mxu0
    %4112 = vmatprep.subr.mxu0 0.0
    %4113 = vmatpush1.msra.mxu0 %v4039
    %4114 = vmatprep.subr.mxu0 0.0
    %4115 = vmatpush1.msra.mxu0 0.0
    %4116 = vmatprep.subr.mxu0 0.0
    %4117 = vmatpush1.msra.mxu0 0.0
    %4118 = vmatprep.subr.mxu0 0.0
    %4119 = vmatpush1.msra.mxu0 0.0
    %4120 = vmatprep.subr.mxu0 0.0
    %4121 = vmatpush1.msra.mxu0 0.0
    %4122 = vmatprep.subr.mxu0 0.0
    %4123 = vmatpush1.msra.mxu0 0.0
    %4124 = vmatprep.subr.mxu0 0.0
    %4125 = vmatpush1.msra.mxu0 0.0
    %4126 = vmatprep.subr.mxu0 0.0
    %4127 = vmatpush1.msra.mxu0 0.0
    %4128 = vmatprep.subr.mxu0 0.0
    %4129 = vmatpush1.msra.mxu0 0.0
    %4130 = vmatprep.subr.mxu0 0.0
    %4131 = vmatpush1.msra.mxu0 0.0
    %4132 = vmatprep.subr.mxu0 0.0
    %4133 = vmatpush1.msra.mxu0 0.0
    %4134 = vmatprep.subr.mxu0 0.0
    %4135 = vmatpush1.msra.mxu0 0.0
    %4136 = vmatprep.subr.mxu0 0.0
    %4137 = vmatpush1.msra.mxu0 0.0
    %4138 = vmatprep.subr.mxu0 0.0
    %4139 = vmatpush1.msra.mxu0 0.0
    %4140 = vmatprep.subr.mxu0 0.0
    %4141 = vmatpush1.msra.mxu0 0.0
    %4142 = vmatprep.subr.mxu0 0.0
    %4143 = vmatpush1.msra.mxu0 0.0
    %4144 = vmatprep.subr.mxu0 0.0
    %4145 = vmatpush1.msra.mxu0 0.0
    %4146 = vmatprep.subr.mxu0 0.0
    %4147 = vmatpush1.msra.mxu0 0.0
    %4148 = vmatprep.subr.mxu0 0.0
    %4149 = vmatpush1.msra.mxu0 0.0
    %4150 = vmatprep.subr.mxu0 0.0
    %4151 = vmatpush1.msra.mxu0 0.0
    %4152 = vmatprep.subr.mxu0 0.0
    %4153 = vmatpush1.msra.mxu0 0.0
    %4154 = vmatprep.subr.mxu0 0.0
    %4155 = vmatpush1.msra.mxu0 0.0
    %4156 = vmatprep.subr.mxu0 0.0
    %4157 = vmatpush1.msra.mxu0 0.0
    %4158 = vmatprep.subr.mxu0 0.0
    %4159 = vmatpush1.msra.mxu0 0.0
    %4160 = vmatprep.subr.mxu0 0.0
    %4161 = vmatpush1.msra.mxu0 0.0
    %4162 = vmatprep.subr.mxu0 0.0
    %4163 = vmatpush1.msra.mxu0 0.0
    %4164 = vmatprep.subr.mxu0 0.0
    %4165 = vmatpush1.msra.mxu0 0.0
    %4166 = vmatprep.subr.mxu0 0.0
    %4167 = vmatpush1.msra.mxu0 0.0
    %4168 = vmatprep.subr.mxu0 0.0
    %4169 = vmatpush1.msra.mxu0 0.0
    %4170 = vmatprep.subr.mxu0 0.0
    %4171 = vmatpush1.msra.mxu0 0.0
    %4172 = vmatprep.subr.mxu0 0.0
    %4173 = vmatpush1.msra.mxu0 0.0
    %4174 = vmatprep.subr.mxu0 0.0
    %4175 = vmatpush1.msra.mxu0 0.0
    %4176 = vmatprep.mubr.f32.mxu0 0.0
    %4177 = vmatmul.mubr.f32.gmra.mrb[0].mxu0 %v3965
    %v4178 = vpop.f32.mrb[0].mxu0
    %v4179 = vadd.f32 0.0, %v4178
    %v4180 = vpop.f32.mrb[0].mxu0
    %4181 = vdwg.mxu0
    %4182 = vst.msk [vmem:[#allocation5] sm:$0xff] %vm89, %v4109
    %4183 = vst.msk [vmem:[#allocation5 + $0x8] sm:$0xff] %vm89, %v4179
    %4184 = vst.msk [vmem:[#allocation6] sm:$0xff] %vm89, %v3882
    %4185 = vst.msk [vmem:[#allocation6 + $0x8] sm:$0xff] %vm89, %v3955
    // Predicated region
    $region18: #{tpu_custom_call.1} parent=1 // pred_check
      _
    $region19: #{tpu_custom_call.1} parent=1 // pred_check_branch
      %4187 = sbr.rel (0) target = $region21
    $region20: #{tpu_custom_call.1} parent=1 // pred_region
      %s4189 = ssub.s32 256, 256
      %4190 = vsyncadd [#allocation4], %s4189
      %s4191 = sshll.u32 [#allocation5], 4
      %s4192 = int_to_ptr.vmem [resolvable:$true] %s4191
      %4197 = dma.vmem_to_hbm [thread:$0]  %s4192, 256, %s3, [#allocation4], 128, 128, 8
    $region21: #{tpu_custom_call.1} parent=1 // pred_fallthru
      _
    // Predicated region
    $region22: #{tpu_custom_call.1} parent=1 // pred_check
      _
    $region23: #{tpu_custom_call.1} parent=1 // pred_check_branch
      %4199 = sbr.rel (0) target = $region25
    $region24: #{tpu_custom_call.1} parent=1 // pred_region
      %s4201 = ssub.s32 256, 256
      %4202 = vsyncadd [#allocation7], %s4201
      %s4203 = sshll.u32 [#allocation6], 4
      %s4204 = int_to_ptr.vmem [resolvable:$true] %s4203
      %4209 = dma.vmem_to_hbm [thread:$0]  %s4204, 256, %s4, [#allocation7], 128, 128, 8
    $region25: #{tpu_custom_call.1} parent=1 // pred_fallthru
      _
    // Predicated region
    $region26: #{tpu_custom_call.1} parent=1 // pred_check
      _
    $region27: #{tpu_custom_call.1} parent=1 // pred_check_branch
      %4211 = sbr.rel (0) target = $region29
    $region28: #{tpu_custom_call.1} parent=1 // pred_region
      %4212 = dma.done [#allocation4], 256
    $region29: #{tpu_custom_call.1} parent=1 // pred_fallthru
      _
    // Predicated region
    $region30: #{tpu_custom_call.1} parent=1 // pred_check
      _
    $region31: #{tpu_custom_call.1} parent=1 // pred_check_branch
      %4214 = sbr.rel (0) target = $region33
    $region32: #{tpu_custom_call.1} parent=1 // pred_region
      %4215 = dma.done [#allocation7], 256
    $region33: #{tpu_custom_call.1} parent=1 // pred_fallthru
      _
    %4216 = vsyncpa [#allocation3], 1
    %4217 = vsyncpa [#allocation4], 1
    %4218 = vsyncpa [#allocation7], 1

</llo_original>
